<compile_context>
chip_gen: v5e
topology: v5e:2x2
jax: 0.10.0
libtpu: 0.0.40
codegen_flags: <defaults>
</compile_context>

<pallas_src>
import jax
import jax.numpy as jnp
from jax.experimental import pallas as pl
from jax.experimental.pallas import tpu as pltpu


def _choose_hw_tile(hw, c, itemsize, budget_bytes=6 * 1024 * 1024):
    """Largest lane tile T with hw % T == 0 and (T % 128 == 0 or T == hw) whose
    per-step working set (double-buffered in/out blocks + two f32 accumulators)
    stays within a conservative VMEM budget (fits every TPU generation's default
    scoped limit)."""
    per_col = c * (4 * itemsize + 8)            # bytes per lane column (worst kernel)
    max_t = max(128, budget_bytes // per_col)
    if hw <= max_t:
        return hw
    t = (min(hw, max_t) // 128) * 128
    while t >= 128:
        if hw % t == 0:
            return t
        t -= 128
    return hw  # fallback: single full-extent tile (odd spatial sizes)


def cbam_forward(x, w1, w2, ws):
    """CBAM forward pass.

    x:  (N, C, H, W)   NCHW input
    w1: (Cr, C)        ChannelAttention conv1 (1x1, bias=False) weight, squeezed
    w2: (C, Cr)        ChannelAttention conv2 (1x1, bias=False) weight, squeezed
    ws: (1, 2, K, K)   SpatialAttention conv (K=7, bias=False) weight
    returns (N, C, H, W)
    """
    N, C, H, W = x.shape
    Cr = w1.shape[0]
    HW = H * W
    K = ws.shape[-1]
    P = (K - 1) // 2

    x_r = x.reshape(N, C, HW)                 # free reshape, still NCHW order
    T = _choose_hw_tile(HW, C, x.dtype.itemsize)
    nT = HW // T
    inv_hw = 1.0 / HW
    inv_c = 1.0 / C

    # ------------------ Kernel A: channel-attention gate Mc(x) ------------------
    def ca_kernel(x_ref, w1_ref, w2_ref, mc_ref, acc_sum, acc_max, stk):
        j = pl.program_id(1)
        xt = x_ref[0].astype(jnp.float32)                      # (C, T)

        @pl.when(j == 0)
        def _():
            acc_sum[...] = xt
            acc_max[...] = xt

        @pl.when(j > 0)
        def _():
            acc_sum[...] += xt
            acc_max[...] = jnp.maximum(acc_max[...], xt)

        @pl.when(j == pl.num_programs(1) - 1)
        def _():
            # Stack avg/max pooled vectors -> (C, 2); run the shared MLP once.
            stk[:, 0:1] = jnp.sum(acc_sum[...], axis=1, keepdims=True) * inv_hw
            stk[:, 1:2] = jnp.max(acc_max[...], axis=1, keepdims=True)
            pooled = stk[...]                                  # (C, 2)
            h = jnp.maximum(
                jnp.dot(w1_ref[...].astype(jnp.float32), pooled,
                        preferred_element_type=jnp.float32), 0.0)   # (Cr, 2)
            o2 = jnp.dot(w2_ref[...].astype(jnp.float32), h,
                         preferred_element_type=jnp.float32)        # (C, 2)
            # fc(avg) + fc(max) == row-sum of the two result columns.
            mc_ref[0] = jax.nn.sigmoid(
                jnp.sum(o2, axis=1, keepdims=True)).astype(mc_ref.dtype)

    mc = pl.pallas_call(
        ca_kernel,
        out_shape=jax.ShapeDtypeStruct((N, C, 1), jnp.float32),
        grid_spec=pltpu.PrefetchScalarGridSpec(
            num_scalar_prefetch=0,
            grid=(N, nT),
            in_specs=[
                pl.BlockSpec((1, C, T), lambda n, j: (n, 0, j)),
                pl.BlockSpec((Cr, C), lambda n, j: (0, 0)),
                pl.BlockSpec((C, Cr), lambda n, j: (0, 0)),
            ],
            out_specs=pl.BlockSpec((1, C, 1), lambda n, j: (n, 0, 0)),
            scratch_shapes=[
                pltpu.VMEM((C, T), jnp.float32),   # running sum
                pltpu.VMEM((C, T), jnp.float32),   # running max
                pltpu.VMEM((C, 2), jnp.float32),   # stacked pooled vectors
            ],
        ),
        compiler_params=pltpu.CompilerParams(
            dimension_semantics=("parallel", "arbitrary")),
    )(x_r, w1, w2)

    # --- Kernel B: channel mean/max of (x * Mc) -> (N, 2, HW) spatial-attn input ---
    def sp_pool_kernel(x_ref, mc_ref, pooled_ref):
        xt = x_ref[0].astype(jnp.float32)       # (C, T)
        mcb = mc_ref[0]                         # (C, 1)
        y = xt * mcb                            # out1 tile, recomputed (never stored)
        mean_c = jnp.sum(y, axis=0, keepdims=True) * inv_c    # (1, T)
        max_c = jnp.max(y, axis=0, keepdims=True)             # (1, T)
        pooled_ref[0] = jnp.concatenate([mean_c, max_c], axis=0)  # (2, T)

    pooled = pl.pallas_call(
        sp_pool_kernel,
        out_shape=jax.ShapeDtypeStruct((N, 2, HW), jnp.float32),
        grid_spec=pltpu.PrefetchScalarGridSpec(
            num_scalar_prefetch=0,
            grid=(N, nT),
            in_specs=[
                pl.BlockSpec((1, C, T), lambda n, j: (n, 0, j)),
                pl.BlockSpec((1, C, 1), lambda n, j: (n, 0, 0)),
            ],
            out_specs=pl.BlockSpec((1, 2, T), lambda n, j: (n, 0, j)),
        ),
        compiler_params=pltpu.CompilerParams(
            dimension_semantics=("parallel", "parallel")),
    )(x_r, mc)

    # ----------- Kernel C: 7x7 conv (2 -> 1, no bias) + sigmoid -> Ms -----------
    pooled_pad = jnp.pad(pooled.reshape(N, 2, H, W),
                         ((0, 0), (0, 0), (P, P), (P, P)))     # tiny map; XLA pad
    Hp, Wp = H + 2 * P, W + 2 * P
    ws_flat = ws.reshape(-1).astype(jnp.float32)               # (2*K*K,)

    def sa_conv_kernel(pp_ref, ws_ref, ms_ref):
        acc = jnp.zeros((H, W), jnp.float32)
        for ci in range(2):
            for ki in range(K):
                for kj in range(K):
                    wv = ws_ref[ci * K * K + ki * K + kj]          # scalar (SMEM)
                    tap = pp_ref[0, ci, ki:ki + H, kj:kj + W]      # (H, W)
                    acc = acc + wv * tap
        ms_ref[0] = jax.nn.sigmoid(acc)

    ms = pl.pallas_call(
        sa_conv_kernel,
        out_shape=jax.ShapeDtypeStruct((N, H, W), jnp.float32),
        grid_spec=pltpu.PrefetchScalarGridSpec(
            num_scalar_prefetch=0,
            grid=(N,),
            in_specs=[
                pl.BlockSpec((1, 2, Hp, Wp), lambda n: (n, 0, 0, 0)),
                pl.BlockSpec(memory_space=pltpu.MemorySpace.SMEM),
            ],
            out_specs=pl.BlockSpec((1, H, W), lambda n: (n, 0, 0)),
        ),
        compiler_params=pltpu.CompilerParams(
            dimension_semantics=("parallel",)),
    )(pooled_pad, ws_flat)

    # -------------------- Kernel D: out = (x * Mc) * Ms --------------------------
    ms_r = ms.reshape(N, 1, HW)

    def apply_kernel(x_ref, mc_ref, ms_ref, o_ref):
        xt = x_ref[0].astype(jnp.float32)       # (C, T)
        mcb = mc_ref[0]                         # (C, 1)
        msb = ms_ref[0]                         # (1, T)
        o_ref[0] = ((xt * mcb) * msb).astype(o_ref.dtype)

    out = pl.pallas_call(
        apply_kernel,
        out_shape=jax.ShapeDtypeStruct((N, C, HW), x.dtype),
        grid_spec=pltpu.PrefetchScalarGridSpec(
            num_scalar_prefetch=0,
            grid=(N, nT),
            in_specs=[
                pl.BlockSpec((1, C, T), lambda n, j: (n, 0, j)),
                pl.BlockSpec((1, C, 1), lambda n, j: (n, 0, 0)),
                pl.BlockSpec((1, 1, T), lambda n, j: (n, 0, j)),
            ],
            out_specs=pl.BlockSpec((1, C, T), lambda n, j: (n, 0, j)),
        ),
        compiler_params=pltpu.CompilerParams(
            dimension_semantics=("parallel", "parallel")),
    )(x_r, mc, ms_r)

    return out.reshape(N, C, H, W)


def cbam_ref(x, w1, w2, ws):
    """Pure-JAX reference matching the PyTorch CBAM forward."""
    avg = jnp.mean(x, axis=(2, 3))
    mx = jnp.max(x, axis=(2, 3))

    def fc(p):
        return jnp.maximum(p @ w1.T, 0.0) @ w2.T

    mc = jax.nn.sigmoid(fc(avg) + fc(mx))[:, :, None, None]       # (N, C, 1, 1)
    out1 = x * mc

    avg_s = jnp.mean(out1, axis=1, keepdims=True)
    max_s = jnp.max(out1, axis=1, keepdims=True)
    cat = jnp.concatenate([avg_s, max_s], axis=1)                 # (N, 2, H, W)
    P = (ws.shape[-1] - 1) // 2
    attn = jax.lax.conv_general_dilated(
        cat, ws, window_strides=(1, 1), padding=((P, P), (P, P)),
        dimension_numbers=("NCHW", "OIHW", "NCHW"))
    ms = jax.nn.sigmoid(attn)                                     # (N, 1, H, W)
    return out1 * ms


if __name__ == "__main__":
    # Small shapes consistent with the module: in_channels=64, reduction=16, kernel=7.
    N, C, H, W = 2, 64, 16, 16
    reduction = 16
    Cr = C // reduction
    K = 7

    key = jax.random.PRNGKey(0)
    kx, k1, k2, k3 = jax.random.split(key, 4)

    x = jax.random.normal(kx, (N, C, H, W), dtype=jnp.float32)
    # Conv2d(C, Cr, 1, bias=False) -> (Cr, C, 1, 1) squeezed; Conv2d(Cr, C, 1) -> (C, Cr).
    w1 = 0.1 * jax.random.normal(k1, (Cr, C), dtype=jnp.float32)
    w2 = 0.1 * jax.random.normal(k2, (C, Cr), dtype=jnp.float32)
    # SpatialAttention Conv2d(2, 1, 7, padding=3, bias=False) weight.
    ws = 0.1 * jax.random.normal(k3, (1, 2, K, K), dtype=jnp.float32)

    out = jax.jit(cbam_forward)(x, w1, w2, ws)
    out = jax.block_until_ready(out)

    ref = cbam_ref(x, w1, w2, ws)
    assert out.shape == (N, C, H, W)
    assert jnp.allclose(out, ref, atol=1e-4, rtol=1e-4), "mismatch vs reference"

    print("KERNEL_OK")
</pallas_src>

<mosaic_0001>
module attributes {stable_mosaic.version = 11 : i64} {
  func.func @sp_pool_kernel(%arg0: i32, %arg1: i32, %arg2: memref<1x64x256xf32, #tpu.memory_space<vmem>>, %arg3: memref<1x64x1xf32, #tpu.memory_space<vmem>>, %arg4: memref<1x2x256xf32, #tpu.memory_space<vmem>>) attributes {dimension_semantics = [#tpu.dimension_semantics<parallel>, #tpu.dimension_semantics<parallel>], iteration_bounds = array<i64: 2, 1>, scalar_prefetch = 0 : i64, scratch_operands = 0 : i64, tpu.core_type = #tpu.core_type<tc>, window_params = [{transform_indices = @transform_0, window_bounds = array<i64: 1, 64, 256>}, {transform_indices = @transform_1, window_bounds = array<i64: 1, 64, 1>}, {transform_indices = @transform_2, window_bounds = array<i64: 1, 2, 256>}]} {
    %c0 = arith.constant 0 : index
    %c0_0 = arith.constant 0 : index
    %c0_1 = arith.constant 0 : index
    %0 = vector.load %arg2[%c0, %c0_0, %c0_1] : memref<1x64x256xf32, #tpu.memory_space<vmem>>, vector<1x64x256xf32>
    %1 = vector.shape_cast %0 : vector<1x64x256xf32> to vector<64x256xf32>
    %c0_2 = arith.constant 0 : index
    %c0_3 = arith.constant 0 : index
    %c0_4 = arith.constant 0 : index
    %2 = vector.load %arg3[%c0_2, %c0_3, %c0_4] : memref<1x64x1xf32, #tpu.memory_space<vmem>>, vector<1x64x1xf32>
    %3 = vector.shape_cast %2 : vector<1x64x1xf32> to vector<64x1xf32>
    %4 = vector.broadcast %3 : vector<64x1xf32> to vector<64x256xf32>
    %5 = arith.mulf %1, %4 : vector<64x256xf32>
    %cst = arith.constant dense<0.000000e+00> : vector<256xf32>
    %6 = vector.multi_reduction <add>, %5, %cst [0] : vector<64x256xf32> to vector<256xf32>
    %7 = vector.shape_cast %6 : vector<256xf32> to vector<1x256xf32>
    %cst_5 = arith.constant 1.562500e-02 : f32
    %8 = vector.broadcast %cst_5 : f32 to vector<1x256xf32>
    %9 = arith.mulf %7, %8 : vector<1x256xf32>
    %cst_6 = arith.constant dense<0xFF800000> : vector<256xf32>
    %10 = vector.multi_reduction <maximumf>, %5, %cst_6 [0] : vector<64x256xf32> to vector<256xf32>
    %11 = vector.shape_cast %10 : vector<256xf32> to vector<1x256xf32>
    %12 = tpu.concatenate %9, %11 in 0 : vector<1x256xf32>, vector<1x256xf32> -> vector<2x256xf32>
    %c0_7 = arith.constant 0 : index
    %c0_8 = arith.constant 0 : index
    %c0_9 = arith.constant 0 : index
    %13 = vector.load %arg4[%c0_7, %c0_8, %c0_9] : memref<1x2x256xf32, #tpu.memory_space<vmem>>, vector<1x2x256xf32>
    %14 = vector.shape_cast %13 : vector<1x2x256xf32> to vector<2x256xf32>
    %15 = vector.shape_cast %12 : vector<2x256xf32> to vector<1x2x256xf32>
    tpu.vector_store %arg4[%c0_7, %c0_8, %c0_9], %15 {strides = array<i32>} : memref<1x2x256xf32, #tpu.memory_space<vmem>>, vector<1x2x256xf32>,
    return
  }
  func.func @transform_0(%arg0: i32, %arg1: i32) -> (i32, i32, i32) {
    %c0_i32 = arith.constant 0 : i32
    %c0_i32_0 = arith.constant 0 : i32
    return %arg0, %c0_i32, %arg1 : i32, i32, i32
  }
  func.func @transform_1(%arg0: i32, %arg1: i32) -> (i32, i32, i32) {
    %c0_i32 = arith.constant 0 : i32
    %c0_i32_0 = arith.constant 0 : i32
    %c0_i32_1 = arith.constant 0 : i32
    return %arg0, %c0_i32, %c0_i32_0 : i32, i32, i32
  }
  func.func @transform_2(%arg0: i32, %arg1: i32) -> (i32, i32, i32) {
    %c0_i32 = arith.constant 0 : i32
    %c0_i32_0 = arith.constant 0 : i32
    return %arg0, %c0_i32, %arg1 : i32, i32, i32
  }
}

module attributes {stable_mosaic.version = 11 : i64} {
  func.func @ca_kernel(%arg0: i32, %arg1: i32, %arg2: memref<1x64x256xf32, #tpu.memory_space<vmem>>, %arg3: memref<4x64xf32, #tpu.memory_space<vmem>>, %arg4: memref<64x4xf32, #tpu.memory_space<vmem>>, %arg5: memref<1x64x1xf32, #tpu.memory_space<vmem>>, %arg6: memref<64x256xf32, #tpu.memory_space<vmem>>, %arg7: memref<64x256xf32, #tpu.memory_space<vmem>>, %arg8: memref<64x2xf32, #tpu.memory_space<vmem>>) attributes {dimension_semantics = [#tpu.dimension_semantics<parallel>, #tpu.dimension_semantics<arbitrary>], iteration_bounds = array<i64: 2, 1>, scalar_prefetch = 0 : i64, scratch_operands = 3 : i64, tpu.core_type = #tpu.core_type<tc>, window_params = [{transform_indices = @transform_0, window_bounds = array<i64: 1, 64, 256>}, {pipeline_mode = #tpu.pipeline_mode<synchronous>, transform_indices = @transform_1, window_bounds = array<i64: 4, 64>}, {pipeline_mode = #tpu.pipeline_mode<synchronous>, transform_indices = @transform_2, window_bounds = array<i64: 64, 4>}, {transform_indices = @transform_3, window_bounds = array<i64: 1, 64, 1>}]} {
    %c0 = arith.constant 0 : index
    %c0_0 = arith.constant 0 : index
    %c0_1 = arith.constant 0 : index
    %0 = vector.load %arg2[%c0, %c0_0, %c0_1] : memref<1x64x256xf32, #tpu.memory_space<vmem>>, vector<1x64x256xf32>
    %1 = vector.shape_cast %0 : vector<1x64x256xf32> to vector<64x256xf32>
    %c0_i32 = arith.constant 0 : i32
    %2 = arith.cmpi eq, %arg1, %c0_i32 : i32
    %3 = arith.extui %2 : i1 to i32
    %c0_i32_2 = arith.constant 0 : i32
    %4 = arith.cmpi ne, %3, %c0_i32_2 : i32
    scf.if %4 {
      %c0_7 = arith.constant 0 : index
      %c0_8 = arith.constant 0 : index
      %11 = vector.load %arg6[%c0_7, %c0_8] : memref<64x256xf32, #tpu.memory_space<vmem>>, vector<64x256xf32>
      tpu.vector_store %arg6[%c0_7, %c0_8], %1 {strides = array<i32>} : memref<64x256xf32, #tpu.memory_space<vmem>>, vector<64x256xf32>,
      %c0_9 = arith.constant 0 : index
      %c0_10 = arith.constant 0 : index
      %12 = vector.load %arg7[%c0_9, %c0_10] : memref<64x256xf32, #tpu.memory_space<vmem>>, vector<64x256xf32>
      tpu.vector_store %arg7[%c0_9, %c0_10], %1 {strides = array<i32>} : memref<64x256xf32, #tpu.memory_space<vmem>>, vector<64x256xf32>,
    } else {
    }
    %c0_i32_3 = arith.constant 0 : i32
    %5 = arith.cmpi sgt, %arg1, %c0_i32_3 : i32
    %6 = arith.extui %5 : i1 to i32
    %c0_i32_4 = arith.constant 0 : i32
    %7 = arith.cmpi ne, %6, %c0_i32_4 : i32
    scf.if %7 {
      %c0_7 = arith.constant 0 : index
      %c0_8 = arith.constant 0 : index
      %11 = vector.load %arg6[%c0_7, %c0_8] : memref<64x256xf32, #tpu.memory_space<vmem>>, vector<64x256xf32>
      %12 = arith.addf %11, %1 : vector<64x256xf32>
      %c0_9 = arith.constant 0 : index
      %c0_10 = arith.constant 0 : index
      %13 = vector.load %arg6[%c0_9, %c0_10] : memref<64x256xf32, #tpu.memory_space<vmem>>, vector<64x256xf32>
      tpu.vector_store %arg6[%c0_9, %c0_10], %12 {strides = array<i32>} : memref<64x256xf32, #tpu.memory_space<vmem>>, vector<64x256xf32>,
      %c0_11 = arith.constant 0 : index
      %c0_12 = arith.constant 0 : index
      %14 = vector.load %arg7[%c0_11, %c0_12] : memref<64x256xf32, #tpu.memory_space<vmem>>, vector<64x256xf32>
      %15 = arith.maximumf %14, %1 : vector<64x256xf32>
      %c0_13 = arith.constant 0 : index
      %c0_14 = arith.constant 0 : index
      %16 = vector.load %arg7[%c0_13, %c0_14] : memref<64x256xf32, #tpu.memory_space<vmem>>, vector<64x256xf32>
      tpu.vector_store %arg7[%c0_13, %c0_14], %15 {strides = array<i32>} : memref<64x256xf32, #tpu.memory_space<vmem>>, vector<64x256xf32>,
    } else {
    }
    %c0_i32_5 = arith.constant 0 : i32
    %8 = arith.cmpi eq, %arg1, %c0_i32_5 : i32
    %9 = arith.extui %8 : i1 to i32
    %c0_i32_6 = arith.constant 0 : i32
    %10 = arith.cmpi ne, %9, %c0_i32_6 : i32
    scf.if %10 {
      %c0_7 = arith.constant 0 : index
      %c0_8 = arith.constant 0 : index
      %11 = vector.load %arg6[%c0_7, %c0_8] : memref<64x256xf32, #tpu.memory_space<vmem>>, vector<64x256xf32>
      %cst = arith.constant dense<0.000000e+00> : vector<64xf32>
      %12 = vector.multi_reduction <add>, %11, %cst [1] : vector<64x256xf32> to vector<64xf32>
      %13 = vector.shape_cast %12 : vector<64xf32> to vector<64x1xf32>
      %cst_9 = arith.constant 3.906250e-03 : f32
      %14 = vector.broadcast %cst_9 : f32 to vector<64x1xf32>
      %15 = arith.mulf %13, %14 : vector<64x1xf32>
      %c0_10 = arith.constant 0 : index
      %c0_11 = arith.constant 0 : index
      %16 = vector.load %arg8[%c0_10, %c0_11] : memref<64x2xf32, #tpu.memory_space<vmem>>, vector<64x1xf32>
      tpu.vector_store %arg8[%c0_10, %c0_11], %15 {strides = array<i32>} : memref<64x2xf32, #tpu.memory_space<vmem>>, vector<64x1xf32>,
      %c0_12 = arith.constant 0 : index
      %c0_13 = arith.constant 0 : index
      %17 = vector.load %arg7[%c0_12, %c0_13] : memref<64x256xf32, #tpu.memory_space<vmem>>, vector<64x256xf32>
      %cst_14 = arith.constant dense<0xFF800000> : vector<64xf32>
      %18 = vector.multi_reduction <maximumf>, %17, %cst_14 [1] : vector<64x256xf32> to vector<64xf32>
      %19 = vector.shape_cast %18 : vector<64xf32> to vector<64x1xf32>
      %c0_15 = arith.constant 0 : index
      %c1 = arith.constant 1 : index
      %20 = vector.load %arg8[%c0_15, %c1] : memref<64x2xf32, #tpu.memory_space<vmem>>, vector<64x1xf32>
      tpu.vector_store %arg8[%c0_15, %c1], %19 {strides = array<i32>} : memref<64x2xf32, #tpu.memory_space<vmem>>, vector<64x1xf32>,
      %c0_16 = arith.constant 0 : index
      %c0_17 = arith.constant 0 : index
      %21 = vector.load %arg8[%c0_16, %c0_17] : memref<64x2xf32, #tpu.memory_space<vmem>>, vector<64x2xf32>
      %c0_18 = arith.constant 0 : index
      %c0_19 = arith.constant 0 : index
      %22 = vector.load %arg3[%c0_18, %c0_19] : memref<4x64xf32, #tpu.memory_space<vmem>>, vector<4x64xf32>
      %cst_20 = arith.constant dense<0.000000e+00> : vector<4x2xf32>
      %23 = tpu.matmul %22, %21, %cst_20 {dimension_numbers = #tpu.dot_dimension_numbers<[1], [0], [0], [1], [0, 0, 1, 1], [], []>} : vector<4x64xf32>, vector<64x2xf32>, vector<4x2xf32> -> vector<4x2xf32>
      %cst_21 = arith.constant 0.000000e+00 : f32
      %24 = vector.broadcast %cst_21 : f32 to vector<4x2xf32>
      %25 = arith.maximumf %23, %24 : vector<4x2xf32>
      %c0_22 = arith.constant 0 : index
      %c0_23 = arith.constant 0 : index
      %26 = vector.load %arg4[%c0_22, %c0_23] : memref<64x4xf32, #tpu.memory_space<vmem>>, vector<64x4xf32>
      %cst_24 = arith.constant dense<0.000000e+00> : vector<64x2xf32>
      %27 = tpu.matmul %26, %25, %cst_24 {dimension_numbers = #tpu.dot_dimension_numbers<[1], [0], [0], [1], [0, 0, 1, 1], [], []>} : vector<64x4xf32>, vector<4x2xf32>, vector<64x2xf32> -> vector<64x2xf32>
      %cst_25 = arith.constant dense<0.000000e+00> : vector<64xf32>
      %28 = vector.multi_reduction <add>, %27, %cst_25 [1] : vector<64x2xf32> to vector<64xf32>
      %29 = vector.shape_cast %28 : vector<64xf32> to vector<64x1xf32>
      %30 = arith.negf %29 : vector<64x1xf32>
      %31 = math.exp %30 : vector<64x1xf32>
      %cst_26 = arith.constant 1.000000e+00 : f32
      %32 = vector.broadcast %cst_26 : f32 to vector<64x1xf32>
      %33 = arith.addf %32, %31 : vector<64x1xf32>
      %34 = arith.divf %32, %33 : vector<64x1xf32>
      %c0_27 = arith.constant 0 : index
      %c0_28 = arith.constant 0 : index
      %c0_29 = arith.constant 0 : index
      %35 = vector.load %arg5[%c0_27, %c0_28, %c0_29] : memref<1x64x1xf32, #tpu.memory_space<vmem>>, vector<1x64x1xf32>
      %36 = vector.shape_cast %35 : vector<1x64x1xf32> to vector<64x1xf32>
      %37 = vector.shape_cast %34 : vector<64x1xf32> to vector<1x64x1xf32>
      tpu.vector_store %arg5[%c0_27, %c0_28, %c0_29], %37 {strides = array<i32>} : memref<1x64x1xf32, #tpu.memory_space<vmem>>, vector<1x64x1xf32>,
    } else {
    }
    return
  }
  func.func @transform_0(%arg0: i32, %arg1: i32) -> (i32, i32, i32) {
    %c0_i32 = arith.constant 0 : i32
    %c0_i32_0 = arith.constant 0 : i32
    return %arg0, %c0_i32, %arg1 : i32, i32, i32
  }
  func.func @transform_1(%arg0: i32, %arg1: i32) -> (i32, i32) {
    %c0_i32 = arith.constant 0 : i32
    %c0_i32_0 = arith.constant 0 : i32
    %c0_i32_1 = arith.constant 0 : i32
    return %c0_i32, %c0_i32_0 : i32, i32
  }
  func.func @transform_2(%arg0: i32, %arg1: i32) -> (i32, i32) {
    %c0_i32 = arith.constant 0 : i32
    %c0_i32_0 = arith.constant 0 : i32
    %c0_i32_1 = arith.constant 0 : i32
    return %c0_i32, %c0_i32_0 : i32, i32
  }
  func.func @transform_3(%arg0: i32, %arg1: i32) -> (i32, i32, i32) {
    %c0_i32 = arith.constant 0 : i32
    %c0_i32_0 = arith.constant 0 : i32
    %c0_i32_1 = arith.constant 0 : i32
    return %arg0, %c0_i32, %c0_i32_0 : i32, i32, i32
  }
}

module attributes {stable_mosaic.version = 11 : i64} {
  func.func @apply_kernel(%arg0: i32, %arg1: i32, %arg2: memref<1x64x256xf32, #tpu.memory_space<vmem>>, %arg3: memref<1x64x1xf32, #tpu.memory_space<vmem>>, %arg4: memref<1x1x256xf32, #tpu.memory_space<vmem>>, %arg5: memref<1x64x256xf32, #tpu.memory_space<vmem>>) attributes {dimension_semantics = [#tpu.dimension_semantics<parallel>, #tpu.dimension_semantics<parallel>], iteration_bounds = array<i64: 2, 1>, scalar_prefetch = 0 : i64, scratch_operands = 0 : i64, tpu.core_type = #tpu.core_type<tc>, window_params = [{transform_indices = @transform_0, window_bounds = array<i64: 1, 64, 256>}, {transform_indices = @transform_1, window_bounds = array<i64: 1, 64, 1>}, {transform_indices = @transform_2, window_bounds = array<i64: 1, 1, 256>}, {transform_indices = @transform_3, window_bounds = array<i64: 1, 64, 256>}]} {
    %c0 = arith.constant 0 : index
    %c0_0 = arith.constant 0 : index
    %c0_1 = arith.constant 0 : index
    %0 = vector.load %arg2[%c0, %c0_0, %c0_1] : memref<1x64x256xf32, #tpu.memory_space<vmem>>, vector<1x64x256xf32>
    %1 = vector.shape_cast %0 : vector<1x64x256xf32> to vector<64x256xf32>
    %c0_2 = arith.constant 0 : index
    %c0_3 = arith.constant 0 : index
    %c0_4 = arith.constant 0 : index
    %2 = vector.load %arg3[%c0_2, %c0_3, %c0_4] : memref<1x64x1xf32, #tpu.memory_space<vmem>>, vector<1x64x1xf32>
    %3 = vector.shape_cast %2 : vector<1x64x1xf32> to vector<64x1xf32>
    %c0_5 = arith.constant 0 : index
    %c0_6 = arith.constant 0 : index
    %c0_7 = arith.constant 0 : index
    %4 = vector.load %arg4[%c0_5, %c0_6, %c0_7] : memref<1x1x256xf32, #tpu.memory_space<vmem>>, vector<1x1x256xf32>
    %5 = vector.shape_cast %4 : vector<1x1x256xf32> to vector<1x256xf32>
    %6 = vector.broadcast %3 : vector<64x1xf32> to vector<64x256xf32>
    %7 = arith.mulf %1, %6 : vector<64x256xf32>
    %8 = vector.broadcast %5 : vector<1x256xf32> to vector<64x256xf32>
    %9 = arith.mulf %7, %8 : vector<64x256xf32>
    %c0_8 = arith.constant 0 : index
    %c0_9 = arith.constant 0 : index
    %c0_10 = arith.constant 0 : index
    %10 = vector.load %arg5[%c0_8, %c0_9, %c0_10] : memref<1x64x256xf32, #tpu.memory_space<vmem>>, vector<1x64x256xf32>
    %11 = vector.shape_cast %10 : vector<1x64x256xf32> to vector<64x256xf32>
    %12 = vector.shape_cast %9 : vector<64x256xf32> to vector<1x64x256xf32>
    tpu.vector_store %arg5[%c0_8, %c0_9, %c0_10], %12 {strides = array<i32>} : memref<1x64x256xf32, #tpu.memory_space<vmem>>, vector<1x64x256xf32>,
    return
  }
  func.func @transform_0(%arg0: i32, %arg1: i32) -> (i32, i32, i32) {
    %c0_i32 = arith.constant 0 : i32
    %c0_i32_0 = arith.constant 0 : i32
    return %arg0, %c0_i32, %arg1 : i32, i32, i32
  }
  func.func @transform_1(%arg0: i32, %arg1: i32) -> (i32, i32, i32) {
    %c0_i32 = arith.constant 0 : i32
    %c0_i32_0 = arith.constant 0 : i32
    %c0_i32_1 = arith.constant 0 : i32
    return %arg0, %c0_i32, %c0_i32_0 : i32, i32, i32
  }
  func.func @transform_2(%arg0: i32, %arg1: i32) -> (i32, i32, i32) {
    %c0_i32 = arith.constant 0 : i32
    %c0_i32_0 = arith.constant 0 : i32
    return %arg0, %c0_i32, %arg1 : i32, i32, i32
  }
  func.func @transform_3(%arg0: i32, %arg1: i32) -> (i32, i32, i32) {
    %c0_i32 = arith.constant 0 : i32
    %c0_i32_0 = arith.constant 0 : i32
    return %arg0, %c0_i32, %arg1 : i32, i32, i32
  }
}

module attributes {stable_mosaic.version = 11 : i64} {
  func.func @sa_conv_kernel(%arg0: i32, %arg1: memref<1x2x22x22xf32, #tpu.memory_space<vmem>>, %arg2: memref<98xf32, #tpu.memory_space<smem>>, %arg3: memref<1x16x16xf32, #tpu.memory_space<vmem>>) attributes {dimension_semantics = [#tpu.dimension_semantics<parallel>], iteration_bounds = array<i64: 2>, scalar_prefetch = 0 : i64, scratch_operands = 0 : i64, tpu.core_type = #tpu.core_type<tc>, window_params = [{transform_indices = @transform_0, window_bounds = array<i64: 1, 2, 22, 22>}, {transform_indices = @transform_1, window_bounds = array<i64: 98>}, {transform_indices = @transform_2, window_bounds = array<i64: 1, 16, 16>}]} {
    %cst = arith.constant 0.000000e+00 : f32
    %0 = vector.broadcast %cst : f32 to vector<16x16xf32>
    %c0 = arith.constant 0 : index
    %1 = memref.load %arg2[%c0] : memref<98xf32, #tpu.memory_space<smem>>
    %c0_0 = arith.constant 0 : index
    %c0_1 = arith.constant 0 : index
    %c0_2 = arith.constant 0 : index
    %c0_3 = arith.constant 0 : index
    %2 = vector.load %arg1[%c0_0, %c0_1, %c0_2, %c0_3] : memref<1x2x22x22xf32, #tpu.memory_space<vmem>>, vector<1x1x16x16xf32>
    %3 = vector.shape_cast %2 : vector<1x1x16x16xf32> to vector<16x16xf32>
    %4 = vector.broadcast %1 : f32 to vector<16x16xf32>
    %5 = arith.mulf %4, %3 : vector<16x16xf32>
    %6 = arith.addf %0, %5 : vector<16x16xf32>
    %c1 = arith.constant 1 : index
    %7 = memref.load %arg2[%c1] : memref<98xf32, #tpu.memory_space<smem>>
    %c0_4 = arith.constant 0 : index
    %c0_5 = arith.constant 0 : index
    %c0_6 = arith.constant 0 : index
    %c1_7 = arith.constant 1 : index
    %8 = vector.load %arg1[%c0_4, %c0_5, %c0_6, %c1_7] : memref<1x2x22x22xf32, #tpu.memory_space<vmem>>, vector<1x1x16x16xf32>
    %9 = vector.shape_cast %8 : vector<1x1x16x16xf32> to vector<16x16xf32>
    %10 = vector.broadcast %7 : f32 to vector<16x16xf32>
    %11 = arith.mulf %10, %9 : vector<16x16xf32>
    %12 = arith.addf %6, %11 : vector<16x16xf32>
    %c2 = arith.constant 2 : index
    %13 = memref.load %arg2[%c2] : memref<98xf32, #tpu.memory_space<smem>>
    %c0_8 = arith.constant 0 : index
    %c0_9 = arith.constant 0 : index
    %c0_10 = arith.constant 0 : index
    %c2_11 = arith.constant 2 : index
    %14 = vector.load %arg1[%c0_8, %c0_9, %c0_10, %c2_11] : memref<1x2x22x22xf32, #tpu.memory_space<vmem>>, vector<1x1x16x16xf32>
    %15 = vector.shape_cast %14 : vector<1x1x16x16xf32> to vector<16x16xf32>
    %16 = vector.broadcast %13 : f32 to vector<16x16xf32>
    %17 = arith.mulf %16, %15 : vector<16x16xf32>
    %18 = arith.addf %12, %17 : vector<16x16xf32>
    %c3 = arith.constant 3 : index
    %19 = memref.load %arg2[%c3] : memref<98xf32, #tpu.memory_space<smem>>
    %c0_12 = arith.constant 0 : index
    %c0_13 = arith.constant 0 : index
    %c0_14 = arith.constant 0 : index
    %c3_15 = arith.constant 3 : index
    %20 = vector.load %arg1[%c0_12, %c0_13, %c0_14, %c3_15] : memref<1x2x22x22xf32, #tpu.memory_space<vmem>>, vector<1x1x16x16xf32>
    %21 = vector.shape_cast %20 : vector<1x1x16x16xf32> to vector<16x16xf32>
    %22 = vector.broadcast %19 : f32 to vector<16x16xf32>
    %23 = arith.mulf %22, %21 : vector<16x16xf32>
    %24 = arith.addf %18, %23 : vector<16x16xf32>
    %c4 = arith.constant 4 : index
    %25 = memref.load %arg2[%c4] : memref<98xf32, #tpu.memory_space<smem>>
    %c0_16 = arith.constant 0 : index
    %c0_17 = arith.constant 0 : index
    %c0_18 = arith.constant 0 : index
    %c4_19 = arith.constant 4 : index
    %26 = vector.load %arg1[%c0_16, %c0_17, %c0_18, %c4_19] : memref<1x2x22x22xf32, #tpu.memory_space<vmem>>, vector<1x1x16x16xf32>
    %27 = vector.shape_cast %26 : vector<1x1x16x16xf32> to vector<16x16xf32>
    %28 = vector.broadcast %25 : f32 to vector<16x16xf32>
    %29 = arith.mulf %28, %27 : vector<16x16xf32>
    %30 = arith.addf %24, %29 : vector<16x16xf32>
    %c5 = arith.constant 5 : index
    %31 = memref.load %arg2[%c5] : memref<98xf32, #tpu.memory_space<smem>>
    %c0_20 = arith.constant 0 : index
    %c0_21 = arith.constant 0 : index
    %c0_22 = arith.constant 0 : index
    %c5_23 = arith.constant 5 : index
    %32 = vector.load %arg1[%c0_20, %c0_21, %c0_22, %c5_23] : memref<1x2x22x22xf32, #tpu.memory_space<vmem>>, vector<1x1x16x16xf32>
    %33 = vector.shape_cast %32 : vector<1x1x16x16xf32> to vector<16x16xf32>
    %34 = vector.broadcast %31 : f32 to vector<16x16xf32>
    %35 = arith.mulf %34, %33 : vector<16x16xf32>
    %36 = arith.addf %30, %35 : vector<16x16xf32>
    %c6 = arith.constant 6 : index
    %37 = memref.load %arg2[%c6] : memref<98xf32, #tpu.memory_space<smem>>
    %c0_24 = arith.constant 0 : index
    %c0_25 = arith.constant 0 : index
    %c0_26 = arith.constant 0 : index
    %c6_27 = arith.constant 6 : index
    %38 = vector.load %arg1[%c0_24, %c0_25, %c0_26, %c6_27] : memref<1x2x22x22xf32, #tpu.memory_space<vmem>>, vector<1x1x16x16xf32>
    %39 = vector.shape_cast %38 : vector<1x1x16x16xf32> to vector<16x16xf32>
    %40 = vector.broadcast %37 : f32 to vector<16x16xf32>
    %41 = arith.mulf %40, %39 : vector<16x16xf32>
    %42 = arith.addf %36, %41 : vector<16x16xf32>
    %c7 = arith.constant 7 : index
    %43 = memref.load %arg2[%c7] : memref<98xf32, #tpu.memory_space<smem>>
    %c0_28 = arith.constant 0 : index
    %c0_29 = arith.constant 0 : index
    %c1_30 = arith.constant 1 : index
    %c0_31 = arith.constant 0 : index
    %44 = vector.load %arg1[%c0_28, %c0_29, %c1_30, %c0_31] : memref<1x2x22x22xf32, #tpu.memory_space<vmem>>, vector<1x1x16x16xf32>
    %45 = vector.shape_cast %44 : vector<1x1x16x16xf32> to vector<16x16xf32>
    %46 = vector.broadcast %43 : f32 to vector<16x16xf32>
    %47 = arith.mulf %46, %45 : vector<16x16xf32>
    %48 = arith.addf %42, %47 : vector<16x16xf32>
    %c8 = arith.constant 8 : index
    %49 = memref.load %arg2[%c8] : memref<98xf32, #tpu.memory_space<smem>>
    %c0_32 = arith.constant 0 : index
    %c0_33 = arith.constant 0 : index
    %c1_34 = arith.constant 1 : index
    %c1_35 = arith.constant 1 : index
    %50 = vector.load %arg1[%c0_32, %c0_33, %c1_34, %c1_35] : memref<1x2x22x22xf32, #tpu.memory_space<vmem>>, vector<1x1x16x16xf32>
    %51 = vector.shape_cast %50 : vector<1x1x16x16xf32> to vector<16x16xf32>
    %52 = vector.broadcast %49 : f32 to vector<16x16xf32>
    %53 = arith.mulf %52, %51 : vector<16x16xf32>
    %54 = arith.addf %48, %53 : vector<16x16xf32>
    %c9 = arith.constant 9 : index
    %55 = memref.load %arg2[%c9] : memref<98xf32, #tpu.memory_space<smem>>
    %c0_36 = arith.constant 0 : index
    %c0_37 = arith.constant 0 : index
    %c1_38 = arith.constant 1 : index
    %c2_39 = arith.constant 2 : index
    %56 = vector.load %arg1[%c0_36, %c0_37, %c1_38, %c2_39] : memref<1x2x22x22xf32, #tpu.memory_space<vmem>>, vector<1x1x16x16xf32>
    %57 = vector.shape_cast %56 : vector<1x1x16x16xf32> to vector<16x16xf32>
    %58 = vector.broadcast %55 : f32 to vector<16x16xf32>
    %59 = arith.mulf %58, %57 : vector<16x16xf32>
    %60 = arith.addf %54, %59 : vector<16x16xf32>
    %c10 = arith.constant 10 : index
    %61 = memref.load %arg2[%c10] : memref<98xf32, #tpu.memory_space<smem>>
    %c0_40 = arith.constant 0 : index
    %c0_41 = arith.constant 0 : index
    %c1_42 = arith.constant 1 : index
    %c3_43 = arith.constant 3 : index
    %62 = vector.load %arg1[%c0_40, %c0_41, %c1_42, %c3_43] : memref<1x2x22x22xf32, #tpu.memory_space<vmem>>, vector<1x1x16x16xf32>
    %63 = vector.shape_cast %62 : vector<1x1x16x16xf32> to vector<16x16xf32>
    %64 = vector.broadcast %61 : f32 to vector<16x16xf32>
    %65 = arith.mulf %64, %63 : vector<16x16xf32>
    %66 = arith.addf %60, %65 : vector<16x16xf32>
    %c11 = arith.constant 11 : index
    %67 = memref.load %arg2[%c11] : memref<98xf32, #tpu.memory_space<smem>>
    %c0_44 = arith.constant 0 : index
    %c0_45 = arith.constant 0 : index
    %c1_46 = arith.constant 1 : index
    %c4_47 = arith.constant 4 : index
    %68 = vector.load %arg1[%c0_44, %c0_45, %c1_46, %c4_47] : memref<1x2x22x22xf32, #tpu.memory_space<vmem>>, vector<1x1x16x16xf32>
    %69 = vector.shape_cast %68 : vector<1x1x16x16xf32> to vector<16x16xf32>
    %70 = vector.broadcast %67 : f32 to vector<16x16xf32>
    %71 = arith.mulf %70, %69 : vector<16x16xf32>
    %72 = arith.addf %66, %71 : vector<16x16xf32>
    %c12 = arith.constant 12 : index
    %73 = memref.load %arg2[%c12] : memref<98xf32, #tpu.memory_space<smem>>
    %c0_48 = arith.constant 0 : index
    %c0_49 = arith.constant 0 : index
    %c1_50 = arith.constant 1 : index
    %c5_51 = arith.constant 5 : index
    %74 = vector.load %arg1[%c0_48, %c0_49, %c1_50, %c5_51] : memref<1x2x22x22xf32, #tpu.memory_space<vmem>>, vector<1x1x16x16xf32>
    %75 = vector.shape_cast %74 : vector<1x1x16x16xf32> to vector<16x16xf32>
    %76 = vector.broadcast %73 : f32 to vector<16x16xf32>
    %77 = arith.mulf %76, %75 : vector<16x16xf32>
    %78 = arith.addf %72, %77 : vector<16x16xf32>
    %c13 = arith.constant 13 : index
    %79 = memref.load %arg2[%c13] : memref<98xf32, #tpu.memory_space<smem>>
    %c0_52 = arith.constant 0 : index
    %c0_53 = arith.constant 0 : index
    %c1_54 = arith.constant 1 : index
    %c6_55 = arith.constant 6 : index
    %80 = vector.load %arg1[%c0_52, %c0_53, %c1_54, %c6_55] : memref<1x2x22x22xf32, #tpu.memory_space<vmem>>, vector<1x1x16x16xf32>
    %81 = vector.shape_cast %80 : vector<1x1x16x16xf32> to vector<16x16xf32>
    %82 = vector.broadcast %79 : f32 to vector<16x16xf32>
    %83 = arith.mulf %82, %81 : vector<16x16xf32>
    %84 = arith.addf %78, %83 : vector<16x16xf32>
    %c14 = arith.constant 14 : index
    %85 = memref.load %arg2[%c14] : memref<98xf32, #tpu.memory_space<smem>>
    %c0_56 = arith.constant 0 : index
    %c0_57 = arith.constant 0 : index
    %c2_58 = arith.constant 2 : index
    %c0_59 = arith.constant 0 : index
    %86 = vector.load %arg1[%c0_56, %c0_57, %c2_58, %c0_59] : memref<1x2x22x22xf32, #tpu.memory_space<vmem>>, vector<1x1x16x16xf32>
    %87 = vector.shape_cast %86 : vector<1x1x16x16xf32> to vector<16x16xf32>
    %88 = vector.broadcast %85 : f32 to vector<16x16xf32>
    %89 = arith.mulf %88, %87 : vector<16x16xf32>
    %90 = arith.addf %84, %89 : vector<16x16xf32>
    %c15 = arith.constant 15 : index
    %91 = memref.load %arg2[%c15] : memref<98xf32, #tpu.memory_space<smem>>
    %c0_60 = arith.constant 0 : index
    %c0_61 = arith.constant 0 : index
    %c2_62 = arith.constant 2 : index
    %c1_63 = arith.constant 1 : index
    %92 = vector.load %arg1[%c0_60, %c0_61, %c2_62, %c1_63] : memref<1x2x22x22xf32, #tpu.memory_space<vmem>>, vector<1x1x16x16xf32>
    %93 = vector.shape_cast %92 : vector<1x1x16x16xf32> to vector<16x16xf32>
    %94 = vector.broadcast %91 : f32 to vector<16x16xf32>
    %95 = arith.mulf %94, %93 : vector<16x16xf32>
    %96 = arith.addf %90, %95 : vector<16x16xf32>
    %c16 = arith.constant 16 : index
    %97 = memref.load %arg2[%c16] : memref<98xf32, #tpu.memory_space<smem>>
    %c0_64 = arith.constant 0 : index
    %c0_65 = arith.constant 0 : index
    %c2_66 = arith.constant 2 : index
    %c2_67 = arith.constant 2 : index
    %98 = vector.load %arg1[%c0_64, %c0_65, %c2_66, %c2_67] : memref<1x2x22x22xf32, #tpu.memory_space<vmem>>, vector<1x1x16x16xf32>
    %99 = vector.shape_cast %98 : vector<1x1x16x16xf32> to vector<16x16xf32>
    %100 = vector.broadcast %97 : f32 to vector<16x16xf32>
    %101 = arith.mulf %100, %99 : vector<16x16xf32>
    %102 = arith.addf %96, %101 : vector<16x16xf32>
    %c17 = arith.constant 17 : index
    %103 = memref.load %arg2[%c17] : memref<98xf32, #tpu.memory_space<smem>>
    %c0_68 = arith.constant 0 : index
    %c0_69 = arith.constant 0 : index
    %c2_70 = arith.constant 2 : index
    %c3_71 = arith.constant 3 : index
    %104 = vector.load %arg1[%c0_68, %c0_69, %c2_70, %c3_71] : memref<1x2x22x22xf32, #tpu.memory_space<vmem>>, vector<1x1x16x16xf32>
    %105 = vector.shape_cast %104 : vector<1x1x16x16xf32> to vector<16x16xf32>
    %106 = vector.broadcast %103 : f32 to vector<16x16xf32>
    %107 = arith.mulf %106, %105 : vector<16x16xf32>
    %108 = arith.addf %102, %107 : vector<16x16xf32>
    %c18 = arith.constant 18 : index
    %109 = memref.load %arg2[%c18] : memref<98xf32, #tpu.memory_space<smem>>
    %c0_72 = arith.constant 0 : index
    %c0_73 = arith.constant 0 : index
    %c2_74 = arith.constant 2 : index
    %c4_75 = arith.constant 4 : index
    %110 = vector.load %arg1[%c0_72, %c0_73, %c2_74, %c4_75] : memref<1x2x22x22xf32, #tpu.memory_space<vmem>>, vector<1x1x16x16xf32>
    %111 = vector.shape_cast %110 : vector<1x1x16x16xf32> to vector<16x16xf32>
    %112 = vector.broadcast %109 : f32 to vector<16x16xf32>
    %113 = arith.mulf %112, %111 : vector<16x16xf32>
    %114 = arith.addf %108, %113 : vector<16x16xf32>
    %c19 = arith.constant 19 : index
    %115 = memref.load %arg2[%c19] : memref<98xf32, #tpu.memory_space<smem>>
    %c0_76 = arith.constant 0 : index
    %c0_77 = arith.constant 0 : index
    %c2_78 = arith.constant 2 : index
    %c5_79 = arith.constant 5 : index
    %116 = vector.load %arg1[%c0_76, %c0_77, %c2_78, %c5_79] : memref<1x2x22x22xf32, #tpu.memory_space<vmem>>, vector<1x1x16x16xf32>
    %117 = vector.shape_cast %116 : vector<1x1x16x16xf32> to vector<16x16xf32>
    %118 = vector.broadcast %115 : f32 to vector<16x16xf32>
    %119 = arith.mulf %118, %117 : vector<16x16xf32>
    %120 = arith.addf %114, %119 : vector<16x16xf32>
    %c20 = arith.constant 20 : index
    %121 = memref.load %arg2[%c20] : memref<98xf32, #tpu.memory_space<smem>>
    %c0_80 = arith.constant 0 : index
    %c0_81 = arith.constant 0 : index
    %c2_82 = arith.constant 2 : index
    %c6_83 = arith.constant 6 : index
    %122 = vector.load %arg1[%c0_80, %c0_81, %c2_82, %c6_83] : memref<1x2x22x22xf32, #tpu.memory_space<vmem>>, vector<1x1x16x16xf32>
    %123 = vector.shape_cast %122 : vector<1x1x16x16xf32> to vector<16x16xf32>
    %124 = vector.broadcast %121 : f32 to vector<16x16xf32>
    %125 = arith.mulf %124, %123 : vector<16x16xf32>
    %126 = arith.addf %120, %125 : vector<16x16xf32>
    %c21 = arith.constant 21 : index
    %127 = memref.load %arg2[%c21] : memref<98xf32, #tpu.memory_space<smem>>
    %c0_84 = arith.constant 0 : index
    %c0_85 = arith.constant 0 : index
    %c3_86 = arith.constant 3 : index
    %c0_87 = arith.constant 0 : index
    %128 = vector.load %arg1[%c0_84, %c0_85, %c3_86, %c0_87] : memref<1x2x22x22xf32, #tpu.memory_space<vmem>>, vector<1x1x16x16xf32>
    %129 = vector.shape_cast %128 : vector<1x1x16x16xf32> to vector<16x16xf32>
    %130 = vector.broadcast %127 : f32 to vector<16x16xf32>
    %131 = arith.mulf %130, %129 : vector<16x16xf32>
    %132 = arith.addf %126, %131 : vector<16x16xf32>
    %c22 = arith.constant 22 : index
    %133 = memref.load %arg2[%c22] : memref<98xf32, #tpu.memory_space<smem>>
    %c0_88 = arith.constant 0 : index
    %c0_89 = arith.constant 0 : index
    %c3_90 = arith.constant 3 : index
    %c1_91 = arith.constant 1 : index
    %134 = vector.load %arg1[%c0_88, %c0_89, %c3_90, %c1_91] : memref<1x2x22x22xf32, #tpu.memory_space<vmem>>, vector<1x1x16x16xf32>
    %135 = vector.shape_cast %134 : vector<1x1x16x16xf32> to vector<16x16xf32>
    %136 = vector.broadcast %133 : f32 to vector<16x16xf32>
    %137 = arith.mulf %136, %135 : vector<16x16xf32>
    %138 = arith.addf %132, %137 : vector<16x16xf32>
    %c23 = arith.constant 23 : index
    %139 = memref.load %arg2[%c23] : memref<98xf32, #tpu.memory_space<smem>>
    %c0_92 = arith.constant 0 : index
    %c0_93 = arith.constant 0 : index
    %c3_94 = arith.constant 3 : index
    %c2_95 = arith.constant 2 : index
    %140 = vector.load %arg1[%c0_92, %c0_93, %c3_94, %c2_95] : memref<1x2x22x22xf32, #tpu.memory_space<vmem>>, vector<1x1x16x16xf32>
    %141 = vector.shape_cast %140 : vector<1x1x16x16xf32> to vector<16x16xf32>
    %142 = vector.broadcast %139 : f32 to vector<16x16xf32>
    %143 = arith.mulf %142, %141 : vector<16x16xf32>
    %144 = arith.addf %138, %143 : vector<16x16xf32>
    %c24 = arith.constant 24 : index
    %145 = memref.load %arg2[%c24] : memref<98xf32, #tpu.memory_space<smem>>
    %c0_96 = arith.constant 0 : index
    %c0_97 = arith.constant 0 : index
    %c3_98 = arith.constant 3 : index
    %c3_99 = arith.constant 3 : index
    %146 = vector.load %arg1[%c0_96, %c0_97, %c3_98, %c3_99] : memref<1x2x22x22xf32, #tpu.memory_space<vmem>>, vector<1x1x16x16xf32>
    %147 = vector.shape_cast %146 : vector<1x1x16x16xf32> to vector<16x16xf32>
    %148 = vector.broadcast %145 : f32 to vector<16x16xf32>
    %149 = arith.mulf %148, %147 : vector<16x16xf32>
    %150 = arith.addf %144, %149 : vector<16x16xf32>
    %c25 = arith.constant 25 : index
    %151 = memref.load %arg2[%c25] : memref<98xf32, #tpu.memory_space<smem>>
    %c0_100 = arith.constant 0 : index
    %c0_101 = arith.constant 0 : index
    %c3_102 = arith.constant 3 : index
    %c4_103 = arith.constant 4 : index
    %152 = vector.load %arg1[%c0_100, %c0_101, %c3_102, %c4_103] : memref<1x2x22x22xf32, #tpu.memory_space<vmem>>, vector<1x1x16x16xf32>
    %153 = vector.shape_cast %152 : vector<1x1x16x16xf32> to vector<16x16xf32>
    %154 = vector.broadcast %151 : f32 to vector<16x16xf32>
    %155 = arith.mulf %154, %153 : vector<16x16xf32>
    %156 = arith.addf %150, %155 : vector<16x16xf32>
    %c26 = arith.constant 26 : index
    %157 = memref.load %arg2[%c26] : memref<98xf32, #tpu.memory_space<smem>>
    %c0_104 = arith.constant 0 : index
    %c0_105 = arith.constant 0 : index
    %c3_106 = arith.constant 3 : index
    %c5_107 = arith.constant 5 : index
    %158 = vector.load %arg1[%c0_104, %c0_105, %c3_106, %c5_107] : memref<1x2x22x22xf32, #tpu.memory_space<vmem>>, vector<1x1x16x16xf32>
    %159 = vector.shape_cast %158 : vector<1x1x16x16xf32> to vector<16x16xf32>
    %160 = vector.broadcast %157 : f32 to vector<16x16xf32>
    %161 = arith.mulf %160, %159 : vector<16x16xf32>
    %162 = arith.addf %156, %161 : vector<16x16xf32>
    %c27 = arith.constant 27 : index
    %163 = memref.load %arg2[%c27] : memref<98xf32, #tpu.memory_space<smem>>
    %c0_108 = arith.constant 0 : index
    %c0_109 = arith.constant 0 : index
    %c3_110 = arith.constant 3 : index
    %c6_111 = arith.constant 6 : index
    %164 = vector.load %arg1[%c0_108, %c0_109, %c3_110, %c6_111] : memref<1x2x22x22xf32, #tpu.memory_space<vmem>>, vector<1x1x16x16xf32>
    %165 = vector.shape_cast %164 : vector<1x1x16x16xf32> to vector<16x16xf32>
    %166 = vector.broadcast %163 : f32 to vector<16x16xf32>
    %167 = arith.mulf %166, %165 : vector<16x16xf32>
    %168 = arith.addf %162, %167 : vector<16x16xf32>
    %c28 = arith.constant 28 : index
    %169 = memref.load %arg2[%c28] : memref<98xf32, #tpu.memory_space<smem>>
    %c0_112 = arith.constant 0 : index
    %c0_113 = arith.constant 0 : index
    %c4_114 = arith.constant 4 : index
    %c0_115 = arith.constant 0 : index
    %170 = vector.load %arg1[%c0_112, %c0_113, %c4_114, %c0_115] : memref<1x2x22x22xf32, #tpu.memory_space<vmem>>, vector<1x1x16x16xf32>
    %171 = vector.shape_cast %170 : vector<1x1x16x16xf32> to vector<16x16xf32>
    %172 = vector.broadcast %169 : f32 to vector<16x16xf32>
    %173 = arith.mulf %172, %171 : vector<16x16xf32>
    %174 = arith.addf %168, %173 : vector<16x16xf32>
    %c29 = arith.constant 29 : index
    %175 = memref.load %arg2[%c29] : memref<98xf32, #tpu.memory_space<smem>>
    %c0_116 = arith.constant 0 : index
    %c0_117 = arith.constant 0 : index
    %c4_118 = arith.constant 4 : index
    %c1_119 = arith.constant 1 : index
    %176 = vector.load %arg1[%c0_116, %c0_117, %c4_118, %c1_119] : memref<1x2x22x22xf32, #tpu.memory_space<vmem>>, vector<1x1x16x16xf32>
    %177 = vector.shape_cast %176 : vector<1x1x16x16xf32> to vector<16x16xf32>
    %178 = vector.broadcast %175 : f32 to vector<16x16xf32>
    %179 = arith.mulf %178, %177 : vector<16x16xf32>
    %180 = arith.addf %174, %179 : vector<16x16xf32>
    %c30 = arith.constant 30 : index
    %181 = memref.load %arg2[%c30] : memref<98xf32, #tpu.memory_space<smem>>
    %c0_120 = arith.constant 0 : index
    %c0_121 = arith.constant 0 : index
    %c4_122 = arith.constant 4 : index
    %c2_123 = arith.constant 2 : index
    %182 = vector.load %arg1[%c0_120, %c0_121, %c4_122, %c2_123] : memref<1x2x22x22xf32, #tpu.memory_space<vmem>>, vector<1x1x16x16xf32>
    %183 = vector.shape_cast %182 : vector<1x1x16x16xf32> to vector<16x16xf32>
    %184 = vector.broadcast %181 : f32 to vector<16x16xf32>
    %185 = arith.mulf %184, %183 : vector<16x16xf32>
    %186 = arith.addf %180, %185 : vector<16x16xf32>
    %c31 = arith.constant 31 : index
    %187 = memref.load %arg2[%c31] : memref<98xf32, #tpu.memory_space<smem>>
    %c0_124 = arith.constant 0 : index
    %c0_125 = arith.constant 0 : index
    %c4_126 = arith.constant 4 : index
    %c3_127 = arith.constant 3 : index
    %188 = vector.load %arg1[%c0_124, %c0_125, %c4_126, %c3_127] : memref<1x2x22x22xf32, #tpu.memory_space<vmem>>, vector<1x1x16x16xf32>
    %189 = vector.shape_cast %188 : vector<1x1x16x16xf32> to vector<16x16xf32>
    %190 = vector.broadcast %187 : f32 to vector<16x16xf32>
    %191 = arith.mulf %190, %189 : vector<16x16xf32>
    %192 = arith.addf %186, %191 : vector<16x16xf32>
    %c32 = arith.constant 32 : index
    %193 = memref.load %arg2[%c32] : memref<98xf32, #tpu.memory_space<smem>>
    %c0_128 = arith.constant 0 : index
    %c0_129 = arith.constant 0 : index
    %c4_130 = arith.constant 4 : index
    %c4_131 = arith.constant 4 : index
    %194 = vector.load %arg1[%c0_128, %c0_129, %c4_130, %c4_131] : memref<1x2x22x22xf32, #tpu.memory_space<vmem>>, vector<1x1x16x16xf32>
    %195 = vector.shape_cast %194 : vector<1x1x16x16xf32> to vector<16x16xf32>
    %196 = vector.broadcast %193 : f32 to vector<16x16xf32>
    %197 = arith.mulf %196, %195 : vector<16x16xf32>
    %198 = arith.addf %192, %197 : vector<16x16xf32>
    %c33 = arith.constant 33 : index
    %199 = memref.load %arg2[%c33] : memref<98xf32, #tpu.memory_space<smem>>
    %c0_132 = arith.constant 0 : index
    %c0_133 = arith.constant 0 : index
    %c4_134 = arith.constant 4 : index
    %c5_135 = arith.constant 5 : index
    %200 = vector.load %arg1[%c0_132, %c0_133, %c4_134, %c5_135] : memref<1x2x22x22xf32, #tpu.memory_space<vmem>>, vector<1x1x16x16xf32>
    %201 = vector.shape_cast %200 : vector<1x1x16x16xf32> to vector<16x16xf32>
    %202 = vector.broadcast %199 : f32 to vector<16x16xf32>
    %203 = arith.mulf %202, %201 : vector<16x16xf32>
    %204 = arith.addf %198, %203 : vector<16x16xf32>
    %c34 = arith.constant 34 : index
    %205 = memref.load %arg2[%c34] : memref<98xf32, #tpu.memory_space<smem>>
    %c0_136 = arith.constant 0 : index
    %c0_137 = arith.constant 0 : index
    %c4_138 = arith.constant 4 : index
    %c6_139 = arith.constant 6 : index
    %206 = vector.load %arg1[%c0_136, %c0_137, %c4_138, %c6_139] : memref<1x2x22x22xf32, #tpu.memory_space<vmem>>, vector<1x1x16x16xf32>
    %207 = vector.shape_cast %206 : vector<1x1x16x16xf32> to vector<16x16xf32>
    %208 = vector.broadcast %205 : f32 to vector<16x16xf32>
    %209 = arith.mulf %208, %207 : vector<16x16xf32>
    %210 = arith.addf %204, %209 : vector<16x16xf32>
    %c35 = arith.constant 35 : index
    %211 = memref.load %arg2[%c35] : memref<98xf32, #tpu.memory_space<smem>>
    %c0_140 = arith.constant 0 : index
    %c0_141 = arith.constant 0 : index
    %c5_142 = arith.constant 5 : index
    %c0_143 = arith.constant 0 : index
    %212 = vector.load %arg1[%c0_140, %c0_141, %c5_142, %c0_143] : memref<1x2x22x22xf32, #tpu.memory_space<vmem>>, vector<1x1x16x16xf32>
    %213 = vector.shape_cast %212 : vector<1x1x16x16xf32> to vector<16x16xf32>
    %214 = vector.broadcast %211 : f32 to vector<16x16xf32>
    %215 = arith.mulf %214, %213 : vector<16x16xf32>
    %216 = arith.addf %210, %215 : vector<16x16xf32>
    %c36 = arith.constant 36 : index
    %217 = memref.load %arg2[%c36] : memref<98xf32, #tpu.memory_space<smem>>
    %c0_144 = arith.constant 0 : index
    %c0_145 = arith.constant 0 : index
    %c5_146 = arith.constant 5 : index
    %c1_147 = arith.constant 1 : index
    %218 = vector.load %arg1[%c0_144, %c0_145, %c5_146, %c1_147] : memref<1x2x22x22xf32, #tpu.memory_space<vmem>>, vector<1x1x16x16xf32>
    %219 = vector.shape_cast %218 : vector<1x1x16x16xf32> to vector<16x16xf32>
    %220 = vector.broadcast %217 : f32 to vector<16x16xf32>
    %221 = arith.mulf %220, %219 : vector<16x16xf32>
    %222 = arith.addf %216, %221 : vector<16x16xf32>
    %c37 = arith.constant 37 : index
    %223 = memref.load %arg2[%c37] : memref<98xf32, #tpu.memory_space<smem>>
    %c0_148 = arith.constant 0 : index
    %c0_149 = arith.constant 0 : index
    %c5_150 = arith.constant 5 : index
    %c2_151 = arith.constant 2 : index
    %224 = vector.load %arg1[%c0_148, %c0_149, %c5_150, %c2_151] : memref<1x2x22x22xf32, #tpu.memory_space<vmem>>, vector<1x1x16x16xf32>
    %225 = vector.shape_cast %224 : vector<1x1x16x16xf32> to vector<16x16xf32>
    %226 = vector.broadcast %223 : f32 to vector<16x16xf32>
    %227 = arith.mulf %226, %225 : vector<16x16xf32>
    %228 = arith.addf %222, %227 : vector<16x16xf32>
    %c38 = arith.constant 38 : index
    %229 = memref.load %arg2[%c38] : memref<98xf32, #tpu.memory_space<smem>>
    %c0_152 = arith.constant 0 : index
    %c0_153 = arith.constant 0 : index
    %c5_154 = arith.constant 5 : index
    %c3_155 = arith.constant 3 : index
    %230 = vector.load %arg1[%c0_152, %c0_153, %c5_154, %c3_155] : memref<1x2x22x22xf32, #tpu.memory_space<vmem>>, vector<1x1x16x16xf32>
    %231 = vector.shape_cast %230 : vector<1x1x16x16xf32> to vector<16x16xf32>
    %232 = vector.broadcast %229 : f32 to vector<16x16xf32>
    %233 = arith.mulf %232, %231 : vector<16x16xf32>
    %234 = arith.addf %228, %233 : vector<16x16xf32>
    %c39 = arith.constant 39 : index
    %235 = memref.load %arg2[%c39] : memref<98xf32, #tpu.memory_space<smem>>
    %c0_156 = arith.constant 0 : index
    %c0_157 = arith.constant 0 : index
    %c5_158 = arith.constant 5 : index
    %c4_159 = arith.constant 4 : index
    %236 = vector.load %arg1[%c0_156, %c0_157, %c5_158, %c4_159] : memref<1x2x22x22xf32, #tpu.memory_space<vmem>>, vector<1x1x16x16xf32>
    %237 = vector.shape_cast %236 : vector<1x1x16x16xf32> to vector<16x16xf32>
    %238 = vector.broadcast %235 : f32 to vector<16x16xf32>
    %239 = arith.mulf %238, %237 : vector<16x16xf32>
    %240 = arith.addf %234, %239 : vector<16x16xf32>
    %c40 = arith.constant 40 : index
    %241 = memref.load %arg2[%c40] : memref<98xf32, #tpu.memory_space<smem>>
    %c0_160 = arith.constant 0 : index
    %c0_161 = arith.constant 0 : index
    %c5_162 = arith.constant 5 : index
    %c5_163 = arith.constant 5 : index
    %242 = vector.load %arg1[%c0_160, %c0_161, %c5_162, %c5_163] : memref<1x2x22x22xf32, #tpu.memory_space<vmem>>, vector<1x1x16x16xf32>
    %243 = vector.shape_cast %242 : vector<1x1x16x16xf32> to vector<16x16xf32>
    %244 = vector.broadcast %241 : f32 to vector<16x16xf32>
    %245 = arith.mulf %244, %243 : vector<16x16xf32>
    %246 = arith.addf %240, %245 : vector<16x16xf32>
    %c41 = arith.constant 41 : index
    %247 = memref.load %arg2[%c41] : memref<98xf32, #tpu.memory_space<smem>>
    %c0_164 = arith.constant 0 : index
    %c0_165 = arith.constant 0 : index
    %c5_166 = arith.constant 5 : index
    %c6_167 = arith.constant 6 : index
    %248 = vector.load %arg1[%c0_164, %c0_165, %c5_166, %c6_167] : memref<1x2x22x22xf32, #tpu.memory_space<vmem>>, vector<1x1x16x16xf32>
    %249 = vector.shape_cast %248 : vector<1x1x16x16xf32> to vector<16x16xf32>
    %250 = vector.broadcast %247 : f32 to vector<16x16xf32>
    %251 = arith.mulf %250, %249 : vector<16x16xf32>
    %252 = arith.addf %246, %251 : vector<16x16xf32>
    %c42 = arith.constant 42 : index
    %253 = memref.load %arg2[%c42] : memref<98xf32, #tpu.memory_space<smem>>
    %c0_168 = arith.constant 0 : index
    %c0_169 = arith.constant 0 : index
    %c6_170 = arith.constant 6 : index
    %c0_171 = arith.constant 0 : index
    %254 = vector.load %arg1[%c0_168, %c0_169, %c6_170, %c0_171] : memref<1x2x22x22xf32, #tpu.memory_space<vmem>>, vector<1x1x16x16xf32>
    %255 = vector.shape_cast %254 : vector<1x1x16x16xf32> to vector<16x16xf32>
    %256 = vector.broadcast %253 : f32 to vector<16x16xf32>
    %257 = arith.mulf %256, %255 : vector<16x16xf32>
    %258 = arith.addf %252, %257 : vector<16x16xf32>
    %c43 = arith.constant 43 : index
    %259 = memref.load %arg2[%c43] : memref<98xf32, #tpu.memory_space<smem>>
    %c0_172 = arith.constant 0 : index
    %c0_173 = arith.constant 0 : index
    %c6_174 = arith.constant 6 : index
    %c1_175 = arith.constant 1 : index
    %260 = vector.load %arg1[%c0_172, %c0_173, %c6_174, %c1_175] : memref<1x2x22x22xf32, #tpu.memory_space<vmem>>, vector<1x1x16x16xf32>
    %261 = vector.shape_cast %260 : vector<1x1x16x16xf32> to vector<16x16xf32>
    %262 = vector.broadcast %259 : f32 to vector<16x16xf32>
    %263 = arith.mulf %262, %261 : vector<16x16xf32>
    %264 = arith.addf %258, %263 : vector<16x16xf32>
    %c44 = arith.constant 44 : index
    %265 = memref.load %arg2[%c44] : memref<98xf32, #tpu.memory_space<smem>>
    %c0_176 = arith.constant 0 : index
    %c0_177 = arith.constant 0 : index
    %c6_178 = arith.constant 6 : index
    %c2_179 = arith.constant 2 : index
    %266 = vector.load %arg1[%c0_176, %c0_177, %c6_178, %c2_179] : memref<1x2x22x22xf32, #tpu.memory_space<vmem>>, vector<1x1x16x16xf32>
    %267 = vector.shape_cast %266 : vector<1x1x16x16xf32> to vector<16x16xf32>
    %268 = vector.broadcast %265 : f32 to vector<16x16xf32>
    %269 = arith.mulf %268, %267 : vector<16x16xf32>
    %270 = arith.addf %264, %269 : vector<16x16xf32>
    %c45 = arith.constant 45 : index
    %271 = memref.load %arg2[%c45] : memref<98xf32, #tpu.memory_space<smem>>
    %c0_180 = arith.constant 0 : index
    %c0_181 = arith.constant 0 : index
    %c6_182 = arith.constant 6 : index
    %c3_183 = arith.constant 3 : index
    %272 = vector.load %arg1[%c0_180, %c0_181, %c6_182, %c3_183] : memref<1x2x22x22xf32, #tpu.memory_space<vmem>>, vector<1x1x16x16xf32>
    %273 = vector.shape_cast %272 : vector<1x1x16x16xf32> to vector<16x16xf32>
    %274 = vector.broadcast %271 : f32 to vector<16x16xf32>
    %275 = arith.mulf %274, %273 : vector<16x16xf32>
    %276 = arith.addf %270, %275 : vector<16x16xf32>
    %c46 = arith.constant 46 : index
    %277 = memref.load %arg2[%c46] : memref<98xf32, #tpu.memory_space<smem>>
    %c0_184 = arith.constant 0 : index
    %c0_185 = arith.constant 0 : index
    %c6_186 = arith.constant 6 : index
    %c4_187 = arith.constant 4 : index
    %278 = vector.load %arg1[%c0_184, %c0_185, %c6_186, %c4_187] : memref<1x2x22x22xf32, #tpu.memory_space<vmem>>, vector<1x1x16x16xf32>
    %279 = vector.shape_cast %278 : vector<1x1x16x16xf32> to vector<16x16xf32>
    %280 = vector.broadcast %277 : f32 to vector<16x16xf32>
    %281 = arith.mulf %280, %279 : vector<16x16xf32>
    %282 = arith.addf %276, %281 : vector<16x16xf32>
    %c47 = arith.constant 47 : index
    %283 = memref.load %arg2[%c47] : memref<98xf32, #tpu.memory_space<smem>>
    %c0_188 = arith.constant 0 : index
    %c0_189 = arith.constant 0 : index
    %c6_190 = arith.constant 6 : index
    %c5_191 = arith.constant 5 : index
    %284 = vector.load %arg1[%c0_188, %c0_189, %c6_190, %c5_191] : memref<1x2x22x22xf32, #tpu.memory_space<vmem>>, vector<1x1x16x16xf32>
    %285 = vector.shape_cast %284 : vector<1x1x16x16xf32> to vector<16x16xf32>
    %286 = vector.broadcast %283 : f32 to vector<16x16xf32>
    %287 = arith.mulf %286, %285 : vector<16x16xf32>
    %288 = arith.addf %282, %287 : vector<16x16xf32>
    %c48 = arith.constant 48 : index
    %289 = memref.load %arg2[%c48] : memref<98xf32, #tpu.memory_space<smem>>
    %c0_192 = arith.constant 0 : index
    %c0_193 = arith.constant 0 : index
    %c6_194 = arith.constant 6 : index
    %c6_195 = arith.constant 6 : index
    %290 = vector.load %arg1[%c0_192, %c0_193, %c6_194, %c6_195] : memref<1x2x22x22xf32, #tpu.memory_space<vmem>>, vector<1x1x16x16xf32>
    %291 = vector.shape_cast %290 : vector<1x1x16x16xf32> to vector<16x16xf32>
    %292 = vector.broadcast %289 : f32 to vector<16x16xf32>
    %293 = arith.mulf %292, %291 : vector<16x16xf32>
    %294 = arith.addf %288, %293 : vector<16x16xf32>
    %c49 = arith.constant 49 : index
    %295 = memref.load %arg2[%c49] : memref<98xf32, #tpu.memory_space<smem>>
    %c0_196 = arith.constant 0 : index
    %c1_197 = arith.constant 1 : index
    %c0_198 = arith.constant 0 : index
    %c0_199 = arith.constant 0 : index
    %296 = vector.load %arg1[%c0_196, %c1_197, %c0_198, %c0_199] : memref<1x2x22x22xf32, #tpu.memory_space<vmem>>, vector<1x1x16x16xf32>
    %297 = vector.shape_cast %296 : vector<1x1x16x16xf32> to vector<16x16xf32>
    %298 = vector.broadcast %295 : f32 to vector<16x16xf32>
    %299 = arith.mulf %298, %297 : vector<16x16xf32>
    %300 = arith.addf %294, %299 : vector<16x16xf32>
    %c50 = arith.constant 50 : index
    %301 = memref.load %arg2[%c50] : memref<98xf32, #tpu.memory_space<smem>>
    %c0_200 = arith.constant 0 : index
    %c1_201 = arith.constant 1 : index
    %c0_202 = arith.constant 0 : index
    %c1_203 = arith.constant 1 : index
    %302 = vector.load %arg1[%c0_200, %c1_201, %c0_202, %c1_203] : memref<1x2x22x22xf32, #tpu.memory_space<vmem>>, vector<1x1x16x16xf32>
    %303 = vector.shape_cast %302 : vector<1x1x16x16xf32> to vector<16x16xf32>
    %304 = vector.broadcast %301 : f32 to vector<16x16xf32>
    %305 = arith.mulf %304, %303 : vector<16x16xf32>
    %306 = arith.addf %300, %305 : vector<16x16xf32>
    %c51 = arith.constant 51 : index
    %307 = memref.load %arg2[%c51] : memref<98xf32, #tpu.memory_space<smem>>
    %c0_204 = arith.constant 0 : index
    %c1_205 = arith.constant 1 : index
    %c0_206 = arith.constant 0 : index
    %c2_207 = arith.constant 2 : index
    %308 = vector.load %arg1[%c0_204, %c1_205, %c0_206, %c2_207] : memref<1x2x22x22xf32, #tpu.memory_space<vmem>>, vector<1x1x16x16xf32>
    %309 = vector.shape_cast %308 : vector<1x1x16x16xf32> to vector<16x16xf32>
    %310 = vector.broadcast %307 : f32 to vector<16x16xf32>
    %311 = arith.mulf %310, %309 : vector<16x16xf32>
    %312 = arith.addf %306, %311 : vector<16x16xf32>
    %c52 = arith.constant 52 : index
    %313 = memref.load %arg2[%c52] : memref<98xf32, #tpu.memory_space<smem>>
    %c0_208 = arith.constant 0 : index
    %c1_209 = arith.constant 1 : index
    %c0_210 = arith.constant 0 : index
    %c3_211 = arith.constant 3 : index
    %314 = vector.load %arg1[%c0_208, %c1_209, %c0_210, %c3_211] : memref<1x2x22x22xf32, #tpu.memory_space<vmem>>, vector<1x1x16x16xf32>
    %315 = vector.shape_cast %314 : vector<1x1x16x16xf32> to vector<16x16xf32>
    %316 = vector.broadcast %313 : f32 to vector<16x16xf32>
    %317 = arith.mulf %316, %315 : vector<16x16xf32>
    %318 = arith.addf %312, %317 : vector<16x16xf32>
    %c53 = arith.constant 53 : index
    %319 = memref.load %arg2[%c53] : memref<98xf32, #tpu.memory_space<smem>>
    %c0_212 = arith.constant 0 : index
    %c1_213 = arith.constant 1 : index
    %c0_214 = arith.constant 0 : index
    %c4_215 = arith.constant 4 : index
    %320 = vector.load %arg1[%c0_212, %c1_213, %c0_214, %c4_215] : memref<1x2x22x22xf32, #tpu.memory_space<vmem>>, vector<1x1x16x16xf32>
    %321 = vector.shape_cast %320 : vector<1x1x16x16xf32> to vector<16x16xf32>
    %322 = vector.broadcast %319 : f32 to vector<16x16xf32>
    %323 = arith.mulf %322, %321 : vector<16x16xf32>
    %324 = arith.addf %318, %323 : vector<16x16xf32>
    %c54 = arith.constant 54 : index
    %325 = memref.load %arg2[%c54] : memref<98xf32, #tpu.memory_space<smem>>
    %c0_216 = arith.constant 0 : index
    %c1_217 = arith.constant 1 : index
    %c0_218 = arith.constant 0 : index
    %c5_219 = arith.constant 5 : index
    %326 = vector.load %arg1[%c0_216, %c1_217, %c0_218, %c5_219] : memref<1x2x22x22xf32, #tpu.memory_space<vmem>>, vector<1x1x16x16xf32>
    %327 = vector.shape_cast %326 : vector<1x1x16x16xf32> to vector<16x16xf32>
    %328 = vector.broadcast %325 : f32 to vector<16x16xf32>
    %329 = arith.mulf %328, %327 : vector<16x16xf32>
    %330 = arith.addf %324, %329 : vector<16x16xf32>
    %c55 = arith.constant 55 : index
    %331 = memref.load %arg2[%c55] : memref<98xf32, #tpu.memory_space<smem>>
    %c0_220 = arith.constant 0 : index
    %c1_221 = arith.constant 1 : index
    %c0_222 = arith.constant 0 : index
    %c6_223 = arith.constant 6 : index
    %332 = vector.load %arg1[%c0_220, %c1_221, %c0_222, %c6_223] : memref<1x2x22x22xf32, #tpu.memory_space<vmem>>, vector<1x1x16x16xf32>
    %333 = vector.shape_cast %332 : vector<1x1x16x16xf32> to vector<16x16xf32>
    %334 = vector.broadcast %331 : f32 to vector<16x16xf32>
    %335 = arith.mulf %334, %333 : vector<16x16xf32>
    %336 = arith.addf %330, %335 : vector<16x16xf32>
    %c56 = arith.constant 56 : index
    %337 = memref.load %arg2[%c56] : memref<98xf32, #tpu.memory_space<smem>>
    %c0_224 = arith.constant 0 : index
    %c1_225 = arith.constant 1 : index
    %c1_226 = arith.constant 1 : index
    %c0_227 = arith.constant 0 : index
    %338 = vector.load %arg1[%c0_224, %c1_225, %c1_226, %c0_227] : memref<1x2x22x22xf32, #tpu.memory_space<vmem>>, vector<1x1x16x16xf32>
    %339 = vector.shape_cast %338 : vector<1x1x16x16xf32> to vector<16x16xf32>
    %340 = vector.broadcast %337 : f32 to vector<16x16xf32>
    %341 = arith.mulf %340, %339 : vector<16x16xf32>
    %342 = arith.addf %336, %341 : vector<16x16xf32>
    %c57 = arith.constant 57 : index
    %343 = memref.load %arg2[%c57] : memref<98xf32, #tpu.memory_space<smem>>
    %c0_228 = arith.constant 0 : index
    %c1_229 = arith.constant 1 : index
    %c1_230 = arith.constant 1 : index
    %c1_231 = arith.constant 1 : index
    %344 = vector.load %arg1[%c0_228, %c1_229, %c1_230, %c1_231] : memref<1x2x22x22xf32, #tpu.memory_space<vmem>>, vector<1x1x16x16xf32>
    %345 = vector.shape_cast %344 : vector<1x1x16x16xf32> to vector<16x16xf32>
    %346 = vector.broadcast %343 : f32 to vector<16x16xf32>
    %347 = arith.mulf %346, %345 : vector<16x16xf32>
    %348 = arith.addf %342, %347 : vector<16x16xf32>
    %c58 = arith.constant 58 : index
    %349 = memref.load %arg2[%c58] : memref<98xf32, #tpu.memory_space<smem>>
    %c0_232 = arith.constant 0 : index
    %c1_233 = arith.constant 1 : index
    %c1_234 = arith.constant 1 : index
    %c2_235 = arith.constant 2 : index
    %350 = vector.load %arg1[%c0_232, %c1_233, %c1_234, %c2_235] : memref<1x2x22x22xf32, #tpu.memory_space<vmem>>, vector<1x1x16x16xf32>
    %351 = vector.shape_cast %350 : vector<1x1x16x16xf32> to vector<16x16xf32>
    %352 = vector.broadcast %349 : f32 to vector<16x16xf32>
    %353 = arith.mulf %352, %351 : vector<16x16xf32>
    %354 = arith.addf %348, %353 : vector<16x16xf32>
    %c59 = arith.constant 59 : index
    %355 = memref.load %arg2[%c59] : memref<98xf32, #tpu.memory_space<smem>>
    %c0_236 = arith.constant 0 : index
    %c1_237 = arith.constant 1 : index
    %c1_238 = arith.constant 1 : index
    %c3_239 = arith.constant 3 : index
    %356 = vector.load %arg1[%c0_236, %c1_237, %c1_238, %c3_239] : memref<1x2x22x22xf32, #tpu.memory_space<vmem>>, vector<1x1x16x16xf32>
    %357 = vector.shape_cast %356 : vector<1x1x16x16xf32> to vector<16x16xf32>
    %358 = vector.broadcast %355 : f32 to vector<16x16xf32>
    %359 = arith.mulf %358, %357 : vector<16x16xf32>
    %360 = arith.addf %354, %359 : vector<16x16xf32>
    %c60 = arith.constant 60 : index
    %361 = memref.load %arg2[%c60] : memref<98xf32, #tpu.memory_space<smem>>
    %c0_240 = arith.constant 0 : index
    %c1_241 = arith.constant 1 : index
    %c1_242 = arith.constant 1 : index
    %c4_243 = arith.constant 4 : index
    %362 = vector.load %arg1[%c0_240, %c1_241, %c1_242, %c4_243] : memref<1x2x22x22xf32, #tpu.memory_space<vmem>>, vector<1x1x16x16xf32>
    %363 = vector.shape_cast %362 : vector<1x1x16x16xf32> to vector<16x16xf32>
    %364 = vector.broadcast %361 : f32 to vector<16x16xf32>
    %365 = arith.mulf %364, %363 : vector<16x16xf32>
    %366 = arith.addf %360, %365 : vector<16x16xf32>
    %c61 = arith.constant 61 : index
    %367 = memref.load %arg2[%c61] : memref<98xf32, #tpu.memory_space<smem>>
    %c0_244 = arith.constant 0 : index
    %c1_245 = arith.constant 1 : index
    %c1_246 = arith.constant 1 : index
    %c5_247 = arith.constant 5 : index
    %368 = vector.load %arg1[%c0_244, %c1_245, %c1_246, %c5_247] : memref<1x2x22x22xf32, #tpu.memory_space<vmem>>, vector<1x1x16x16xf32>
    %369 = vector.shape_cast %368 : vector<1x1x16x16xf32> to vector<16x16xf32>
    %370 = vector.broadcast %367 : f32 to vector<16x16xf32>
    %371 = arith.mulf %370, %369 : vector<16x16xf32>
    %372 = arith.addf %366, %371 : vector<16x16xf32>
    %c62 = arith.constant 62 : index
    %373 = memref.load %arg2[%c62] : memref<98xf32, #tpu.memory_space<smem>>
    %c0_248 = arith.constant 0 : index
    %c1_249 = arith.constant 1 : index
    %c1_250 = arith.constant 1 : index
    %c6_251 = arith.constant 6 : index
    %374 = vector.load %arg1[%c0_248, %c1_249, %c1_250, %c6_251] : memref<1x2x22x22xf32, #tpu.memory_space<vmem>>, vector<1x1x16x16xf32>
    %375 = vector.shape_cast %374 : vector<1x1x16x16xf32> to vector<16x16xf32>
    %376 = vector.broadcast %373 : f32 to vector<16x16xf32>
    %377 = arith.mulf %376, %375 : vector<16x16xf32>
    %378 = arith.addf %372, %377 : vector<16x16xf32>
    %c63 = arith.constant 63 : index
    %379 = memref.load %arg2[%c63] : memref<98xf32, #tpu.memory_space<smem>>
    %c0_252 = arith.constant 0 : index
    %c1_253 = arith.constant 1 : index
    %c2_254 = arith.constant 2 : index
    %c0_255 = arith.constant 0 : index
    %380 = vector.load %arg1[%c0_252, %c1_253, %c2_254, %c0_255] : memref<1x2x22x22xf32, #tpu.memory_space<vmem>>, vector<1x1x16x16xf32>
    %381 = vector.shape_cast %380 : vector<1x1x16x16xf32> to vector<16x16xf32>
    %382 = vector.broadcast %379 : f32 to vector<16x16xf32>
    %383 = arith.mulf %382, %381 : vector<16x16xf32>
    %384 = arith.addf %378, %383 : vector<16x16xf32>
    %c64 = arith.constant 64 : index
    %385 = memref.load %arg2[%c64] : memref<98xf32, #tpu.memory_space<smem>>
    %c0_256 = arith.constant 0 : index
    %c1_257 = arith.constant 1 : index
    %c2_258 = arith.constant 2 : index
    %c1_259 = arith.constant 1 : index
    %386 = vector.load %arg1[%c0_256, %c1_257, %c2_258, %c1_259] : memref<1x2x22x22xf32, #tpu.memory_space<vmem>>, vector<1x1x16x16xf32>
    %387 = vector.shape_cast %386 : vector<1x1x16x16xf32> to vector<16x16xf32>
    %388 = vector.broadcast %385 : f32 to vector<16x16xf32>
    %389 = arith.mulf %388, %387 : vector<16x16xf32>
    %390 = arith.addf %384, %389 : vector<16x16xf32>
    %c65 = arith.constant 65 : index
    %391 = memref.load %arg2[%c65] : memref<98xf32, #tpu.memory_space<smem>>
    %c0_260 = arith.constant 0 : index
    %c1_261 = arith.constant 1 : index
    %c2_262 = arith.constant 2 : index
    %c2_263 = arith.constant 2 : index
    %392 = vector.load %arg1[%c0_260, %c1_261, %c2_262, %c2_263] : memref<1x2x22x22xf32, #tpu.memory_space<vmem>>, vector<1x1x16x16xf32>
    %393 = vector.shape_cast %392 : vector<1x1x16x16xf32> to vector<16x16xf32>
    %394 = vector.broadcast %391 : f32 to vector<16x16xf32>
    %395 = arith.mulf %394, %393 : vector<16x16xf32>
    %396 = arith.addf %390, %395 : vector<16x16xf32>
    %c66 = arith.constant 66 : index
    %397 = memref.load %arg2[%c66] : memref<98xf32, #tpu.memory_space<smem>>
    %c0_264 = arith.constant 0 : index
    %c1_265 = arith.constant 1 : index
    %c2_266 = arith.constant 2 : index
    %c3_267 = arith.constant 3 : index
    %398 = vector.load %arg1[%c0_264, %c1_265, %c2_266, %c3_267] : memref<1x2x22x22xf32, #tpu.memory_space<vmem>>, vector<1x1x16x16xf32>
    %399 = vector.shape_cast %398 : vector<1x1x16x16xf32> to vector<16x16xf32>
    %400 = vector.broadcast %397 : f32 to vector<16x16xf32>
    %401 = arith.mulf %400, %399 : vector<16x16xf32>
    %402 = arith.addf %396, %401 : vector<16x16xf32>
    %c67 = arith.constant 67 : index
    %403 = memref.load %arg2[%c67] : memref<98xf32, #tpu.memory_space<smem>>
    %c0_268 = arith.constant 0 : index
    %c1_269 = arith.constant 1 : index
    %c2_270 = arith.constant 2 : index
    %c4_271 = arith.constant 4 : index
    %404 = vector.load %arg1[%c0_268, %c1_269, %c2_270, %c4_271] : memref<1x2x22x22xf32, #tpu.memory_space<vmem>>, vector<1x1x16x16xf32>
    %405 = vector.shape_cast %404 : vector<1x1x16x16xf32> to vector<16x16xf32>
    %406 = vector.broadcast %403 : f32 to vector<16x16xf32>
    %407 = arith.mulf %406, %405 : vector<16x16xf32>
    %408 = arith.addf %402, %407 : vector<16x16xf32>
    %c68 = arith.constant 68 : index
    %409 = memref.load %arg2[%c68] : memref<98xf32, #tpu.memory_space<smem>>
    %c0_272 = arith.constant 0 : index
    %c1_273 = arith.constant 1 : index
    %c2_274 = arith.constant 2 : index
    %c5_275 = arith.constant 5 : index
    %410 = vector.load %arg1[%c0_272, %c1_273, %c2_274, %c5_275] : memref<1x2x22x22xf32, #tpu.memory_space<vmem>>, vector<1x1x16x16xf32>
    %411 = vector.shape_cast %410 : vector<1x1x16x16xf32> to vector<16x16xf32>
    %412 = vector.broadcast %409 : f32 to vector<16x16xf32>
    %413 = arith.mulf %412, %411 : vector<16x16xf32>
    %414 = arith.addf %408, %413 : vector<16x16xf32>
    %c69 = arith.constant 69 : index
    %415 = memref.load %arg2[%c69] : memref<98xf32, #tpu.memory_space<smem>>
    %c0_276 = arith.constant 0 : index
    %c1_277 = arith.constant 1 : index
    %c2_278 = arith.constant 2 : index
    %c6_279 = arith.constant 6 : index
    %416 = vector.load %arg1[%c0_276, %c1_277, %c2_278, %c6_279] : memref<1x2x22x22xf32, #tpu.memory_space<vmem>>, vector<1x1x16x16xf32>
    %417 = vector.shape_cast %416 : vector<1x1x16x16xf32> to vector<16x16xf32>
    %418 = vector.broadcast %415 : f32 to vector<16x16xf32>
    %419 = arith.mulf %418, %417 : vector<16x16xf32>
    %420 = arith.addf %414, %419 : vector<16x16xf32>
    %c70 = arith.constant 70 : index
    %421 = memref.load %arg2[%c70] : memref<98xf32, #tpu.memory_space<smem>>
    %c0_280 = arith.constant 0 : index
    %c1_281 = arith.constant 1 : index
    %c3_282 = arith.constant 3 : index
    %c0_283 = arith.constant 0 : index
    %422 = vector.load %arg1[%c0_280, %c1_281, %c3_282, %c0_283] : memref<1x2x22x22xf32, #tpu.memory_space<vmem>>, vector<1x1x16x16xf32>
    %423 = vector.shape_cast %422 : vector<1x1x16x16xf32> to vector<16x16xf32>
    %424 = vector.broadcast %421 : f32 to vector<16x16xf32>
    %425 = arith.mulf %424, %423 : vector<16x16xf32>
    %426 = arith.addf %420, %425 : vector<16x16xf32>
    %c71 = arith.constant 71 : index
    %427 = memref.load %arg2[%c71] : memref<98xf32, #tpu.memory_space<smem>>
    %c0_284 = arith.constant 0 : index
    %c1_285 = arith.constant 1 : index
    %c3_286 = arith.constant 3 : index
    %c1_287 = arith.constant 1 : index
    %428 = vector.load %arg1[%c0_284, %c1_285, %c3_286, %c1_287] : memref<1x2x22x22xf32, #tpu.memory_space<vmem>>, vector<1x1x16x16xf32>
    %429 = vector.shape_cast %428 : vector<1x1x16x16xf32> to vector<16x16xf32>
    %430 = vector.broadcast %427 : f32 to vector<16x16xf32>
    %431 = arith.mulf %430, %429 : vector<16x16xf32>
    %432 = arith.addf %426, %431 : vector<16x16xf32>
    %c72 = arith.constant 72 : index
    %433 = memref.load %arg2[%c72] : memref<98xf32, #tpu.memory_space<smem>>
    %c0_288 = arith.constant 0 : index
    %c1_289 = arith.constant 1 : index
    %c3_290 = arith.constant 3 : index
    %c2_291 = arith.constant 2 : index
    %434 = vector.load %arg1[%c0_288, %c1_289, %c3_290, %c2_291] : memref<1x2x22x22xf32, #tpu.memory_space<vmem>>, vector<1x1x16x16xf32>
    %435 = vector.shape_cast %434 : vector<1x1x16x16xf32> to vector<16x16xf32>
    %436 = vector.broadcast %433 : f32 to vector<16x16xf32>
    %437 = arith.mulf %436, %435 : vector<16x16xf32>
    %438 = arith.addf %432, %437 : vector<16x16xf32>
    %c73 = arith.constant 73 : index
    %439 = memref.load %arg2[%c73] : memref<98xf32, #tpu.memory_space<smem>>
    %c0_292 = arith.constant 0 : index
    %c1_293 = arith.constant 1 : index
    %c3_294 = arith.constant 3 : index
    %c3_295 = arith.constant 3 : index
    %440 = vector.load %arg1[%c0_292, %c1_293, %c3_294, %c3_295] : memref<1x2x22x22xf32, #tpu.memory_space<vmem>>, vector<1x1x16x16xf32>
    %441 = vector.shape_cast %440 : vector<1x1x16x16xf32> to vector<16x16xf32>
    %442 = vector.broadcast %439 : f32 to vector<16x16xf32>
    %443 = arith.mulf %442, %441 : vector<16x16xf32>
    %444 = arith.addf %438, %443 : vector<16x16xf32>
    %c74 = arith.constant 74 : index
    %445 = memref.load %arg2[%c74] : memref<98xf32, #tpu.memory_space<smem>>
    %c0_296 = arith.constant 0 : index
    %c1_297 = arith.constant 1 : index
    %c3_298 = arith.constant 3 : index
    %c4_299 = arith.constant 4 : index
    %446 = vector.load %arg1[%c0_296, %c1_297, %c3_298, %c4_299] : memref<1x2x22x22xf32, #tpu.memory_space<vmem>>, vector<1x1x16x16xf32>
    %447 = vector.shape_cast %446 : vector<1x1x16x16xf32> to vector<16x16xf32>
    %448 = vector.broadcast %445 : f32 to vector<16x16xf32>
    %449 = arith.mulf %448, %447 : vector<16x16xf32>
    %450 = arith.addf %444, %449 : vector<16x16xf32>
    %c75 = arith.constant 75 : index
    %451 = memref.load %arg2[%c75] : memref<98xf32, #tpu.memory_space<smem>>
    %c0_300 = arith.constant 0 : index
    %c1_301 = arith.constant 1 : index
    %c3_302 = arith.constant 3 : index
    %c5_303 = arith.constant 5 : index
    %452 = vector.load %arg1[%c0_300, %c1_301, %c3_302, %c5_303] : memref<1x2x22x22xf32, #tpu.memory_space<vmem>>, vector<1x1x16x16xf32>
    %453 = vector.shape_cast %452 : vector<1x1x16x16xf32> to vector<16x16xf32>
    %454 = vector.broadcast %451 : f32 to vector<16x16xf32>
    %455 = arith.mulf %454, %453 : vector<16x16xf32>
    %456 = arith.addf %450, %455 : vector<16x16xf32>
    %c76 = arith.constant 76 : index
    %457 = memref.load %arg2[%c76] : memref<98xf32, #tpu.memory_space<smem>>
    %c0_304 = arith.constant 0 : index
    %c1_305 = arith.constant 1 : index
    %c3_306 = arith.constant 3 : index
    %c6_307 = arith.constant 6 : index
    %458 = vector.load %arg1[%c0_304, %c1_305, %c3_306, %c6_307] : memref<1x2x22x22xf32, #tpu.memory_space<vmem>>, vector<1x1x16x16xf32>
    %459 = vector.shape_cast %458 : vector<1x1x16x16xf32> to vector<16x16xf32>
    %460 = vector.broadcast %457 : f32 to vector<16x16xf32>
    %461 = arith.mulf %460, %459 : vector<16x16xf32>
    %462 = arith.addf %456, %461 : vector<16x16xf32>
    %c77 = arith.constant 77 : index
    %463 = memref.load %arg2[%c77] : memref<98xf32, #tpu.memory_space<smem>>
    %c0_308 = arith.constant 0 : index
    %c1_309 = arith.constant 1 : index
    %c4_310 = arith.constant 4 : index
    %c0_311 = arith.constant 0 : index
    %464 = vector.load %arg1[%c0_308, %c1_309, %c4_310, %c0_311] : memref<1x2x22x22xf32, #tpu.memory_space<vmem>>, vector<1x1x16x16xf32>
    %465 = vector.shape_cast %464 : vector<1x1x16x16xf32> to vector<16x16xf32>
    %466 = vector.broadcast %463 : f32 to vector<16x16xf32>
    %467 = arith.mulf %466, %465 : vector<16x16xf32>
    %468 = arith.addf %462, %467 : vector<16x16xf32>
    %c78 = arith.constant 78 : index
    %469 = memref.load %arg2[%c78] : memref<98xf32, #tpu.memory_space<smem>>
    %c0_312 = arith.constant 0 : index
    %c1_313 = arith.constant 1 : index
    %c4_314 = arith.constant 4 : index
    %c1_315 = arith.constant 1 : index
    %470 = vector.load %arg1[%c0_312, %c1_313, %c4_314, %c1_315] : memref<1x2x22x22xf32, #tpu.memory_space<vmem>>, vector<1x1x16x16xf32>
    %471 = vector.shape_cast %470 : vector<1x1x16x16xf32> to vector<16x16xf32>
    %472 = vector.broadcast %469 : f32 to vector<16x16xf32>
    %473 = arith.mulf %472, %471 : vector<16x16xf32>
    %474 = arith.addf %468, %473 : vector<16x16xf32>
    %c79 = arith.constant 79 : index
    %475 = memref.load %arg2[%c79] : memref<98xf32, #tpu.memory_space<smem>>
    %c0_316 = arith.constant 0 : index
    %c1_317 = arith.constant 1 : index
    %c4_318 = arith.constant 4 : index
    %c2_319 = arith.constant 2 : index
    %476 = vector.load %arg1[%c0_316, %c1_317, %c4_318, %c2_319] : memref<1x2x22x22xf32, #tpu.memory_space<vmem>>, vector<1x1x16x16xf32>
    %477 = vector.shape_cast %476 : vector<1x1x16x16xf32> to vector<16x16xf32>
    %478 = vector.broadcast %475 : f32 to vector<16x16xf32>
    %479 = arith.mulf %478, %477 : vector<16x16xf32>
    %480 = arith.addf %474, %479 : vector<16x16xf32>
    %c80 = arith.constant 80 : index
    %481 = memref.load %arg2[%c80] : memref<98xf32, #tpu.memory_space<smem>>
    %c0_320 = arith.constant 0 : index
    %c1_321 = arith.constant 1 : index
    %c4_322 = arith.constant 4 : index
    %c3_323 = arith.constant 3 : index
    %482 = vector.load %arg1[%c0_320, %c1_321, %c4_322, %c3_323] : memref<1x2x22x22xf32, #tpu.memory_space<vmem>>, vector<1x1x16x16xf32>
    %483 = vector.shape_cast %482 : vector<1x1x16x16xf32> to vector<16x16xf32>
    %484 = vector.broadcast %481 : f32 to vector<16x16xf32>
    %485 = arith.mulf %484, %483 : vector<16x16xf32>
    %486 = arith.addf %480, %485 : vector<16x16xf32>
    %c81 = arith.constant 81 : index
    %487 = memref.load %arg2[%c81] : memref<98xf32, #tpu.memory_space<smem>>
    %c0_324 = arith.constant 0 : index
    %c1_325 = arith.constant 1 : index
    %c4_326 = arith.constant 4 : index
    %c4_327 = arith.constant 4 : index
    %488 = vector.load %arg1[%c0_324, %c1_325, %c4_326, %c4_327] : memref<1x2x22x22xf32, #tpu.memory_space<vmem>>, vector<1x1x16x16xf32>
    %489 = vector.shape_cast %488 : vector<1x1x16x16xf32> to vector<16x16xf32>
    %490 = vector.broadcast %487 : f32 to vector<16x16xf32>
    %491 = arith.mulf %490, %489 : vector<16x16xf32>
    %492 = arith.addf %486, %491 : vector<16x16xf32>
    %c82 = arith.constant 82 : index
    %493 = memref.load %arg2[%c82] : memref<98xf32, #tpu.memory_space<smem>>
    %c0_328 = arith.constant 0 : index
    %c1_329 = arith.constant 1 : index
    %c4_330 = arith.constant 4 : index
    %c5_331 = arith.constant 5 : index
    %494 = vector.load %arg1[%c0_328, %c1_329, %c4_330, %c5_331] : memref<1x2x22x22xf32, #tpu.memory_space<vmem>>, vector<1x1x16x16xf32>
    %495 = vector.shape_cast %494 : vector<1x1x16x16xf32> to vector<16x16xf32>
    %496 = vector.broadcast %493 : f32 to vector<16x16xf32>
    %497 = arith.mulf %496, %495 : vector<16x16xf32>
    %498 = arith.addf %492, %497 : vector<16x16xf32>
    %c83 = arith.constant 83 : index
    %499 = memref.load %arg2[%c83] : memref<98xf32, #tpu.memory_space<smem>>
    %c0_332 = arith.constant 0 : index
    %c1_333 = arith.constant 1 : index
    %c4_334 = arith.constant 4 : index
    %c6_335 = arith.constant 6 : index
    %500 = vector.load %arg1[%c0_332, %c1_333, %c4_334, %c6_335] : memref<1x2x22x22xf32, #tpu.memory_space<vmem>>, vector<1x1x16x16xf32>
    %501 = vector.shape_cast %500 : vector<1x1x16x16xf32> to vector<16x16xf32>
    %502 = vector.broadcast %499 : f32 to vector<16x16xf32>
    %503 = arith.mulf %502, %501 : vector<16x16xf32>
    %504 = arith.addf %498, %503 : vector<16x16xf32>
    %c84 = arith.constant 84 : index
    %505 = memref.load %arg2[%c84] : memref<98xf32, #tpu.memory_space<smem>>
    %c0_336 = arith.constant 0 : index
    %c1_337 = arith.constant 1 : index
    %c5_338 = arith.constant 5 : index
    %c0_339 = arith.constant 0 : index
    %506 = vector.load %arg1[%c0_336, %c1_337, %c5_338, %c0_339] : memref<1x2x22x22xf32, #tpu.memory_space<vmem>>, vector<1x1x16x16xf32>
    %507 = vector.shape_cast %506 : vector<1x1x16x16xf32> to vector<16x16xf32>
    %508 = vector.broadcast %505 : f32 to vector<16x16xf32>
    %509 = arith.mulf %508, %507 : vector<16x16xf32>
    %510 = arith.addf %504, %509 : vector<16x16xf32>
    %c85 = arith.constant 85 : index
    %511 = memref.load %arg2[%c85] : memref<98xf32, #tpu.memory_space<smem>>
    %c0_340 = arith.constant 0 : index
    %c1_341 = arith.constant 1 : index
    %c5_342 = arith.constant 5 : index
    %c1_343 = arith.constant 1 : index
    %512 = vector.load %arg1[%c0_340, %c1_341, %c5_342, %c1_343] : memref<1x2x22x22xf32, #tpu.memory_space<vmem>>, vector<1x1x16x16xf32>
    %513 = vector.shape_cast %512 : vector<1x1x16x16xf32> to vector<16x16xf32>
    %514 = vector.broadcast %511 : f32 to vector<16x16xf32>
    %515 = arith.mulf %514, %513 : vector<16x16xf32>
    %516 = arith.addf %510, %515 : vector<16x16xf32>
    %c86 = arith.constant 86 : index
    %517 = memref.load %arg2[%c86] : memref<98xf32, #tpu.memory_space<smem>>
    %c0_344 = arith.constant 0 : index
    %c1_345 = arith.constant 1 : index
    %c5_346 = arith.constant 5 : index
    %c2_347 = arith.constant 2 : index
    %518 = vector.load %arg1[%c0_344, %c1_345, %c5_346, %c2_347] : memref<1x2x22x22xf32, #tpu.memory_space<vmem>>, vector<1x1x16x16xf32>
    %519 = vector.shape_cast %518 : vector<1x1x16x16xf32> to vector<16x16xf32>
    %520 = vector.broadcast %517 : f32 to vector<16x16xf32>
    %521 = arith.mulf %520, %519 : vector<16x16xf32>
    %522 = arith.addf %516, %521 : vector<16x16xf32>
    %c87 = arith.constant 87 : index
    %523 = memref.load %arg2[%c87] : memref<98xf32, #tpu.memory_space<smem>>
    %c0_348 = arith.constant 0 : index
    %c1_349 = arith.constant 1 : index
    %c5_350 = arith.constant 5 : index
    %c3_351 = arith.constant 3 : index
    %524 = vector.load %arg1[%c0_348, %c1_349, %c5_350, %c3_351] : memref<1x2x22x22xf32, #tpu.memory_space<vmem>>, vector<1x1x16x16xf32>
    %525 = vector.shape_cast %524 : vector<1x1x16x16xf32> to vector<16x16xf32>
    %526 = vector.broadcast %523 : f32 to vector<16x16xf32>
    %527 = arith.mulf %526, %525 : vector<16x16xf32>
    %528 = arith.addf %522, %527 : vector<16x16xf32>
    %c88 = arith.constant 88 : index
    %529 = memref.load %arg2[%c88] : memref<98xf32, #tpu.memory_space<smem>>
    %c0_352 = arith.constant 0 : index
    %c1_353 = arith.constant 1 : index
    %c5_354 = arith.constant 5 : index
    %c4_355 = arith.constant 4 : index
    %530 = vector.load %arg1[%c0_352, %c1_353, %c5_354, %c4_355] : memref<1x2x22x22xf32, #tpu.memory_space<vmem>>, vector<1x1x16x16xf32>
    %531 = vector.shape_cast %530 : vector<1x1x16x16xf32> to vector<16x16xf32>
    %532 = vector.broadcast %529 : f32 to vector<16x16xf32>
    %533 = arith.mulf %532, %531 : vector<16x16xf32>
    %534 = arith.addf %528, %533 : vector<16x16xf32>
    %c89 = arith.constant 89 : index
    %535 = memref.load %arg2[%c89] : memref<98xf32, #tpu.memory_space<smem>>
    %c0_356 = arith.constant 0 : index
    %c1_357 = arith.constant 1 : index
    %c5_358 = arith.constant 5 : index
    %c5_359 = arith.constant 5 : index
    %536 = vector.load %arg1[%c0_356, %c1_357, %c5_358, %c5_359] : memref<1x2x22x22xf32, #tpu.memory_space<vmem>>, vector<1x1x16x16xf32>
    %537 = vector.shape_cast %536 : vector<1x1x16x16xf32> to vector<16x16xf32>
    %538 = vector.broadcast %535 : f32 to vector<16x16xf32>
    %539 = arith.mulf %538, %537 : vector<16x16xf32>
    %540 = arith.addf %534, %539 : vector<16x16xf32>
    %c90 = arith.constant 90 : index
    %541 = memref.load %arg2[%c90] : memref<98xf32, #tpu.memory_space<smem>>
    %c0_360 = arith.constant 0 : index
    %c1_361 = arith.constant 1 : index
    %c5_362 = arith.constant 5 : index
    %c6_363 = arith.constant 6 : index
    %542 = vector.load %arg1[%c0_360, %c1_361, %c5_362, %c6_363] : memref<1x2x22x22xf32, #tpu.memory_space<vmem>>, vector<1x1x16x16xf32>
    %543 = vector.shape_cast %542 : vector<1x1x16x16xf32> to vector<16x16xf32>
    %544 = vector.broadcast %541 : f32 to vector<16x16xf32>
    %545 = arith.mulf %544, %543 : vector<16x16xf32>
    %546 = arith.addf %540, %545 : vector<16x16xf32>
    %c91 = arith.constant 91 : index
    %547 = memref.load %arg2[%c91] : memref<98xf32, #tpu.memory_space<smem>>
    %c0_364 = arith.constant 0 : index
    %c1_365 = arith.constant 1 : index
    %c6_366 = arith.constant 6 : index
    %c0_367 = arith.constant 0 : index
    %548 = vector.load %arg1[%c0_364, %c1_365, %c6_366, %c0_367] : memref<1x2x22x22xf32, #tpu.memory_space<vmem>>, vector<1x1x16x16xf32>
    %549 = vector.shape_cast %548 : vector<1x1x16x16xf32> to vector<16x16xf32>
    %550 = vector.broadcast %547 : f32 to vector<16x16xf32>
    %551 = arith.mulf %550, %549 : vector<16x16xf32>
    %552 = arith.addf %546, %551 : vector<16x16xf32>
    %c92 = arith.constant 92 : index
    %553 = memref.load %arg2[%c92] : memref<98xf32, #tpu.memory_space<smem>>
    %c0_368 = arith.constant 0 : index
    %c1_369 = arith.constant 1 : index
    %c6_370 = arith.constant 6 : index
    %c1_371 = arith.constant 1 : index
    %554 = vector.load %arg1[%c0_368, %c1_369, %c6_370, %c1_371] : memref<1x2x22x22xf32, #tpu.memory_space<vmem>>, vector<1x1x16x16xf32>
    %555 = vector.shape_cast %554 : vector<1x1x16x16xf32> to vector<16x16xf32>
    %556 = vector.broadcast %553 : f32 to vector<16x16xf32>
    %557 = arith.mulf %556, %555 : vector<16x16xf32>
    %558 = arith.addf %552, %557 : vector<16x16xf32>
    %c93 = arith.constant 93 : index
    %559 = memref.load %arg2[%c93] : memref<98xf32, #tpu.memory_space<smem>>
    %c0_372 = arith.constant 0 : index
    %c1_373 = arith.constant 1 : index
    %c6_374 = arith.constant 6 : index
    %c2_375 = arith.constant 2 : index
    %560 = vector.load %arg1[%c0_372, %c1_373, %c6_374, %c2_375] : memref<1x2x22x22xf32, #tpu.memory_space<vmem>>, vector<1x1x16x16xf32>
    %561 = vector.shape_cast %560 : vector<1x1x16x16xf32> to vector<16x16xf32>
    %562 = vector.broadcast %559 : f32 to vector<16x16xf32>
    %563 = arith.mulf %562, %561 : vector<16x16xf32>
    %564 = arith.addf %558, %563 : vector<16x16xf32>
    %c94 = arith.constant 94 : index
    %565 = memref.load %arg2[%c94] : memref<98xf32, #tpu.memory_space<smem>>
    %c0_376 = arith.constant 0 : index
    %c1_377 = arith.constant 1 : index
    %c6_378 = arith.constant 6 : index
    %c3_379 = arith.constant 3 : index
    %566 = vector.load %arg1[%c0_376, %c1_377, %c6_378, %c3_379] : memref<1x2x22x22xf32, #tpu.memory_space<vmem>>, vector<1x1x16x16xf32>
    %567 = vector.shape_cast %566 : vector<1x1x16x16xf32> to vector<16x16xf32>
    %568 = vector.broadcast %565 : f32 to vector<16x16xf32>
    %569 = arith.mulf %568, %567 : vector<16x16xf32>
    %570 = arith.addf %564, %569 : vector<16x16xf32>
    %c95 = arith.constant 95 : index
    %571 = memref.load %arg2[%c95] : memref<98xf32, #tpu.memory_space<smem>>
    %c0_380 = arith.constant 0 : index
    %c1_381 = arith.constant 1 : index
    %c6_382 = arith.constant 6 : index
    %c4_383 = arith.constant 4 : index
    %572 = vector.load %arg1[%c0_380, %c1_381, %c6_382, %c4_383] : memref<1x2x22x22xf32, #tpu.memory_space<vmem>>, vector<1x1x16x16xf32>
    %573 = vector.shape_cast %572 : vector<1x1x16x16xf32> to vector<16x16xf32>
    %574 = vector.broadcast %571 : f32 to vector<16x16xf32>
    %575 = arith.mulf %574, %573 : vector<16x16xf32>
    %576 = arith.addf %570, %575 : vector<16x16xf32>
    %c96 = arith.constant 96 : index
    %577 = memref.load %arg2[%c96] : memref<98xf32, #tpu.memory_space<smem>>
    %c0_384 = arith.constant 0 : index
    %c1_385 = arith.constant 1 : index
    %c6_386 = arith.constant 6 : index
    %c5_387 = arith.constant 5 : index
    %578 = vector.load %arg1[%c0_384, %c1_385, %c6_386, %c5_387] : memref<1x2x22x22xf32, #tpu.memory_space<vmem>>, vector<1x1x16x16xf32>
    %579 = vector.shape_cast %578 : vector<1x1x16x16xf32> to vector<16x16xf32>
    %580 = vector.broadcast %577 : f32 to vector<16x16xf32>
    %581 = arith.mulf %580, %579 : vector<16x16xf32>
    %582 = arith.addf %576, %581 : vector<16x16xf32>
    %c97 = arith.constant 97 : index
    %583 = memref.load %arg2[%c97] : memref<98xf32, #tpu.memory_space<smem>>
    %c0_388 = arith.constant 0 : index
    %c1_389 = arith.constant 1 : index
    %c6_390 = arith.constant 6 : index
    %c6_391 = arith.constant 6 : index
    %584 = vector.load %arg1[%c0_388, %c1_389, %c6_390, %c6_391] : memref<1x2x22x22xf32, #tpu.memory_space<vmem>>, vector<1x1x16x16xf32>
    %585 = vector.shape_cast %584 : vector<1x1x16x16xf32> to vector<16x16xf32>
    %586 = vector.broadcast %583 : f32 to vector<16x16xf32>
    %587 = arith.mulf %586, %585 : vector<16x16xf32>
    %588 = arith.addf %582, %587 : vector<16x16xf32>
    %589 = arith.negf %588 : vector<16x16xf32>
    %590 = math.exp %589 : vector<16x16xf32>
    %cst_392 = arith.constant 1.000000e+00 : f32
    %591 = vector.broadcast %cst_392 : f32 to vector<16x16xf32>
    %592 = arith.addf %591, %590 : vector<16x16xf32>
    %593 = arith.divf %591, %592 : vector<16x16xf32>
    %c0_393 = arith.constant 0 : index
    %c0_394 = arith.constant 0 : index
    %c0_395 = arith.constant 0 : index
    %594 = vector.load %arg3[%c0_393, %c0_394, %c0_395] : memref<1x16x16xf32, #tpu.memory_space<vmem>>, vector<1x16x16xf32>
    %595 = vector.shape_cast %594 : vector<1x16x16xf32> to vector<16x16xf32>
    %596 = vector.shape_cast %593 : vector<16x16xf32> to vector<1x16x16xf32>
    tpu.vector_store %arg3[%c0_393, %c0_394, %c0_395], %596 {strides = array<i32>} : memref<1x16x16xf32, #tpu.memory_space<vmem>>, vector<1x16x16xf32>,
    return
  }
  func.func @transform_0(%arg0: i32) -> (i32, i32, i32, i32) {
    %c0_i32 = arith.constant 0 : i32
    %c0_i32_0 = arith.constant 0 : i32
    %c0_i32_1 = arith.constant 0 : i32
    %c0_i32_2 = arith.constant 0 : i32
    return %arg0, %c0_i32, %c0_i32_0, %c0_i32_1 : i32, i32, i32, i32
  }
  func.func @transform_1(%arg0: i32) -> i32 {
    %c0_i32 = arith.constant 0 : i32
    %c0_i32_0 = arith.constant 0 : i32
    return %c0_i32 : i32
  }
  func.func @transform_2(%arg0: i32) -> (i32, i32, i32) {
    %c0_i32 = arith.constant 0 : i32
    %c0_i32_0 = arith.constant 0 : i32
    %c0_i32_1 = arith.constant 0 : i32
    return %arg0, %c0_i32, %c0_i32_0 : i32, i32, i32
  }
}

</mosaic_0001>

<llo_original>
// kernel: cbam_forward.5
$region0: #{cbam_forward.5}
  #allocation0 [shape = 'u32[]', space=smem, size = 0x4, offset = 0x4, fixed_abs, tag = 'smem constant byte address 0x4 - core index']
  #allocation1 [shape = 'u32[72,128]{1,0:T(1,128)}', space=vmem, size = 0x9000, scoped, tag = 'internal scratch']
  %s0 = inlined_call_operand.vmem [shape: f32[2,64,256], index: 0, kind: input, shape index: {}]
  %s1 = inlined_call_operand.vmem [shape: f32[2,64,1], index: 1, kind: input, shape index: {}]
  %s2 = inlined_call_operand.vmem [shape: f32[2,2,256], index: 2, kind: output, shape index: {}]
  %s3 = sld [smem:[#allocation0]]
  $region41: #{cbam_forward.5} parent=0
    _
  %s5 = ssub.s32 1, %s3
  %s6 = scalar_select 0, %s5, %s3
  loop: start=0, step=1, limit=4
  $region2: #{cbam_forward.5} parent=0 // loop_pre_header
    _
  $region3: #{cbam_forward.5} parent=0 // loop_header
    %s8 = sphi 0, %s12
    %p9 = scmp.ge.s32.totalorder %s8, 4
    %s15 = sphi 0, %s27
    %s16 = sphi 0, %s23
    %s17 = sphi 0, %s15
    %s18 = sphi 0, %s16
    %s19 = sphi 0, %s17
    %s20 = sphi 0, %s18
    %s32 = sphi 0, %s34
    %s35 = sphi 0, %s32
    %s36 = sphi 0, %s35
    %s52 = sphi 0, %s36
    %s58 = sphi 0, %s60
    %s61 = sphi 0, %s58
    %s62 = sphi 0, %s61
    %s78 = sphi 0, %s62
    %s86 = sphi 0, %s88
    %s89 = sphi 0, %s86
    %s90 = sphi 0, %s89
    %s106 = sphi 0, %s90
  $region4: #{cbam_forward.5} parent=0 // loop_header_branch
    %11 = sbr.rel (%p9) target = $region8
  $region5: #{cbam_forward.5} parent=0 // loop_body
    %s13 = ssub.s32 %s8, 1
    %s14 = ssub.s32 %s8, 2
    %s21 = sadd.s32 1, %s16
    %p22 = scmp.ge.s32.totalorder %s21, 1
    %s23 = scalar_select %p22, 0, %s21
    %s24 = sadd.s32 1, %s15
    %s25 = scalar_select %p22, %s24, %s15
    %p26 = scmp.ge.s32.totalorder %s25, 2
    %s27 = scalar_select %p26, 0, %s25
    %s28 = ssub.s32 %s15, %s27
    %s29 = ssub.s32 %s16, %s23
    %s30 = sor.u32 %s28, %s29
    %p31 = scmp.eq.s32.totalorder %s30, 0
    %s33 = sadd.s32 %s32, 1
    %s34 = scalar_select %p31, %s32, %s33
    %p37 = pneg %p31
    %p38 = scmp.eq.s32.totalorder %s8, 1
    %p39 = por %p37, %p38
    %p40 = scmp.ne.s32.totalorder %s32, %s35
    %p41 = scmp.eq.s32.totalorder %s8, 0
    %p42 = por %p40, %p41
    %p43 = scmp.ne.s32.totalorder %s32, %s35
    %p44 = scmp.eq.s32.totalorder %s13, 1
    %p45 = por %p43, %p44
    %p46 = scmp.ne.s32.totalorder %s35, %s36
    %p47 = scmp.eq.s32.totalorder %s13, 0
    %p48 = por %p46, %p47
    %p49 = scmp.ne.s32.totalorder %s35, %s36
    %p50 = scmp.eq.s32.totalorder %s14, 1
    %p51 = por %p49, %p50
    %p53 = scmp.ne.s32.totalorder %s36, %s52
    %p54 = scmp.eq.s32.totalorder %s14, 0
    %p55 = por %p53, %p54
    %s56 = ssub.s32 %s15, %s27
    %p57 = scmp.eq.s32.totalorder %s56, 0
    %s59 = sadd.s32 %s58, 1
    %s60 = scalar_select %p57, %s58, %s59
    %p63 = pneg %p57
    %p64 = scmp.eq.s32.totalorder %s8, 1
    %p65 = por %p63, %p64
    %p66 = scmp.ne.s32.totalorder %s58, %s61
    %p67 = scmp.eq.s32.totalorder %s8, 0
    %p68 = por %p66, %p67
    %p69 = scmp.ne.s32.totalorder %s58, %s61
    %p70 = scmp.eq.s32.totalorder %s13, 1
    %p71 = por %p69, %p70
    %p72 = scmp.ne.s32.totalorder %s61, %s62
    %p73 = scmp.eq.s32.totalorder %s13, 0
    %p74 = por %p72, %p73
    %p75 = scmp.ne.s32.totalorder %s61, %s62
    %p76 = scmp.eq.s32.totalorder %s14, 1
    %p77 = por %p75, %p76
    %p79 = scmp.ne.s32.totalorder %s62, %s78
    %p80 = scmp.eq.s32.totalorder %s14, 0
    %p81 = por %p79, %p80
    %s82 = ssub.s32 %s15, %s27
    %s83 = ssub.s32 %s16, %s23
    %s84 = sor.u32 %s82, %s83
    %p85 = scmp.eq.s32.totalorder %s84, 0
    %s87 = sadd.s32 %s86, 1
    %s88 = scalar_select %p85, %s86, %s87
    %p91 = pneg %p85
    %p92 = scmp.eq.s32.totalorder %s8, 1
    %p93 = por %p91, %p92
    %p94 = scmp.ne.s32.totalorder %s86, %s89
    %p95 = scmp.eq.s32.totalorder %s8, 0
    %p96 = por %p94, %p95
    %p97 = scmp.ne.s32.totalorder %s86, %s89
    %p98 = scmp.eq.s32.totalorder %s13, 1
    %p99 = por %p97, %p98
    %p100 = scmp.ne.s32.totalorder %s89, %s90
    %p101 = scmp.eq.s32.totalorder %s13, 0
    %p102 = por %p100, %p101
    %p103 = scmp.ne.s32.totalorder %s89, %s90
    %p104 = scmp.eq.s32.totalorder %s14, 1
    %p105 = por %p103, %p104
    %p107 = scmp.ne.s32.totalorder %s90, %s106
    %p108 = scmp.eq.s32.totalorder %s14, 0
    %p109 = por %p107, %p108
    %p110 = scmp.le.s32.totalorder 1, %s8
    %p111 = scmp.lt.s32.totalorder %s8, 3
    %p112 = pnand %p110, %p111
    %p113 = pneg %p112
    // Predicated region
    $region9: #{cbam_forward.5} parent=5 // pred_check
      _
    $region10: #{cbam_forward.5} parent=5 // pred_check_branch
      %115 = sbr.rel (%p112) target = $region12
    $region11: #{cbam_forward.5} parent=5 // pred_region
      %s116 = ssub.s32 %s8, 1
    $region12: #{cbam_forward.5} parent=5 // pred_fallthru
      _
    %p117 = scmp.lt.s32.totalorder %s8, 2
    // Predicated region
    $region13: #{cbam_forward.5} parent=5 // pred_check
      %p118 = pneg %p117
    $region14: #{cbam_forward.5} parent=5 // pred_check_branch
      %120 = sbr.rel (%p118) target = $region16
    $region15: #{cbam_forward.5} parent=5 // pred_region
      // Predicated region
      $region17: #{cbam_forward.5} parent=15 // pred_check
        %p121 = pneg %p42
      $region18: #{cbam_forward.5} parent=15 // pred_check_branch
        %123 = sbr.rel (%p121) target = $region20
      $region19: #{cbam_forward.5} parent=15 // pred_region
        %s124 = smul.u32 2, %s16
        %p125 = scmp.lt.s32.totalorder %s15, 1
        %s126 = scalar_select %p125, %s15, 1
        %p127 = scmp.lt.s32.totalorder %s124, 1
        %s128 = scalar_select %p127, %s124, 1
        %s129 = smul.addr %s126, 16
        %s130 = sadd.s32 %s128, %s129
        %s131 = smul.addr %s130, 8
        %s132 = scalar_lea.vmem %s0, %s131
        %s133 = smul.u32 2, %s16
      $region20: #{cbam_forward.5} parent=15 // pred_fallthru
        _
      // Predicated region
      $region21: #{cbam_forward.5} parent=15 // pred_check
        %p134 = pneg %p68
      $region22: #{cbam_forward.5} parent=15 // pred_check_branch
        %136 = sbr.rel (%p134) target = $region24
      $region23: #{cbam_forward.5} parent=15 // pred_region
        %p137 = scmp.lt.s32.totalorder %s15, 1
        %s138 = scalar_select %p137, %s15, 1
        %s139 = smul.addr %s138, 8
        %s140 = smul.addr %s139, 8
        %s141 = scalar_lea.vmem %s1, %s140
      $region24: #{cbam_forward.5} parent=15 // pred_fallthru
        _
    $region16: #{cbam_forward.5} parent=5 // pred_fallthru
      _
    %p142 = scmp.le.s32.totalorder 1, %s8
    %p143 = scmp.lt.s32.totalorder %s8, 3
    %p144 = pnand %p142, %p143
    %p145 = pneg %p144
    // Predicated region
    $region25: #{cbam_forward.5} parent=5 // pred_check
      _
    $region26: #{cbam_forward.5} parent=5 // pred_check_branch
      %147 = sbr.rel (%p144) target = $region28
    $region27: #{cbam_forward.5} parent=5 // pred_region
      %s148 = ssub.s32 %s8, 1
      %s149 = smul.u32 2, %s18
      %p150 = scmp.lt.s32.totalorder %s17, 1
      %s151 = scalar_select %p150, %s17, 1
      %p152 = scmp.lt.s32.totalorder %s149, 1
      %s153 = scalar_select %p152, %s149, 1
      %s154 = smul.addr %s151, 16
      %s155 = sadd.s32 %s153, %s154
      %s156 = smul.addr %s155, 8
      %s157 = scalar_lea.vmem %s0, %s156
      %p158 = pneg %p48
      %p159 = pneg %p45
      %p160 = scmp.lt.s32.totalorder %s17, 1
      %s161 = scalar_select %p160, %s17, 1
      %s162 = smul.addr %s161, 8
      %s163 = smul.addr %s162, 8
      %s164 = scalar_lea.vmem %s1, %s163
      %p165 = pneg %p74
      %p166 = pneg %p71
      %p167 = pneg %p102
      %p168 = pneg %p99
      %s169 = smul.u32 2, %s18
      %p170 = scmp.lt.s32.totalorder %s17, 1
      %s171 = scalar_select %p170, %s17, 1
      %p172 = scmp.lt.s32.totalorder %s169, 1
      %s173 = scalar_select %p172, %s169, 1
      %s174 = smul.addr %s171, 2
      %s175 = sadd.s32 %s173, %s174
      %s176 = smul.addr %s175, 2
      %s177 = scalar_lea.vmem %s2, %s176
      %s178 = smul.u32 2, %s18
      %p179 = scmp.lt.s32.totalorder %s17, 1
      %s180 = scalar_select %p179, %s17, 1
      %p181 = scmp.lt.s32.totalorder %s178, 1
      %s182 = scalar_select %p181, %s178, 1
      %s183 = smul.addr %s180, 16
      %s184 = sadd.s32 %s182, %s183
      %s185 = smul.addr %s184, 8
      %s186 = scalar_lea.vmem %s0, %s185
      %s187 = smul.u32 2, %s18
      %p188 = scmp.lt.s32.totalorder %s17, 1
      %s189 = scalar_select %p188, %s17, 1
      %s190 = smul.addr %s189, 8
      %s191 = smul.addr %s190, 8
      %s192 = scalar_lea.vmem %s1, %s191
      %s193 = smul.u32 2, %s18
      %p194 = scmp.lt.s32.totalorder %s17, 1
      %s195 = scalar_select %p194, %s17, 1
      %p196 = scmp.lt.s32.totalorder %s193, 1
      %s197 = scalar_select %p196, %s193, 1
      %s198 = smul.addr %s195, 2
      %s199 = sadd.s32 %s197, %s198
      %s200 = smul.addr %s199, 2
      %s201 = scalar_lea.vmem %s2, %s200
      %s202 = smul.u32 2, %s18
      %v203 = vld [vmem:[%s186] sm:$0xff]
      %v204 = vld [vmem:[%s186 + $0x8] sm:$0xff]
      %v205 = vld [vmem:[%s186 + $0x10] sm:$0xff]
      %v206 = vld [vmem:[%s186 + $0x18] sm:$0xff]
      %v207 = vld [vmem:[%s186 + $0x20] sm:$0xff]
      %v208 = vld [vmem:[%s186 + $0x28] sm:$0xff]
      %v209 = vld [vmem:[%s186 + $0x30] sm:$0xff]
      %v210 = vld [vmem:[%s186 + $0x38] sm:$0xff]
      %v211 = vld [vmem:[%s186 + $0x40] sm:$0xff]
      %v212 = vld [vmem:[%s186 + $0x48] sm:$0xff]
      %v213 = vld [vmem:[%s186 + $0x50] sm:$0xff]
      %v214 = vld [vmem:[%s186 + $0x58] sm:$0xff]
      %v215 = vld [vmem:[%s186 + $0x60] sm:$0xff]
      %v216 = vld [vmem:[%s186 + $0x68] sm:$0xff]
      %v217 = vld [vmem:[%s186 + $0x70] sm:$0xff]
      %v218 = vld [vmem:[%s186 + $0x78] sm:$0xff]
      %v219 = vld [vmem:[%s192] sm:$0xff]
      %v220 = vld [vmem:[%s192 + $0x8] sm:$0xff]
      %v221 = vld [vmem:[%s192 + $0x10] sm:$0xff]
      %v222 = vld [vmem:[%s192 + $0x18] sm:$0xff]
      %v223 = vld [vmem:[%s192 + $0x20] sm:$0xff]
      %v224 = vld [vmem:[%s192 + $0x28] sm:$0xff]
      %v225 = vld [vmem:[%s192 + $0x30] sm:$0xff]
      %v226 = vld [vmem:[%s192 + $0x38] sm:$0xff]
      %228 = vset.pattern.permute.xlu0 0
      %229 = vperm.xlu0 %228, %v219
      %v230 = vpop.permute.xlu0 %229
      %233 = vset.pattern.permute.xlu0 0
      %234 = vperm.xlu0 %233, %v220
      %v235 = vpop.permute.xlu0 %234
      %238 = vset.pattern.permute.xlu0 0
      %239 = vperm.xlu0 %238, %v221
      %v240 = vpop.permute.xlu0 %239
      %243 = vset.pattern.permute.xlu0 0
      %244 = vperm.xlu0 %243, %v222
      %v245 = vpop.permute.xlu0 %244
      %248 = vset.pattern.permute.xlu0 0
      %249 = vperm.xlu0 %248, %v223
      %v250 = vpop.permute.xlu0 %249
      %253 = vset.pattern.permute.xlu0 0
      %254 = vperm.xlu0 %253, %v224
      %v255 = vpop.permute.xlu0 %254
      %258 = vset.pattern.permute.xlu0 0
      %259 = vperm.xlu0 %258, %v225
      %v260 = vpop.permute.xlu0 %259
      %263 = vset.pattern.permute.xlu0 0
      %264 = vperm.xlu0 %263, %v226
      %v265 = vpop.permute.xlu0 %264
      %v267 = vmul.f32 %v203, %v230
      %v268 = vmul.f32 %v204, %v230
      %v269 = vmul.f32 %v205, %v235
      %v270 = vmul.f32 %v206, %v235
      %v271 = vmul.f32 %v207, %v240
      %v272 = vmul.f32 %v208, %v240
      %v273 = vmul.f32 %v209, %v245
      %v274 = vmul.f32 %v210, %v245
      %v275 = vmul.f32 %v211, %v250
      %v276 = vmul.f32 %v212, %v250
      %v277 = vmul.f32 %v213, %v255
      %v278 = vmul.f32 %v214, %v255
      %v279 = vmul.f32 %v215, %v260
      %v280 = vmul.f32 %v216, %v260
      %v281 = vmul.f32 %v217, %v265
      %v282 = vmul.f32 %v218, %v265
      %v283 = vadd.f32 %v267, %v269
      %v284 = vadd.f32 %v283, %v271
      %v285 = vadd.f32 %v284, %v273
      %v286 = vadd.f32 %v285, %v275
      %v287 = vadd.f32 %v286, %v277
      %v288 = vadd.f32 %v287, %v279
      %v289 = vadd.f32 %v288, %v281
      %v290 = vrot.slane %v289, 4
      %v291 = vadd.f32 %v289, %v290
      %v292 = vrot.slane %v291, 2
      %v293 = vadd.f32 %v291, %v292
      %v294 = vrot.slane %v293, 1
      %v295 = vadd.f32 %v293, %v294
      %v296 = vadd.f32 %v268, %v270
      %v297 = vadd.f32 %v296, %v272
      %v298 = vadd.f32 %v297, %v274
      %v299 = vadd.f32 %v298, %v276
      %v300 = vadd.f32 %v299, %v278
      %v301 = vadd.f32 %v300, %v280
      %v302 = vadd.f32 %v301, %v282
      %v303 = vrot.slane %v302, 4
      %v304 = vadd.f32 %v302, %v303
      %v305 = vrot.slane %v304, 2
      %v306 = vadd.f32 %v304, %v305
      %v307 = vrot.slane %v306, 1
      %v308 = vadd.f32 %v306, %v307
      %v309 = vmul.f32 %v295, 0.015625
      %v310 = vmul.f32 %v308, 0.015625
      %v311 = vmax.f32 %v267, %v271
      %v312 = vmax.f32 %v269, %v273
      %v313 = vmax.f32 %v311, %v275
      %v314 = vmax.f32 %v312, %v277
      %v315 = vmax.f32 %v313, %v279
      %v316 = vmax.f32 %v314, %v281
      %v317 = vmax.f32 %v315, %v316
      %v318 = vrot.slane %v317, 4
      %v319 = vmax.f32 %v317, %v318
      %v320 = vrot.slane %v319, 2
      %v321 = vmax.f32 %v319, %v320
      %v322 = vrot.slane %v321, 1
      %v323 = vmax.f32 %v321, %v322
      %v324 = vmax.f32 %v268, %v272
      %v325 = vmax.f32 %v270, %v274
      %v326 = vmax.f32 %v324, %v276
      %v327 = vmax.f32 %v325, %v278
      %v328 = vmax.f32 %v326, %v280
      %v329 = vmax.f32 %v327, %v282
      %v330 = vmax.f32 %v328, %v329
      %v331 = vrot.slane %v330, 4
      %v332 = vmax.f32 %v330, %v331
      %v333 = vrot.slane %v332, 2
      %v334 = vmax.f32 %v332, %v333
      %v335 = vrot.slane %v334, 1
      %v336 = vmax.f32 %v334, %v335
      %vm337 = vcmask 1040384
      %v338 = vsel %vm337, %v309, %v323
      %v339 = vsel %vm337, %v310, %v336
      %v342 = vrot.slane %v339, 6
      %vm343 = vcmask 1041408
      %v344 = vsel %vm343, %v338, %v342
      %346 = vst [vmem:[%s201] sm:$0xf] %v344
      %s347 = smul.u32 2, %s18
      %p348 = scmp.lt.s32.totalorder %s17, 1
      %s349 = scalar_select %p348, %s17, 1
      %p350 = scmp.lt.s32.totalorder %s347, 1
      %s351 = scalar_select %p350, %s347, 1
      %s352 = smul.addr %s349, 2
      %s353 = sadd.s32 %s351, %s352
      %s354 = smul.addr %s353, 2
      %s355 = scalar_lea.vmem %s2, %s354
      // Predicated region
      $region29: #{cbam_forward.5} parent=27 // pred_check
        %p356 = pneg %p99
      $region30: #{cbam_forward.5} parent=27 // pred_check_branch
        %358 = sbr.rel (%p356) target = $region32
      $region31: #{cbam_forward.5} parent=27 // pred_region
        %s359 = smul.u32 2, %s18
      $region32: #{cbam_forward.5} parent=27 // pred_fallthru
        _
    $region28: #{cbam_forward.5} parent=5 // pred_fallthru
      _
    %p360 = scmp.le.s32.totalorder 2, %s8
    // Predicated region
    $region33: #{cbam_forward.5} parent=5 // pred_check
      %p361 = pneg %p360
    $region34: #{cbam_forward.5} parent=5 // pred_check_branch
      %363 = sbr.rel (%p361) target = $region36
    $region35: #{cbam_forward.5} parent=5 // pred_region
      %s364 = ssub.s32 %s8, 2
      // Predicated region
      $region37: #{cbam_forward.5} parent=35 // pred_check
        %p365 = pneg %p105
      $region38: #{cbam_forward.5} parent=35 // pred_check_branch
        %367 = sbr.rel (%p365) target = $region40
      $region39: #{cbam_forward.5} parent=35 // pred_region
        %s368 = smul.u32 2, %s20
        %p369 = scmp.lt.s32.totalorder %s19, 1
        %s370 = scalar_select %p369, %s19, 1
        %p371 = scmp.lt.s32.totalorder %s368, 1
        %s372 = scalar_select %p371, %s368, 1
        %s373 = smul.addr %s370, 2
        %s374 = sadd.s32 %s372, %s373
        %s375 = smul.addr %s374, 2
        %s376 = scalar_lea.vmem %s2, %s375
      $region40: #{cbam_forward.5} parent=35 // pred_fallthru
        _
    $region36: #{cbam_forward.5} parent=5 // pred_fallthru
      _
  $region6: #{cbam_forward.5} parent=0 // loop_footer
    %s12 = sadd.s32 1, %s8
  $region7: #{cbam_forward.5} parent=0 // loop_footer_branch
    %7 = sbr.rel target = $region3
  $region8: #{cbam_forward.5} parent=0 // loop_exit
    _

// kernel: cbam_forward.7
$region0: #{cbam_forward.7}
  #allocation0 [shape = 'u32[]', space=smem, size = 0x4, offset = 0x4, fixed_abs, tag = 'smem constant byte address 0x4 - core index']
  #allocation1 [shape = 'u32[72,128]{1,0:T(1,128)}', space=vmem, size = 0x9000, scoped, tag = 'internal scratch']
  %s0 = inlined_call_operand.vmem [shape: f32[2,64,256], index: 0, kind: input, shape index: {}]
  %s1 = inlined_call_operand.vmem [shape: f32[2,64,1], index: 1, kind: input, shape index: {}]
  %s2 = inlined_call_operand.vmem [shape: f32[2,1,256], index: 2, kind: input, shape index: {}]
  %s3 = inlined_call_operand.vmem [shape: f32[2,64,256], index: 3, kind: output, shape index: {}]
  %s4 = sld [smem:[#allocation0]]
  $region45: #{cbam_forward.7} parent=0
    _
  %s6 = ssub.s32 1, %s4
  %s7 = scalar_select 0, %s6, %s4
  loop: start=0, step=1, limit=4
  $region2: #{cbam_forward.7} parent=0 // loop_pre_header
    _
  $region3: #{cbam_forward.7} parent=0 // loop_header
    %s9 = sphi 0, %s13
    %p10 = scmp.ge.s32.totalorder %s9, 4
    %s16 = sphi 0, %s28
    %s17 = sphi 0, %s24
    %s18 = sphi 0, %s16
    %s19 = sphi 0, %s17
    %s20 = sphi 0, %s18
    %s21 = sphi 0, %s19
    %s33 = sphi 0, %s35
    %s36 = sphi 0, %s33
    %s37 = sphi 0, %s36
    %s53 = sphi 0, %s37
    %s59 = sphi 0, %s61
    %s62 = sphi 0, %s59
    %s63 = sphi 0, %s62
    %s79 = sphi 0, %s63
    %s87 = sphi 0, %s89
    %s90 = sphi 0, %s87
    %s91 = sphi 0, %s90
    %s107 = sphi 0, %s91
    %s115 = sphi 0, %s117
    %s118 = sphi 0, %s115
    %s119 = sphi 0, %s118
    %s135 = sphi 0, %s119
  $region4: #{cbam_forward.7} parent=0 // loop_header_branch
    %12 = sbr.rel (%p10) target = $region8
  $region5: #{cbam_forward.7} parent=0 // loop_body
    %s14 = ssub.s32 %s9, 1
    %s15 = ssub.s32 %s9, 2
    %s22 = sadd.s32 1, %s17
    %p23 = scmp.ge.s32.totalorder %s22, 1
    %s24 = scalar_select %p23, 0, %s22
    %s25 = sadd.s32 1, %s16
    %s26 = scalar_select %p23, %s25, %s16
    %p27 = scmp.ge.s32.totalorder %s26, 2
    %s28 = scalar_select %p27, 0, %s26
    %s29 = ssub.s32 %s16, %s28
    %s30 = ssub.s32 %s17, %s24
    %s31 = sor.u32 %s29, %s30
    %p32 = scmp.eq.s32.totalorder %s31, 0
    %s34 = sadd.s32 %s33, 1
    %s35 = scalar_select %p32, %s33, %s34
    %p38 = pneg %p32
    %p39 = scmp.eq.s32.totalorder %s9, 1
    %p40 = por %p38, %p39
    %p41 = scmp.ne.s32.totalorder %s33, %s36
    %p42 = scmp.eq.s32.totalorder %s9, 0
    %p43 = por %p41, %p42
    %p44 = scmp.ne.s32.totalorder %s33, %s36
    %p45 = scmp.eq.s32.totalorder %s14, 1
    %p46 = por %p44, %p45
    %p47 = scmp.ne.s32.totalorder %s36, %s37
    %p48 = scmp.eq.s32.totalorder %s14, 0
    %p49 = por %p47, %p48
    %p50 = scmp.ne.s32.totalorder %s36, %s37
    %p51 = scmp.eq.s32.totalorder %s15, 1
    %p52 = por %p50, %p51
    %p54 = scmp.ne.s32.totalorder %s37, %s53
    %p55 = scmp.eq.s32.totalorder %s15, 0
    %p56 = por %p54, %p55
    %s57 = ssub.s32 %s16, %s28
    %p58 = scmp.eq.s32.totalorder %s57, 0
    %s60 = sadd.s32 %s59, 1
    %s61 = scalar_select %p58, %s59, %s60
    %p64 = pneg %p58
    %p65 = scmp.eq.s32.totalorder %s9, 1
    %p66 = por %p64, %p65
    %p67 = scmp.ne.s32.totalorder %s59, %s62
    %p68 = scmp.eq.s32.totalorder %s9, 0
    %p69 = por %p67, %p68
    %p70 = scmp.ne.s32.totalorder %s59, %s62
    %p71 = scmp.eq.s32.totalorder %s14, 1
    %p72 = por %p70, %p71
    %p73 = scmp.ne.s32.totalorder %s62, %s63
    %p74 = scmp.eq.s32.totalorder %s14, 0
    %p75 = por %p73, %p74
    %p76 = scmp.ne.s32.totalorder %s62, %s63
    %p77 = scmp.eq.s32.totalorder %s15, 1
    %p78 = por %p76, %p77
    %p80 = scmp.ne.s32.totalorder %s63, %s79
    %p81 = scmp.eq.s32.totalorder %s15, 0
    %p82 = por %p80, %p81
    %s83 = ssub.s32 %s16, %s28
    %s84 = ssub.s32 %s17, %s24
    %s85 = sor.u32 %s83, %s84
    %p86 = scmp.eq.s32.totalorder %s85, 0
    %s88 = sadd.s32 %s87, 1
    %s89 = scalar_select %p86, %s87, %s88
    %p92 = pneg %p86
    %p93 = scmp.eq.s32.totalorder %s9, 1
    %p94 = por %p92, %p93
    %p95 = scmp.ne.s32.totalorder %s87, %s90
    %p96 = scmp.eq.s32.totalorder %s9, 0
    %p97 = por %p95, %p96
    %p98 = scmp.ne.s32.totalorder %s87, %s90
    %p99 = scmp.eq.s32.totalorder %s14, 1
    %p100 = por %p98, %p99
    %p101 = scmp.ne.s32.totalorder %s90, %s91
    %p102 = scmp.eq.s32.totalorder %s14, 0
    %p103 = por %p101, %p102
    %p104 = scmp.ne.s32.totalorder %s90, %s91
    %p105 = scmp.eq.s32.totalorder %s15, 1
    %p106 = por %p104, %p105
    %p108 = scmp.ne.s32.totalorder %s91, %s107
    %p109 = scmp.eq.s32.totalorder %s15, 0
    %p110 = por %p108, %p109
    %s111 = ssub.s32 %s16, %s28
    %s112 = ssub.s32 %s17, %s24
    %s113 = sor.u32 %s111, %s112
    %p114 = scmp.eq.s32.totalorder %s113, 0
    %s116 = sadd.s32 %s115, 1
    %s117 = scalar_select %p114, %s115, %s116
    %p120 = pneg %p114
    %p121 = scmp.eq.s32.totalorder %s9, 1
    %p122 = por %p120, %p121
    %p123 = scmp.ne.s32.totalorder %s115, %s118
    %p124 = scmp.eq.s32.totalorder %s9, 0
    %p125 = por %p123, %p124
    %p126 = scmp.ne.s32.totalorder %s115, %s118
    %p127 = scmp.eq.s32.totalorder %s14, 1
    %p128 = por %p126, %p127
    %p129 = scmp.ne.s32.totalorder %s118, %s119
    %p130 = scmp.eq.s32.totalorder %s14, 0
    %p131 = por %p129, %p130
    %p132 = scmp.ne.s32.totalorder %s118, %s119
    %p133 = scmp.eq.s32.totalorder %s15, 1
    %p134 = por %p132, %p133
    %p136 = scmp.ne.s32.totalorder %s119, %s135
    %p137 = scmp.eq.s32.totalorder %s15, 0
    %p138 = por %p136, %p137
    %p139 = scmp.le.s32.totalorder 1, %s9
    %p140 = scmp.lt.s32.totalorder %s9, 3
    %p141 = pnand %p139, %p140
    %p142 = pneg %p141
    // Predicated region
    $region9: #{cbam_forward.7} parent=5 // pred_check
      _
    $region10: #{cbam_forward.7} parent=5 // pred_check_branch
      %144 = sbr.rel (%p141) target = $region12
    $region11: #{cbam_forward.7} parent=5 // pred_region
      %s145 = ssub.s32 %s9, 1
    $region12: #{cbam_forward.7} parent=5 // pred_fallthru
      _
    %p146 = scmp.lt.s32.totalorder %s9, 2
    // Predicated region
    $region13: #{cbam_forward.7} parent=5 // pred_check
      %p147 = pneg %p146
    $region14: #{cbam_forward.7} parent=5 // pred_check_branch
      %149 = sbr.rel (%p147) target = $region16
    $region15: #{cbam_forward.7} parent=5 // pred_region
      // Predicated region
      $region17: #{cbam_forward.7} parent=15 // pred_check
        %p150 = pneg %p43
      $region18: #{cbam_forward.7} parent=15 // pred_check_branch
        %152 = sbr.rel (%p150) target = $region20
      $region19: #{cbam_forward.7} parent=15 // pred_region
        %s153 = smul.u32 2, %s17
        %p154 = scmp.lt.s32.totalorder %s16, 1
        %s155 = scalar_select %p154, %s16, 1
        %p156 = scmp.lt.s32.totalorder %s153, 1
        %s157 = scalar_select %p156, %s153, 1
        %s158 = smul.addr %s155, 16
        %s159 = sadd.s32 %s157, %s158
        %s160 = smul.addr %s159, 8
        %s161 = scalar_lea.vmem %s0, %s160
        %s162 = smul.u32 2, %s17
      $region20: #{cbam_forward.7} parent=15 // pred_fallthru
        _
      // Predicated region
      $region21: #{cbam_forward.7} parent=15 // pred_check
        %p163 = pneg %p69
      $region22: #{cbam_forward.7} parent=15 // pred_check_branch
        %165 = sbr.rel (%p163) target = $region24
      $region23: #{cbam_forward.7} parent=15 // pred_region
        %p166 = scmp.lt.s32.totalorder %s16, 1
        %s167 = scalar_select %p166, %s16, 1
        %s168 = smul.addr %s167, 8
        %s169 = smul.addr %s168, 8
        %s170 = scalar_lea.vmem %s1, %s169
      $region24: #{cbam_forward.7} parent=15 // pred_fallthru
        _
      // Predicated region
      $region25: #{cbam_forward.7} parent=15 // pred_check
        %p171 = pneg %p97
      $region26: #{cbam_forward.7} parent=15 // pred_check_branch
        %173 = sbr.rel (%p171) target = $region28
      $region27: #{cbam_forward.7} parent=15 // pred_region
        %s174 = smul.u32 2, %s17
        %p175 = scmp.lt.s32.totalorder %s16, 1
        %s176 = scalar_select %p175, %s16, 1
        %p177 = scmp.lt.s32.totalorder %s174, 1
        %s178 = scalar_select %p177, %s174, 1
        %s179 = smul.addr %s176, 2
        %s180 = sadd.s32 %s178, %s179
        %s181 = scalar_lea.vmem %s2, %s180
        %s182 = smul.u32 2, %s17
      $region28: #{cbam_forward.7} parent=15 // pred_fallthru
        _
    $region16: #{cbam_forward.7} parent=5 // pred_fallthru
      _
    %p183 = scmp.le.s32.totalorder 1, %s9
    %p184 = scmp.lt.s32.totalorder %s9, 3
    %p185 = pnand %p183, %p184
    %p186 = pneg %p185
    // Predicated region
    $region29: #{cbam_forward.7} parent=5 // pred_check
      _
    $region30: #{cbam_forward.7} parent=5 // pred_check_branch
      %188 = sbr.rel (%p185) target = $region32
    $region31: #{cbam_forward.7} parent=5 // pred_region
      %s189 = ssub.s32 %s9, 1
      %s190 = smul.u32 2, %s19
      %p191 = scmp.lt.s32.totalorder %s18, 1
      %s192 = scalar_select %p191, %s18, 1
      %p193 = scmp.lt.s32.totalorder %s190, 1
      %s194 = scalar_select %p193, %s190, 1
      %s195 = smul.addr %s192, 16
      %s196 = sadd.s32 %s194, %s195
      %s197 = smul.addr %s196, 8
      %s198 = scalar_lea.vmem %s0, %s197
      %p199 = pneg %p49
      %p200 = pneg %p46
      %p201 = scmp.lt.s32.totalorder %s18, 1
      %s202 = scalar_select %p201, %s18, 1
      %s203 = smul.addr %s202, 8
      %s204 = smul.addr %s203, 8
      %s205 = scalar_lea.vmem %s1, %s204
      %p206 = pneg %p75
      %p207 = pneg %p72
      %s208 = smul.u32 2, %s19
      %p209 = scmp.lt.s32.totalorder %s18, 1
      %s210 = scalar_select %p209, %s18, 1
      %p211 = scmp.lt.s32.totalorder %s208, 1
      %s212 = scalar_select %p211, %s208, 1
      %s213 = smul.addr %s210, 2
      %s214 = sadd.s32 %s212, %s213
      %s215 = scalar_lea.vmem %s2, %s214
      %p216 = pneg %p103
      %p217 = pneg %p100
      %p218 = pneg %p131
      %p219 = pneg %p128
      %s220 = smul.u32 2, %s19
      %p221 = scmp.lt.s32.totalorder %s18, 1
      %s222 = scalar_select %p221, %s18, 1
      %p223 = scmp.lt.s32.totalorder %s220, 1
      %s224 = scalar_select %p223, %s220, 1
      %s225 = smul.addr %s222, 16
      %s226 = sadd.s32 %s224, %s225
      %s227 = smul.addr %s226, 8
      %s228 = scalar_lea.vmem %s3, %s227
      %s229 = smul.u32 2, %s19
      %p230 = scmp.lt.s32.totalorder %s18, 1
      %s231 = scalar_select %p230, %s18, 1
      %p232 = scmp.lt.s32.totalorder %s229, 1
      %s233 = scalar_select %p232, %s229, 1
      %s234 = smul.addr %s231, 16
      %s235 = sadd.s32 %s233, %s234
      %s236 = smul.addr %s235, 8
      %s237 = scalar_lea.vmem %s0, %s236
      %s238 = smul.u32 2, %s19
      %p239 = scmp.lt.s32.totalorder %s18, 1
      %s240 = scalar_select %p239, %s18, 1
      %s241 = smul.addr %s240, 8
      %s242 = smul.addr %s241, 8
      %s243 = scalar_lea.vmem %s1, %s242
      %s244 = smul.u32 2, %s19
      %p245 = scmp.lt.s32.totalorder %s18, 1
      %s246 = scalar_select %p245, %s18, 1
      %p247 = scmp.lt.s32.totalorder %s244, 1
      %s248 = scalar_select %p247, %s244, 1
      %s249 = smul.addr %s246, 2
      %s250 = sadd.s32 %s248, %s249
      %s251 = scalar_lea.vmem %s2, %s250
      %s252 = smul.u32 2, %s19
      %s253 = smul.u32 2, %s19
      %p254 = scmp.lt.s32.totalorder %s18, 1
      %s255 = scalar_select %p254, %s18, 1
      %p256 = scmp.lt.s32.totalorder %s253, 1
      %s257 = scalar_select %p256, %s253, 1
      %s258 = smul.addr %s255, 16
      %s259 = sadd.s32 %s257, %s258
      %s260 = smul.addr %s259, 8
      %s261 = scalar_lea.vmem %s3, %s260
      %s262 = smul.u32 2, %s19
      %v263 = vld [vmem:[%s237] sm:$0xff]
      %v264 = vld [vmem:[%s237 + $0x8] sm:$0xff]
      %v265 = vld [vmem:[%s237 + $0x10] sm:$0xff]
      %v266 = vld [vmem:[%s237 + $0x18] sm:$0xff]
      %v267 = vld [vmem:[%s237 + $0x20] sm:$0xff]
      %v268 = vld [vmem:[%s237 + $0x28] sm:$0xff]
      %v269 = vld [vmem:[%s237 + $0x30] sm:$0xff]
      %v270 = vld [vmem:[%s237 + $0x38] sm:$0xff]
      %v271 = vld [vmem:[%s237 + $0x40] sm:$0xff]
      %v272 = vld [vmem:[%s237 + $0x48] sm:$0xff]
      %v273 = vld [vmem:[%s237 + $0x50] sm:$0xff]
      %v274 = vld [vmem:[%s237 + $0x58] sm:$0xff]
      %v275 = vld [vmem:[%s237 + $0x60] sm:$0xff]
      %v276 = vld [vmem:[%s237 + $0x68] sm:$0xff]
      %v277 = vld [vmem:[%s237 + $0x70] sm:$0xff]
      %v278 = vld [vmem:[%s237 + $0x78] sm:$0xff]
      %v279 = vld [vmem:[%s243] sm:$0xff]
      %v280 = vld [vmem:[%s243 + $0x8] sm:$0xff]
      %v281 = vld [vmem:[%s243 + $0x10] sm:$0xff]
      %v282 = vld [vmem:[%s243 + $0x18] sm:$0xff]
      %v283 = vld [vmem:[%s243 + $0x20] sm:$0xff]
      %v284 = vld [vmem:[%s243 + $0x28] sm:$0xff]
      %v285 = vld [vmem:[%s243 + $0x30] sm:$0xff]
      %v286 = vld [vmem:[%s243 + $0x38] sm:$0xff]
      %v287 = vld [vmem:[%s251] sm:$0x3]
      %289 = vset.pattern.permute.xlu0 0
      %290 = vperm.xlu0 %289, %v279
      %v291 = vpop.permute.xlu0 %290
      %294 = vset.pattern.permute.xlu0 0
      %295 = vperm.xlu0 %294, %v280
      %v296 = vpop.permute.xlu0 %295
      %299 = vset.pattern.permute.xlu0 0
      %300 = vperm.xlu0 %299, %v281
      %v301 = vpop.permute.xlu0 %300
      %304 = vset.pattern.permute.xlu0 0
      %305 = vperm.xlu0 %304, %v282
      %v306 = vpop.permute.xlu0 %305
      %309 = vset.pattern.permute.xlu0 0
      %310 = vperm.xlu0 %309, %v283
      %v311 = vpop.permute.xlu0 %310
      %314 = vset.pattern.permute.xlu0 0
      %315 = vperm.xlu0 %314, %v284
      %v316 = vpop.permute.xlu0 %315
      %319 = vset.pattern.permute.xlu0 0
      %320 = vperm.xlu0 %319, %v285
      %v321 = vpop.permute.xlu0 %320
      %324 = vset.pattern.permute.xlu0 0
      %325 = vperm.xlu0 %324, %v286
      %v326 = vpop.permute.xlu0 %325
      %v328 = vmul.f32 %v263, %v291
      %v329 = vmul.f32 %v264, %v291
      %v330 = vmul.f32 %v265, %v296
      %v331 = vmul.f32 %v266, %v296
      %v332 = vmul.f32 %v267, %v301
      %v333 = vmul.f32 %v268, %v301
      %v334 = vmul.f32 %v269, %v306
      %v335 = vmul.f32 %v270, %v306
      %v336 = vmul.f32 %v271, %v311
      %v337 = vmul.f32 %v272, %v311
      %v338 = vmul.f32 %v273, %v316
      %v339 = vmul.f32 %v274, %v316
      %v340 = vmul.f32 %v275, %v321
      %v341 = vmul.f32 %v276, %v321
      %v342 = vmul.f32 %v277, %v326
      %v343 = vmul.f32 %v278, %v326
      %v345 = vperm.slane %v287, 0
      %v346 = vperm.slane %v287, 1
      %v349 = vmul.f32 %v328, %v345
      %v350 = vmul.f32 %v329, %v346
      %v351 = vmul.f32 %v330, %v345
      %v352 = vmul.f32 %v331, %v346
      %v353 = vmul.f32 %v332, %v345
      %v354 = vmul.f32 %v333, %v346
      %v355 = vmul.f32 %v334, %v345
      %v356 = vmul.f32 %v335, %v346
      %v357 = vmul.f32 %v336, %v345
      %v358 = vmul.f32 %v337, %v346
      %v359 = vmul.f32 %v338, %v345
      %v360 = vmul.f32 %v339, %v346
      %v361 = vmul.f32 %v340, %v345
      %v362 = vmul.f32 %v341, %v346
      %v363 = vmul.f32 %v342, %v345
      %v364 = vmul.f32 %v343, %v346
      %365 = vst [vmem:[%s261] sm:$0xff] %v349
      %366 = vst [vmem:[%s261 + $0x8] sm:$0xff] %v350
      %367 = vst [vmem:[%s261 + $0x10] sm:$0xff] %v351
      %368 = vst [vmem:[%s261 + $0x18] sm:$0xff] %v352
      %369 = vst [vmem:[%s261 + $0x20] sm:$0xff] %v353
      %370 = vst [vmem:[%s261 + $0x28] sm:$0xff] %v354
      %371 = vst [vmem:[%s261 + $0x30] sm:$0xff] %v355
      %372 = vst [vmem:[%s261 + $0x38] sm:$0xff] %v356
      %373 = vst [vmem:[%s261 + $0x40] sm:$0xff] %v357
      %374 = vst [vmem:[%s261 + $0x48] sm:$0xff] %v358
      %375 = vst [vmem:[%s261 + $0x50] sm:$0xff] %v359
      %376 = vst [vmem:[%s261 + $0x58] sm:$0xff] %v360
      %377 = vst [vmem:[%s261 + $0x60] sm:$0xff] %v361
      %378 = vst [vmem:[%s261 + $0x68] sm:$0xff] %v362
      %379 = vst [vmem:[%s261 + $0x70] sm:$0xff] %v363
      %380 = vst [vmem:[%s261 + $0x78] sm:$0xff] %v364
      %s381 = smul.u32 2, %s19
      %p382 = scmp.lt.s32.totalorder %s18, 1
      %s383 = scalar_select %p382, %s18, 1
      %p384 = scmp.lt.s32.totalorder %s381, 1
      %s385 = scalar_select %p384, %s381, 1
      %s386 = smul.addr %s383, 16
      %s387 = sadd.s32 %s385, %s386
      %s388 = smul.addr %s387, 8
      %s389 = scalar_lea.vmem %s3, %s388
      // Predicated region
      $region33: #{cbam_forward.7} parent=31 // pred_check
        %p390 = pneg %p128
      $region34: #{cbam_forward.7} parent=31 // pred_check_branch
        %392 = sbr.rel (%p390) target = $region36
      $region35: #{cbam_forward.7} parent=31 // pred_region
        %s393 = smul.u32 2, %s19
      $region36: #{cbam_forward.7} parent=31 // pred_fallthru
        _
    $region32: #{cbam_forward.7} parent=5 // pred_fallthru
      _
    %p394 = scmp.le.s32.totalorder 2, %s9
    // Predicated region
    $region37: #{cbam_forward.7} parent=5 // pred_check
      %p395 = pneg %p394
    $region38: #{cbam_forward.7} parent=5 // pred_check_branch
      %397 = sbr.rel (%p395) target = $region40
    $region39: #{cbam_forward.7} parent=5 // pred_region
      %s398 = ssub.s32 %s9, 2
      // Predicated region
      $region41: #{cbam_forward.7} parent=39 // pred_check
        %p399 = pneg %p134
      $region42: #{cbam_forward.7} parent=39 // pred_check_branch
        %401 = sbr.rel (%p399) target = $region44
      $region43: #{cbam_forward.7} parent=39 // pred_region
        %s402 = smul.u32 2, %s21
        %p403 = scmp.lt.s32.totalorder %s20, 1
        %s404 = scalar_select %p403, %s20, 1
        %p405 = scmp.lt.s32.totalorder %s402, 1
        %s406 = scalar_select %p405, %s402, 1
        %s407 = smul.addr %s404, 16
        %s408 = sadd.s32 %s406, %s407
        %s409 = smul.addr %s408, 8
        %s410 = scalar_lea.vmem %s3, %s409
      $region44: #{cbam_forward.7} parent=39 // pred_fallthru
        _
    $region40: #{cbam_forward.7} parent=5 // pred_fallthru
      _
  $region6: #{cbam_forward.7} parent=0 // loop_footer
    %s13 = sadd.s32 1, %s9
  $region7: #{cbam_forward.7} parent=0 // loop_footer_branch
    %8 = sbr.rel target = $region3
  $region8: #{cbam_forward.7} parent=0 // loop_exit
    _

// kernel: cbam_forward.4
$region0: #{cbam_forward.4}
  #allocation0 [shape = 'u32[]', space=smem, size = 0x4, offset = 0x4, fixed_abs, tag = 'smem constant byte address 0x4 - core index']
  #allocation1 [shape = 'u32[72,128]{1,0:T(1,128)}', space=vmem, size = 0x9000, scoped, tag = 'internal scratch']
  #allocation2 [shape = 'f32[64,256]{1,0:T(8,128)}', space=vmem, size = 0x10000, scoped, tag = 'scratch operand']
  #allocation3 [shape = 'f32[64,256]{1,0:T(8,128)}', space=vmem, size = 0x10000, scoped, tag = 'scratch operand']
  #allocation4 [shape = 'f32[64,2]{1,0:T(8,128)}', space=vmem, size = 0x8000, scoped, tag = 'scratch operand']
  %s0 = inlined_call_operand.vmem [shape: f32[2,64,256], index: 0, kind: input, shape index: {}]
  %s1 = inlined_call_operand.vmem [shape: f32[4,64], index: 1, kind: input, shape index: {}]
  %s2 = inlined_call_operand.vmem [shape: f32[64,4], index: 2, kind: input, shape index: {}]
  %s3 = inlined_call_operand.vmem [shape: f32[2,64,1], index: 3, kind: output, shape index: {}]
  %s4 = sld [smem:[#allocation0]]
  $region57: #{cbam_forward.4} parent=0
    _
  %s6 = ssub.s32 1, %s4
  %s7 = scalar_select 0, %s6, %s4
  loop: start=0, step=1, limit=4
  $region2: #{cbam_forward.4} parent=0 // loop_pre_header
    _
  $region3: #{cbam_forward.4} parent=0 // loop_header
    %s9 = sphi 0, %s13
    %p10 = scmp.ge.s32.totalorder %s9, 4
    %s16 = sphi 0, %s28
    %s17 = sphi 0, %s24
    %s18 = sphi 0, %s16
    %s19 = sphi 0, %s17
    %s20 = sphi 0, %s18
    %s21 = sphi 0, %s19
    %s33 = sphi 0, %s35
    %s36 = sphi 0, %s33
    %s37 = sphi 0, %s36
    %s53 = sphi 0, %s37
    %s57 = sphi 0, %s57
    %s59 = sphi 0, %s57
    %s60 = sphi 0, %s59
    %s74 = sphi 0, %s60
    %s78 = sphi 0, %s78
    %s80 = sphi 0, %s78
    %s81 = sphi 0, %s80
    %s95 = sphi 0, %s81
    %s101 = sphi 0, %s103
    %s104 = sphi 0, %s101
    %s105 = sphi 0, %s104
    %s121 = sphi 0, %s105
  $region4: #{cbam_forward.4} parent=0 // loop_header_branch
    %12 = sbr.rel (%p10) target = $region8
  $region5: #{cbam_forward.4} parent=0 // loop_body
    %s14 = ssub.s32 %s9, 1
    %s15 = ssub.s32 %s9, 2
    %s22 = sadd.s32 1, %s17
    %p23 = scmp.ge.s32.totalorder %s22, 1
    %s24 = scalar_select %p23, 0, %s22
    %s25 = sadd.s32 1, %s16
    %s26 = scalar_select %p23, %s25, %s16
    %p27 = scmp.ge.s32.totalorder %s26, 2
    %s28 = scalar_select %p27, 0, %s26
    %s29 = ssub.s32 %s16, %s28
    %s30 = ssub.s32 %s17, %s24
    %s31 = sor.u32 %s29, %s30
    %p32 = scmp.eq.s32.totalorder %s31, 0
    %s34 = sadd.s32 %s33, 1
    %s35 = scalar_select %p32, %s33, %s34
    %p38 = pneg %p32
    %p39 = scmp.eq.s32.totalorder %s9, 1
    %p40 = por %p38, %p39
    %p41 = scmp.ne.s32.totalorder %s33, %s36
    %p42 = scmp.eq.s32.totalorder %s9, 0
    %p43 = por %p41, %p42
    %p44 = scmp.ne.s32.totalorder %s33, %s36
    %p45 = scmp.eq.s32.totalorder %s14, 1
    %p46 = por %p44, %p45
    %p47 = scmp.ne.s32.totalorder %s36, %s37
    %p48 = scmp.eq.s32.totalorder %s14, 0
    %p49 = por %p47, %p48
    %p50 = scmp.ne.s32.totalorder %s36, %s37
    %p51 = scmp.eq.s32.totalorder %s15, 1
    %p52 = por %p50, %p51
    %p54 = scmp.ne.s32.totalorder %s37, %s53
    %p55 = scmp.eq.s32.totalorder %s15, 0
    %p56 = por %p54, %p55
    %s58 = sadd.s32 %s57, 1
    %p61 = scmp.eq.s32.totalorder %s9, 1
    %p62 = scmp.ne.s32.totalorder %s57, %s59
    %p63 = scmp.eq.s32.totalorder %s9, 0
    %p64 = por %p62, %p63
    %p65 = scmp.ne.s32.totalorder %s57, %s59
    %p66 = scmp.eq.s32.totalorder %s14, 1
    %p67 = por %p65, %p66
    %p68 = scmp.ne.s32.totalorder %s59, %s60
    %p69 = scmp.eq.s32.totalorder %s14, 0
    %p70 = por %p68, %p69
    %p71 = scmp.ne.s32.totalorder %s59, %s60
    %p72 = scmp.eq.s32.totalorder %s15, 1
    %p73 = por %p71, %p72
    %p75 = scmp.ne.s32.totalorder %s60, %s74
    %p76 = scmp.eq.s32.totalorder %s15, 0
    %p77 = por %p75, %p76
    %s79 = sadd.s32 %s78, 1
    %p82 = scmp.eq.s32.totalorder %s9, 1
    %p83 = scmp.ne.s32.totalorder %s78, %s80
    %p84 = scmp.eq.s32.totalorder %s9, 0
    %p85 = por %p83, %p84
    %p86 = scmp.ne.s32.totalorder %s78, %s80
    %p87 = scmp.eq.s32.totalorder %s14, 1
    %p88 = por %p86, %p87
    %p89 = scmp.ne.s32.totalorder %s80, %s81
    %p90 = scmp.eq.s32.totalorder %s14, 0
    %p91 = por %p89, %p90
    %p92 = scmp.ne.s32.totalorder %s80, %s81
    %p93 = scmp.eq.s32.totalorder %s15, 1
    %p94 = por %p92, %p93
    %p96 = scmp.ne.s32.totalorder %s81, %s95
    %p97 = scmp.eq.s32.totalorder %s15, 0
    %p98 = por %p96, %p97
    %s99 = ssub.s32 %s16, %s28
    %p100 = scmp.eq.s32.totalorder %s99, 0
    %s102 = sadd.s32 %s101, 1
    %s103 = scalar_select %p100, %s101, %s102
    %p106 = pneg %p100
    %p107 = scmp.eq.s32.totalorder %s9, 1
    %p108 = por %p106, %p107
    %p109 = scmp.ne.s32.totalorder %s101, %s104
    %p110 = scmp.eq.s32.totalorder %s9, 0
    %p111 = por %p109, %p110
    %p112 = scmp.ne.s32.totalorder %s101, %s104
    %p113 = scmp.eq.s32.totalorder %s14, 1
    %p114 = por %p112, %p113
    %p115 = scmp.ne.s32.totalorder %s104, %s105
    %p116 = scmp.eq.s32.totalorder %s14, 0
    %p117 = por %p115, %p116
    %p118 = scmp.ne.s32.totalorder %s104, %s105
    %p119 = scmp.eq.s32.totalorder %s15, 1
    %p120 = por %p118, %p119
    %p122 = scmp.ne.s32.totalorder %s105, %s121
    %p123 = scmp.eq.s32.totalorder %s15, 0
    %p124 = por %p122, %p123
    %p125 = scmp.le.s32.totalorder 1, %s9
    %p126 = scmp.lt.s32.totalorder %s9, 3
    %p127 = pnand %p125, %p126
    %p128 = pneg %p127
    // Predicated region
    $region9: #{cbam_forward.4} parent=5 // pred_check
      _
    $region10: #{cbam_forward.4} parent=5 // pred_check_branch
      %130 = sbr.rel (%p127) target = $region12
    $region11: #{cbam_forward.4} parent=5 // pred_region
      %s131 = ssub.s32 %s9, 1
      // Predicated region
      $region13: #{cbam_forward.4} parent=11 // pred_check
        %p132 = pneg %p70
      $region14: #{cbam_forward.4} parent=11 // pred_check_branch
        %134 = sbr.rel (%p132) target = $region16
      $region15: #{cbam_forward.4} parent=11 // pred_region
        _
      $region16: #{cbam_forward.4} parent=11 // pred_fallthru
        _
      // Predicated region
      $region17: #{cbam_forward.4} parent=11 // pred_check
        %p135 = pneg %p91
      $region18: #{cbam_forward.4} parent=11 // pred_check_branch
        %137 = sbr.rel (%p135) target = $region20
      $region19: #{cbam_forward.4} parent=11 // pred_region
        _
      $region20: #{cbam_forward.4} parent=11 // pred_fallthru
        _
    $region12: #{cbam_forward.4} parent=5 // pred_fallthru
      _
    %p138 = scmp.lt.s32.totalorder %s9, 2
    // Predicated region
    $region21: #{cbam_forward.4} parent=5 // pred_check
      %p139 = pneg %p138
    $region22: #{cbam_forward.4} parent=5 // pred_check_branch
      %141 = sbr.rel (%p139) target = $region24
    $region23: #{cbam_forward.4} parent=5 // pred_region
      // Predicated region
      $region25: #{cbam_forward.4} parent=23 // pred_check
        %p142 = pneg %p43
      $region26: #{cbam_forward.4} parent=23 // pred_check_branch
        %144 = sbr.rel (%p142) target = $region28
      $region27: #{cbam_forward.4} parent=23 // pred_region
        %s145 = smul.u32 2, %s17
        %p146 = scmp.lt.s32.totalorder %s16, 1
        %s147 = scalar_select %p146, %s16, 1
        %p148 = scmp.lt.s32.totalorder %s145, 1
        %s149 = scalar_select %p148, %s145, 1
        %s150 = smul.addr %s147, 16
        %s151 = sadd.s32 %s149, %s150
        %s152 = smul.addr %s151, 8
        %s153 = scalar_lea.vmem %s0, %s152
        %s154 = smul.u32 2, %s17
      $region28: #{cbam_forward.4} parent=23 // pred_fallthru
        _
    $region24: #{cbam_forward.4} parent=5 // pred_fallthru
      _
    %p155 = scmp.le.s32.totalorder 1, %s9
    %p156 = scmp.lt.s32.totalorder %s9, 3
    %p157 = pnand %p155, %p156
    %p158 = pneg %p157
    // Predicated region
    $region29: #{cbam_forward.4} parent=5 // pred_check
      _
    $region30: #{cbam_forward.4} parent=5 // pred_check_branch
      %160 = sbr.rel (%p157) target = $region32
    $region31: #{cbam_forward.4} parent=5 // pred_region
      %s161 = ssub.s32 %s9, 1
      %s162 = smul.u32 2, %s19
      %p163 = scmp.lt.s32.totalorder %s18, 1
      %s164 = scalar_select %p163, %s18, 1
      %p165 = scmp.lt.s32.totalorder %s162, 1
      %s166 = scalar_select %p165, %s162, 1
      %s167 = smul.addr %s164, 16
      %s168 = sadd.s32 %s166, %s167
      %s169 = smul.addr %s168, 8
      %s170 = scalar_lea.vmem %s0, %s169
      %p171 = pneg %p49
      %p172 = pneg %p46
      %p173 = pneg %p70
      %p174 = pneg %p67
      %p175 = pneg %p91
      %p176 = pneg %p88
      %p177 = pneg %p117
      %p178 = pneg %p114
      %p179 = scmp.lt.s32.totalorder %s18, 1
      %s180 = scalar_select %p179, %s18, 1
      %s181 = smul.addr %s180, 8
      %s182 = smul.addr %s181, 8
      %s183 = scalar_lea.vmem %s3, %s182
      %s184 = smul.u32 2, %s19
      %p185 = scmp.lt.s32.totalorder %s18, 1
      %s186 = scalar_select %p185, %s18, 1
      %p187 = scmp.lt.s32.totalorder %s184, 1
      %s188 = scalar_select %p187, %s184, 1
      %s189 = smul.addr %s186, 16
      %s190 = sadd.s32 %s188, %s189
      %s191 = smul.addr %s190, 8
      %s192 = scalar_lea.vmem %s0, %s191
      %s193 = smul.u32 2, %s19
      %p194 = scmp.lt.s32.totalorder %s18, 1
      %s195 = scalar_select %p194, %s18, 1
      %s196 = smul.addr %s195, 8
      %s197 = smul.addr %s196, 8
      %s198 = scalar_lea.vmem %s3, %s197
      %v199 = vld [vmem:[%s192] sm:$0xff]
      %v200 = vld [vmem:[%s192 + $0x8] sm:$0xff]
      %v201 = vld [vmem:[%s192 + $0x10] sm:$0xff]
      %v202 = vld [vmem:[%s192 + $0x18] sm:$0xff]
      %v203 = vld [vmem:[%s192 + $0x20] sm:$0xff]
      %v204 = vld [vmem:[%s192 + $0x28] sm:$0xff]
      %v205 = vld [vmem:[%s192 + $0x30] sm:$0xff]
      %v206 = vld [vmem:[%s192 + $0x38] sm:$0xff]
      %v207 = vld [vmem:[%s192 + $0x40] sm:$0xff]
      %v208 = vld [vmem:[%s192 + $0x48] sm:$0xff]
      %v209 = vld [vmem:[%s192 + $0x50] sm:$0xff]
      %v210 = vld [vmem:[%s192 + $0x58] sm:$0xff]
      %v211 = vld [vmem:[%s192 + $0x60] sm:$0xff]
      %v212 = vld [vmem:[%s192 + $0x68] sm:$0xff]
      %v213 = vld [vmem:[%s192 + $0x70] sm:$0xff]
      %v214 = vld [vmem:[%s192 + $0x78] sm:$0xff]
      %p215 = scmp.eq.s32.totalorder %s19, 0
      // Predicated region
      $region33: #{cbam_forward.4} parent=31 // pred_check
        %p216 = pneg %p215
      $region34: #{cbam_forward.4} parent=31 // pred_check_branch
        %218 = sbr.rel (%p216) target = $region36
      $region35: #{cbam_forward.4} parent=31 // pred_region
        %219 = vst [vmem:[#allocation2] sm:$0xff] %v199
        %220 = vst [vmem:[#allocation2 + $0x8] sm:$0xff] %v200
        %221 = vst [vmem:[#allocation2 + $0x10] sm:$0xff] %v201
        %222 = vst [vmem:[#allocation2 + $0x18] sm:$0xff] %v202
        %223 = vst [vmem:[#allocation2 + $0x20] sm:$0xff] %v203
        %224 = vst [vmem:[#allocation2 + $0x28] sm:$0xff] %v204
        %225 = vst [vmem:[#allocation2 + $0x30] sm:$0xff] %v205
        %226 = vst [vmem:[#allocation2 + $0x38] sm:$0xff] %v206
        %227 = vst [vmem:[#allocation2 + $0x40] sm:$0xff] %v207
        %228 = vst [vmem:[#allocation2 + $0x48] sm:$0xff] %v208
        %229 = vst [vmem:[#allocation2 + $0x50] sm:$0xff] %v209
        %230 = vst [vmem:[#allocation2 + $0x58] sm:$0xff] %v210
        %231 = vst [vmem:[#allocation2 + $0x60] sm:$0xff] %v211
        %232 = vst [vmem:[#allocation2 + $0x68] sm:$0xff] %v212
        %233 = vst [vmem:[#allocation2 + $0x70] sm:$0xff] %v213
        %234 = vst [vmem:[#allocation2 + $0x78] sm:$0xff] %v214
        %235 = vst [vmem:[#allocation3] sm:$0xff] %v199
        %236 = vst [vmem:[#allocation3 + $0x8] sm:$0xff] %v200
        %237 = vst [vmem:[#allocation3 + $0x10] sm:$0xff] %v201
        %238 = vst [vmem:[#allocation3 + $0x18] sm:$0xff] %v202
        %239 = vst [vmem:[#allocation3 + $0x20] sm:$0xff] %v203
        %240 = vst [vmem:[#allocation3 + $0x28] sm:$0xff] %v204
        %241 = vst [vmem:[#allocation3 + $0x30] sm:$0xff] %v205
        %242 = vst [vmem:[#allocation3 + $0x38] sm:$0xff] %v206
        %243 = vst [vmem:[#allocation3 + $0x40] sm:$0xff] %v207
        %244 = vst [vmem:[#allocation3 + $0x48] sm:$0xff] %v208
        %245 = vst [vmem:[#allocation3 + $0x50] sm:$0xff] %v209
        %246 = vst [vmem:[#allocation3 + $0x58] sm:$0xff] %v210
        %247 = vst [vmem:[#allocation3 + $0x60] sm:$0xff] %v211
        %248 = vst [vmem:[#allocation3 + $0x68] sm:$0xff] %v212
        %249 = vst [vmem:[#allocation3 + $0x70] sm:$0xff] %v213
        %250 = vst [vmem:[#allocation3 + $0x78] sm:$0xff] %v214
      $region36: #{cbam_forward.4} parent=31 // pred_fallthru
        _
      %p251 = scmp.gt.s32.totalorder %s19, 0
      // Predicated region
      $region37: #{cbam_forward.4} parent=31 // pred_check
        %p252 = pneg %p251
      $region38: #{cbam_forward.4} parent=31 // pred_check_branch
        %254 = sbr.rel (%p252) target = $region40
      $region39: #{cbam_forward.4} parent=31 // pred_region
        %v255 = vld [vmem:[#allocation2] sm:$0xff]
        %v256 = vld [vmem:[#allocation2 + $0x8] sm:$0xff]
        %v257 = vld [vmem:[#allocation2 + $0x10] sm:$0xff]
        %v258 = vld [vmem:[#allocation2 + $0x18] sm:$0xff]
        %v259 = vld [vmem:[#allocation2 + $0x20] sm:$0xff]
        %v260 = vld [vmem:[#allocation2 + $0x28] sm:$0xff]
        %v261 = vld [vmem:[#allocation2 + $0x30] sm:$0xff]
        %v262 = vld [vmem:[#allocation2 + $0x38] sm:$0xff]
        %v263 = vld [vmem:[#allocation2 + $0x40] sm:$0xff]
        %v264 = vld [vmem:[#allocation2 + $0x48] sm:$0xff]
        %v265 = vld [vmem:[#allocation2 + $0x50] sm:$0xff]
        %v266 = vld [vmem:[#allocation2 + $0x58] sm:$0xff]
        %v267 = vld [vmem:[#allocation2 + $0x60] sm:$0xff]
        %v268 = vld [vmem:[#allocation2 + $0x68] sm:$0xff]
        %v269 = vld [vmem:[#allocation2 + $0x70] sm:$0xff]
        %v270 = vld [vmem:[#allocation2 + $0x78] sm:$0xff]
        %v271 = vadd.f32 %v255, %v199
        %v272 = vadd.f32 %v256, %v200
        %v273 = vadd.f32 %v257, %v201
        %v274 = vadd.f32 %v258, %v202
        %v275 = vadd.f32 %v259, %v203
        %v276 = vadd.f32 %v260, %v204
        %v277 = vadd.f32 %v261, %v205
        %v278 = vadd.f32 %v262, %v206
        %v279 = vadd.f32 %v263, %v207
        %v280 = vadd.f32 %v264, %v208
        %v281 = vadd.f32 %v265, %v209
        %v282 = vadd.f32 %v266, %v210
        %v283 = vadd.f32 %v267, %v211
        %v284 = vadd.f32 %v268, %v212
        %v285 = vadd.f32 %v269, %v213
        %v286 = vadd.f32 %v270, %v214
        %287 = vst [vmem:[#allocation2] sm:$0xff] %v271
        %288 = vst [vmem:[#allocation2 + $0x8] sm:$0xff] %v272
        %289 = vst [vmem:[#allocation2 + $0x10] sm:$0xff] %v273
        %290 = vst [vmem:[#allocation2 + $0x18] sm:$0xff] %v274
        %291 = vst [vmem:[#allocation2 + $0x20] sm:$0xff] %v275
        %292 = vst [vmem:[#allocation2 + $0x28] sm:$0xff] %v276
        %293 = vst [vmem:[#allocation2 + $0x30] sm:$0xff] %v277
        %294 = vst [vmem:[#allocation2 + $0x38] sm:$0xff] %v278
        %295 = vst [vmem:[#allocation2 + $0x40] sm:$0xff] %v279
        %296 = vst [vmem:[#allocation2 + $0x48] sm:$0xff] %v280
        %297 = vst [vmem:[#allocation2 + $0x50] sm:$0xff] %v281
        %298 = vst [vmem:[#allocation2 + $0x58] sm:$0xff] %v282
        %299 = vst [vmem:[#allocation2 + $0x60] sm:$0xff] %v283
        %300 = vst [vmem:[#allocation2 + $0x68] sm:$0xff] %v284
        %301 = vst [vmem:[#allocation2 + $0x70] sm:$0xff] %v285
        %302 = vst [vmem:[#allocation2 + $0x78] sm:$0xff] %v286
        %v303 = vld [vmem:[#allocation3] sm:$0xff]
        %v304 = vld [vmem:[#allocation3 + $0x8] sm:$0xff]
        %v305 = vld [vmem:[#allocation3 + $0x10] sm:$0xff]
        %v306 = vld [vmem:[#allocation3 + $0x18] sm:$0xff]
        %v307 = vld [vmem:[#allocation3 + $0x20] sm:$0xff]
        %v308 = vld [vmem:[#allocation3 + $0x28] sm:$0xff]
        %v309 = vld [vmem:[#allocation3 + $0x30] sm:$0xff]
        %v310 = vld [vmem:[#allocation3 + $0x38] sm:$0xff]
        %v311 = vld [vmem:[#allocation3 + $0x40] sm:$0xff]
        %v312 = vld [vmem:[#allocation3 + $0x48] sm:$0xff]
        %v313 = vld [vmem:[#allocation3 + $0x50] sm:$0xff]
        %v314 = vld [vmem:[#allocation3 + $0x58] sm:$0xff]
        %v315 = vld [vmem:[#allocation3 + $0x60] sm:$0xff]
        %v316 = vld [vmem:[#allocation3 + $0x68] sm:$0xff]
        %v317 = vld [vmem:[#allocation3 + $0x70] sm:$0xff]
        %v318 = vld [vmem:[#allocation3 + $0x78] sm:$0xff]
        %v319 = vmax.f32 %v303, %v199
        %v320 = vmax.f32 %v304, %v200
        %v321 = vmax.f32 %v305, %v201
        %v322 = vmax.f32 %v306, %v202
        %v323 = vmax.f32 %v307, %v203
        %v324 = vmax.f32 %v308, %v204
        %v325 = vmax.f32 %v309, %v205
        %v326 = vmax.f32 %v310, %v206
        %v327 = vmax.f32 %v311, %v207
        %v328 = vmax.f32 %v312, %v208
        %v329 = vmax.f32 %v313, %v209
        %v330 = vmax.f32 %v314, %v210
        %v331 = vmax.f32 %v315, %v211
        %v332 = vmax.f32 %v316, %v212
        %v333 = vmax.f32 %v317, %v213
        %v334 = vmax.f32 %v318, %v214
        %335 = vst [vmem:[#allocation3] sm:$0xff] %v319
        %336 = vst [vmem:[#allocation3 + $0x8] sm:$0xff] %v320
        %337 = vst [vmem:[#allocation3 + $0x10] sm:$0xff] %v321
        %338 = vst [vmem:[#allocation3 + $0x18] sm:$0xff] %v322
        %339 = vst [vmem:[#allocation3 + $0x20] sm:$0xff] %v323
        %340 = vst [vmem:[#allocation3 + $0x28] sm:$0xff] %v324
        %341 = vst [vmem:[#allocation3 + $0x30] sm:$0xff] %v325
        %342 = vst [vmem:[#allocation3 + $0x38] sm:$0xff] %v326
        %343 = vst [vmem:[#allocation3 + $0x40] sm:$0xff] %v327
        %344 = vst [vmem:[#allocation3 + $0x48] sm:$0xff] %v328
        %345 = vst [vmem:[#allocation3 + $0x50] sm:$0xff] %v329
        %346 = vst [vmem:[#allocation3 + $0x58] sm:$0xff] %v330
        %347 = vst [vmem:[#allocation3 + $0x60] sm:$0xff] %v331
        %348 = vst [vmem:[#allocation3 + $0x68] sm:$0xff] %v332
        %349 = vst [vmem:[#allocation3 + $0x70] sm:$0xff] %v333
        %350 = vst [vmem:[#allocation3 + $0x78] sm:$0xff] %v334
      $region40: #{cbam_forward.4} parent=31 // pred_fallthru
        _
      // Predicated region
      $region41: #{cbam_forward.4} parent=31 // pred_check
        %p351 = pneg %p215
      $region42: #{cbam_forward.4} parent=31 // pred_check_branch
        %353 = sbr.rel (%p351) target = $region44
      $region43: #{cbam_forward.4} parent=31 // pred_region
        %v354 = vld [vmem:[#allocation2] sm:$0xff]
        %v355 = vld [vmem:[#allocation2 + $0x8] sm:$0xff]
        %v356 = vld [vmem:[#allocation2 + $0x10] sm:$0xff]
        %v357 = vld [vmem:[#allocation2 + $0x18] sm:$0xff]
        %v358 = vld [vmem:[#allocation2 + $0x20] sm:$0xff]
        %v359 = vld [vmem:[#allocation2 + $0x28] sm:$0xff]
        %v360 = vld [vmem:[#allocation2 + $0x30] sm:$0xff]
        %v361 = vld [vmem:[#allocation2 + $0x38] sm:$0xff]
        %v362 = vld [vmem:[#allocation2 + $0x40] sm:$0xff]
        %v363 = vld [vmem:[#allocation2 + $0x48] sm:$0xff]
        %v364 = vld [vmem:[#allocation2 + $0x50] sm:$0xff]
        %v365 = vld [vmem:[#allocation2 + $0x58] sm:$0xff]
        %v366 = vld [vmem:[#allocation2 + $0x60] sm:$0xff]
        %v367 = vld [vmem:[#allocation2 + $0x68] sm:$0xff]
        %v368 = vld [vmem:[#allocation2 + $0x70] sm:$0xff]
        %v369 = vld [vmem:[#allocation2 + $0x78] sm:$0xff]
        %v370 = vadd.f32 %v354, %v355
        %371 = vadd.xlane.f32.xlu0 %v370
        %v372 = vpop.xlane.xlu0 %371
        %v373 = vadd.f32 %v356, %v357
        %374 = vadd.xlane.f32.xlu0 %v373
        %v375 = vpop.xlane.xlu0 %374
        %v376 = vadd.f32 %v358, %v359
        %377 = vadd.xlane.f32.xlu0 %v376
        %v378 = vpop.xlane.xlu0 %377
        %v379 = vadd.f32 %v360, %v361
        %380 = vadd.xlane.f32.xlu0 %v379
        %v381 = vpop.xlane.xlu0 %380
        %v382 = vadd.f32 %v362, %v363
        %383 = vadd.xlane.f32.xlu0 %v382
        %v384 = vpop.xlane.xlu0 %383
        %v385 = vadd.f32 %v364, %v365
        %386 = vadd.xlane.f32.xlu0 %v385
        %v387 = vpop.xlane.xlu0 %386
        %v388 = vadd.f32 %v366, %v367
        %389 = vadd.xlane.f32.xlu0 %v388
        %v390 = vpop.xlane.xlu0 %389
        %v391 = vadd.f32 %v368, %v369
        %392 = vadd.xlane.f32.xlu0 %v391
        %v393 = vpop.xlane.xlu0 %392
        %v394 = vmul.f32 %v372, 0.00390625
        %v395 = vmul.f32 %v375, 0.00390625
        %v396 = vmul.f32 %v378, 0.00390625
        %v397 = vmul.f32 %v381, 0.00390625
        %v398 = vmul.f32 %v384, 0.00390625
        %v399 = vmul.f32 %v387, 0.00390625
        %v400 = vmul.f32 %v390, 0.00390625
        %v401 = vmul.f32 %v393, 0.00390625
        %vm402 = vcmask 7168
        %403 = vst.msk [vmem:[#allocation4] sm:$0xff] %vm402, %v394
        %404 = vst.msk [vmem:[#allocation4 + $0x8] sm:$0xff] %vm402, %v395
        %405 = vst.msk [vmem:[#allocation4 + $0x10] sm:$0xff] %vm402, %v396
        %406 = vst.msk [vmem:[#allocation4 + $0x18] sm:$0xff] %vm402, %v397
        %407 = vst.msk [vmem:[#allocation4 + $0x20] sm:$0xff] %vm402, %v398
        %408 = vst.msk [vmem:[#allocation4 + $0x28] sm:$0xff] %vm402, %v399
        %409 = vst.msk [vmem:[#allocation4 + $0x30] sm:$0xff] %vm402, %v400
        %410 = vst.msk [vmem:[#allocation4 + $0x38] sm:$0xff] %vm402, %v401
        %v411 = vld [vmem:[#allocation3] sm:$0xff]
        %v412 = vld [vmem:[#allocation3 + $0x8] sm:$0xff]
        %v413 = vld [vmem:[#allocation3 + $0x10] sm:$0xff]
        %v414 = vld [vmem:[#allocation3 + $0x18] sm:$0xff]
        %v415 = vld [vmem:[#allocation3 + $0x20] sm:$0xff]
        %v416 = vld [vmem:[#allocation3 + $0x28] sm:$0xff]
        %v417 = vld [vmem:[#allocation3 + $0x30] sm:$0xff]
        %v418 = vld [vmem:[#allocation3 + $0x38] sm:$0xff]
        %v419 = vld [vmem:[#allocation3 + $0x40] sm:$0xff]
        %v420 = vld [vmem:[#allocation3 + $0x48] sm:$0xff]
        %v421 = vld [vmem:[#allocation3 + $0x50] sm:$0xff]
        %v422 = vld [vmem:[#allocation3 + $0x58] sm:$0xff]
        %v423 = vld [vmem:[#allocation3 + $0x60] sm:$0xff]
        %v424 = vld [vmem:[#allocation3 + $0x68] sm:$0xff]
        %v425 = vld [vmem:[#allocation3 + $0x70] sm:$0xff]
        %v426 = vld [vmem:[#allocation3 + $0x78] sm:$0xff]
        %v427 = vmax.f32 %v411, %v412
        %428 = vmax.xlane.f32.xlu0 %v427
        %v429 = vpop.xlane.xlu0 %428
        %v430 = vmax.f32 %v413, %v414
        %431 = vmax.xlane.f32.xlu0 %v430
        %v432 = vpop.xlane.xlu0 %431
        %v433 = vmax.f32 %v415, %v416
        %434 = vmax.xlane.f32.xlu0 %v433
        %v435 = vpop.xlane.xlu0 %434
        %v436 = vmax.f32 %v417, %v418
        %437 = vmax.xlane.f32.xlu0 %v436
        %v438 = vpop.xlane.xlu0 %437
        %v439 = vmax.f32 %v419, %v420
        %440 = vmax.xlane.f32.xlu0 %v439
        %v441 = vpop.xlane.xlu0 %440
        %v442 = vmax.f32 %v421, %v422
        %443 = vmax.xlane.f32.xlu0 %v442
        %v444 = vpop.xlane.xlu0 %443
        %v445 = vmax.f32 %v423, %v424
        %446 = vmax.xlane.f32.xlu0 %v445
        %v447 = vpop.xlane.xlu0 %446
        %v448 = vmax.f32 %v425, %v426
        %449 = vmax.xlane.f32.xlu0 %v448
        %v450 = vpop.xlane.xlu0 %449
        %vm451 = vcmask 15368
        %452 = vst.msk [vmem:[#allocation4] sm:$0xff] %vm451, %v429
        %453 = vst.msk [vmem:[#allocation4 + $0x8] sm:$0xff] %vm451, %v432
        %454 = vst.msk [vmem:[#allocation4 + $0x10] sm:$0xff] %vm451, %v435
        %455 = vst.msk [vmem:[#allocation4 + $0x18] sm:$0xff] %vm451, %v438
        %456 = vst.msk [vmem:[#allocation4 + $0x20] sm:$0xff] %vm451, %v441
        %457 = vst.msk [vmem:[#allocation4 + $0x28] sm:$0xff] %vm451, %v444
        %458 = vst.msk [vmem:[#allocation4 + $0x30] sm:$0xff] %vm451, %v447
        %459 = vst.msk [vmem:[#allocation4 + $0x38] sm:$0xff] %vm451, %v450
        %v460 = vld [vmem:[#allocation4] sm:$0xff]
        %v461 = vld [vmem:[#allocation4 + $0x8] sm:$0xff]
        %v462 = vld [vmem:[#allocation4 + $0x10] sm:$0xff]
        %v463 = vld [vmem:[#allocation4 + $0x18] sm:$0xff]
        %v464 = vld [vmem:[#allocation4 + $0x20] sm:$0xff]
        %v465 = vld [vmem:[#allocation4 + $0x28] sm:$0xff]
        %v466 = vld [vmem:[#allocation4 + $0x30] sm:$0xff]
        %v467 = vld [vmem:[#allocation4 + $0x38] sm:$0xff]
        %v468 = vld [vmem:[%s1] sm:$0xf]
        %vm469 = vcmask 523264
        %v471 = vsel %vm469, %v468, 0
        %473 = vmatpush.msra.mxu0 0.0
        %474 = vmatpush.msra.mxu0 0.0
        %475 = vmatpush.msra.mxu0 0.0
        %476 = vmatpush.msra.mxu0 0.0
        %477 = vmatpush.msra.mxu0 0.0
        %478 = vmatpush.msra.mxu0 0.0
        %479 = vmatpush.msra.mxu0 0.0
        %480 = vmatpush.msra.mxu0 0.0
        %481 = vmatpush.msra.mxu0 %v467
        %482 = vmatpush.msra.mxu0 %v466
        %483 = vmatpush.msra.mxu0 %v465
        %484 = vmatpush.msra.mxu0 %v464
        %485 = vmatpush.msra.mxu0 %v463
        %486 = vmatpush.msra.mxu0 %v462
        %487 = vmatpush.msra.mxu0 %v461
        %488 = vmatpush.msra.mxu0 %v460
        %489 = vmatmul.f32.gmra.mxu0 %v471
        %v490 = vpop.f32.mrf.mxu0
        %v491 = vadd.f32 0.0, %v490
        %492 = vdwg.mxu0
        %v493 = vmax.f32 %v491, 0.0
        %v494 = vld [vmem:[%s2] sm:$0xff]
        %v495 = vld [vmem:[%s2 + $0x8] sm:$0xff]
        %v496 = vld [vmem:[%s2 + $0x10] sm:$0xff]
        %v497 = vld [vmem:[%s2 + $0x18] sm:$0xff]
        %v498 = vld [vmem:[%s2 + $0x20] sm:$0xff]
        %v499 = vld [vmem:[%s2 + $0x28] sm:$0xff]
        %v500 = vld [vmem:[%s2 + $0x30] sm:$0xff]
        %v501 = vld [vmem:[%s2 + $0x38] sm:$0xff]
        %vm502 = vcmask 31744
        %v504 = vsel %vm502, %v494, 0
        %v507 = vsel %vm502, %v495, 0
        %v510 = vsel %vm502, %v496, 0
        %v513 = vsel %vm502, %v497, 0
        %v516 = vsel %vm502, %v498, 0
        %v519 = vsel %vm502, %v499, 0
        %v522 = vsel %vm502, %v500, 0
        %v525 = vsel %vm502, %v501, 0
        %vm527 = vcmask 1043456
        %v529 = vsel %vm527, %v493, 0
        %531 = vmatpush.msra.mxu0 0.0
        %532 = vmatpush.msra.mxu0 0.0
        %533 = vmatpush.msra.mxu0 0.0
        %534 = vmatpush.msra.mxu0 0.0
        %535 = vmatpush.msra.mxu0 0.0
        %536 = vmatpush.msra.mxu0 0.0
        %537 = vmatpush.msra.mxu0 0.0
        %538 = vmatpush.msra.mxu0 0.0
        %539 = vmatpush.msra.mxu0 0.0
        %540 = vmatpush.msra.mxu0 0.0
        %541 = vmatpush.msra.mxu0 0.0
        %542 = vmatpush.msra.mxu0 0.0
        %543 = vmatpush.msra.mxu0 0.0
        %544 = vmatpush.msra.mxu0 0.0
        %545 = vmatpush.msra.mxu0 0.0
        %546 = vmatpush.msra.mxu0 %v529
        %547 = vmatmul.f32.gmra.mxu0 %v504
        %v548 = vpop.f32.mrf.mxu0
        %v549 = vadd.f32 0.0, %v548
        %550 = vmatmul.f32.gmra.mxu0 %v507
        %v551 = vpop.f32.mrf.mxu0
        %v552 = vadd.f32 0.0, %v551
        %553 = vmatmul.f32.gmra.mxu0 %v510
        %v554 = vpop.f32.mrf.mxu0
        %v555 = vadd.f32 0.0, %v554
        %556 = vmatmul.f32.gmra.mxu0 %v513
        %v557 = vpop.f32.mrf.mxu0
        %v558 = vadd.f32 0.0, %v557
        %559 = vmatmul.f32.gmra.mxu0 %v516
        %v560 = vpop.f32.mrf.mxu0
        %v561 = vadd.f32 0.0, %v560
        %562 = vmatmul.f32.gmra.mxu0 %v519
        %v563 = vpop.f32.mrf.mxu0
        %v564 = vadd.f32 0.0, %v563
        %565 = vmatmul.f32.gmra.mxu0 %v522
        %v566 = vpop.f32.mrf.mxu0
        %v567 = vadd.f32 0.0, %v566
        %568 = vmatmul.f32.gmra.mxu0 %v525
        %v569 = vpop.f32.mrf.mxu0
        %v570 = vadd.f32 0.0, %v569
        %571 = vdwg.mxu0
        %vm572 = vcmask 15360
        %v573 = vsel %vm572, %v549, 0.0
        %574 = vadd.xlane.f32.xlu0 %v573
        %v575 = vpop.xlane.xlu0 %574
        %v576 = vsel %vm572, %v552, 0.0
        %577 = vadd.xlane.f32.xlu0 %v576
        %v578 = vpop.xlane.xlu0 %577
        %v579 = vsel %vm572, %v555, 0.0
        %580 = vadd.xlane.f32.xlu0 %v579
        %v581 = vpop.xlane.xlu0 %580
        %v582 = vsel %vm572, %v558, 0.0
        %583 = vadd.xlane.f32.xlu0 %v582
        %v584 = vpop.xlane.xlu0 %583
        %v585 = vsel %vm572, %v561, 0.0
        %586 = vadd.xlane.f32.xlu0 %v585
        %v587 = vpop.xlane.xlu0 %586
        %v588 = vsel %vm572, %v564, 0.0
        %589 = vadd.xlane.f32.xlu0 %v588
        %v590 = vpop.xlane.xlu0 %589
        %v591 = vsel %vm572, %v567, 0.0
        %592 = vadd.xlane.f32.xlu0 %v591
        %v593 = vpop.xlane.xlu0 %592
        %v594 = vsel %vm572, %v570, 0.0
        %595 = vadd.xlane.f32.xlu0 %v594
        %v596 = vpop.xlane.xlu0 %595
        %v597 = vxor.u32 %v575, 2147483648
        %v598 = vxor.u32 %v578, 2147483648
        %v599 = vxor.u32 %v581, 2147483648
        %v600 = vxor.u32 %v584, 2147483648
        %v601 = vxor.u32 %v587, 2147483648
        %v602 = vxor.u32 %v590, 2147483648
        %v603 = vxor.u32 %v593, 2147483648
        %v604 = vxor.u32 %v596, 2147483648
        %v605 = vmul.f32 %v597, 1.442695
        %v606 = vpow.pop %v605
        %v607 = vmul.f32 %v598, 1.442695
        %v608 = vpow.pop %v607
        %v609 = vmul.f32 %v599, 1.442695
        %v610 = vpow.pop %v609
        %v611 = vmul.f32 %v600, 1.442695
        %v612 = vpow.pop %v611
        %v613 = vmul.f32 %v601, 1.442695
        %v614 = vpow.pop %v613
        %v615 = vmul.f32 %v602, 1.442695
        %v616 = vpow.pop %v615
        %v617 = vmul.f32 %v603, 1.442695
        %v618 = vpow.pop %v617
        %v619 = vmul.f32 %v604, 1.442695
        %v620 = vpow.pop %v619
        %v621 = vadd.f32 %v606, 1.0
        %v622 = vadd.f32 %v608, 1.0
        %v623 = vadd.f32 %v610, 1.0
        %v624 = vadd.f32 %v612, 1.0
        %v625 = vadd.f32 %v614, 1.0
        %v626 = vadd.f32 %v616, 1.0
        %v627 = vadd.f32 %v618, 1.0
        %v628 = vadd.f32 %v620, 1.0
        %v629 = vrcp.pop %v621
        %v630 = vmul.f32 %v621, %v629
        %v631 = vsub.f32 1.0, %v630
        %v632 = vmul.f32 %v629, %v631
        %v633 = vadd.f32 %v629, %v632
        %vm634 = vweird.f32 %v621
        %vm635 = vweird.f32 %v629
        %vm636 = vmor %vm634, %vm635
        %v637 = vsel %vm636, %v629, %v633
        %v638 = vand.u32 2147483647, %v621
        %vm639 = vcmp.eq.f32.partialorder %v638, 8.507059e+37
        %v640 = vand.u32 %v621, 2147483648
        %v641 = vor.u32 1.1754944e-38, %v640
        %v642 = vsel %vm639, %v641, %v637
        %v643 = vmul.f32 1.0, %v642
        %v644 = vrcp.pop %v622
        %v645 = vmul.f32 %v622, %v644
        %v646 = vsub.f32 1.0, %v645
        %v647 = vmul.f32 %v644, %v646
        %v648 = vadd.f32 %v644, %v647
        %vm649 = vweird.f32 %v622
        %vm650 = vweird.f32 %v644
        %vm651 = vmor %vm649, %vm650
        %v652 = vsel %vm651, %v644, %v648
        %v653 = vand.u32 2147483647, %v622
        %vm654 = vcmp.eq.f32.partialorder %v653, 8.507059e+37
        %v655 = vand.u32 %v622, 2147483648
        %v656 = vor.u32 1.1754944e-38, %v655
        %v657 = vsel %vm654, %v656, %v652
        %v658 = vmul.f32 1.0, %v657
        %v659 = vrcp.pop %v623
        %v660 = vmul.f32 %v623, %v659
        %v661 = vsub.f32 1.0, %v660
        %v662 = vmul.f32 %v659, %v661
        %v663 = vadd.f32 %v659, %v662
        %vm664 = vweird.f32 %v623
        %vm665 = vweird.f32 %v659
        %vm666 = vmor %vm664, %vm665
        %v667 = vsel %vm666, %v659, %v663
        %v668 = vand.u32 2147483647, %v623
        %vm669 = vcmp.eq.f32.partialorder %v668, 8.507059e+37
        %v670 = vand.u32 %v623, 2147483648
        %v671 = vor.u32 1.1754944e-38, %v670
        %v672 = vsel %vm669, %v671, %v667
        %v673 = vmul.f32 1.0, %v672
        %v674 = vrcp.pop %v624
        %v675 = vmul.f32 %v624, %v674
        %v676 = vsub.f32 1.0, %v675
        %v677 = vmul.f32 %v674, %v676
        %v678 = vadd.f32 %v674, %v677
        %vm679 = vweird.f32 %v624
        %vm680 = vweird.f32 %v674
        %vm681 = vmor %vm679, %vm680
        %v682 = vsel %vm681, %v674, %v678
        %v683 = vand.u32 2147483647, %v624
        %vm684 = vcmp.eq.f32.partialorder %v683, 8.507059e+37
        %v685 = vand.u32 %v624, 2147483648
        %v686 = vor.u32 1.1754944e-38, %v685
        %v687 = vsel %vm684, %v686, %v682
        %v688 = vmul.f32 1.0, %v687
        %v689 = vrcp.pop %v625
        %v690 = vmul.f32 %v625, %v689
        %v691 = vsub.f32 1.0, %v690
        %v692 = vmul.f32 %v689, %v691
        %v693 = vadd.f32 %v689, %v692
        %vm694 = vweird.f32 %v625
        %vm695 = vweird.f32 %v689
        %vm696 = vmor %vm694, %vm695
        %v697 = vsel %vm696, %v689, %v693
        %v698 = vand.u32 2147483647, %v625
        %vm699 = vcmp.eq.f32.partialorder %v698, 8.507059e+37
        %v700 = vand.u32 %v625, 2147483648
        %v701 = vor.u32 1.1754944e-38, %v700
        %v702 = vsel %vm699, %v701, %v697
        %v703 = vmul.f32 1.0, %v702
        %v704 = vrcp.pop %v626
        %v705 = vmul.f32 %v626, %v704
        %v706 = vsub.f32 1.0, %v705
        %v707 = vmul.f32 %v704, %v706
        %v708 = vadd.f32 %v704, %v707
        %vm709 = vweird.f32 %v626
        %vm710 = vweird.f32 %v704
        %vm711 = vmor %vm709, %vm710
        %v712 = vsel %vm711, %v704, %v708
        %v713 = vand.u32 2147483647, %v626
        %vm714 = vcmp.eq.f32.partialorder %v713, 8.507059e+37
        %v715 = vand.u32 %v626, 2147483648
        %v716 = vor.u32 1.1754944e-38, %v715
        %v717 = vsel %vm714, %v716, %v712
        %v718 = vmul.f32 1.0, %v717
        %v719 = vrcp.pop %v627
        %v720 = vmul.f32 %v627, %v719
        %v721 = vsub.f32 1.0, %v720
        %v722 = vmul.f32 %v719, %v721
        %v723 = vadd.f32 %v719, %v722
        %vm724 = vweird.f32 %v627
        %vm725 = vweird.f32 %v719
        %vm726 = vmor %vm724, %vm725
        %v727 = vsel %vm726, %v719, %v723
        %v728 = vand.u32 2147483647, %v627
        %vm729 = vcmp.eq.f32.partialorder %v728, 8.507059e+37
        %v730 = vand.u32 %v627, 2147483648
        %v731 = vor.u32 1.1754944e-38, %v730
        %v732 = vsel %vm729, %v731, %v727
        %v733 = vmul.f32 1.0, %v732
        %v734 = vrcp.pop %v628
        %v735 = vmul.f32 %v628, %v734
        %v736 = vsub.f32 1.0, %v735
        %v737 = vmul.f32 %v734, %v736
        %v738 = vadd.f32 %v734, %v737
        %vm739 = vweird.f32 %v628
        %vm740 = vweird.f32 %v734
        %vm741 = vmor %vm739, %vm740
        %v742 = vsel %vm741, %v734, %v738
        %v743 = vand.u32 2147483647, %v628
        %vm744 = vcmp.eq.f32.partialorder %v743, 8.507059e+37
        %v745 = vand.u32 %v628, 2147483648
        %v746 = vor.u32 1.1754944e-38, %v745
        %v747 = vsel %vm744, %v746, %v742
        %v748 = vmul.f32 1.0, %v747
        %749 = vst.msk [vmem:[%s198] sm:$0xff] %vm402, %v643
        %750 = vst.msk [vmem:[%s198 + $0x8] sm:$0xff] %vm402, %v658
        %751 = vst.msk [vmem:[%s198 + $0x10] sm:$0xff] %vm402, %v673
        %752 = vst.msk [vmem:[%s198 + $0x18] sm:$0xff] %vm402, %v688
        %753 = vst.msk [vmem:[%s198 + $0x20] sm:$0xff] %vm402, %v703
        %754 = vst.msk [vmem:[%s198 + $0x28] sm:$0xff] %vm402, %v718
        %755 = vst.msk [vmem:[%s198 + $0x30] sm:$0xff] %vm402, %v733
        %756 = vst.msk [vmem:[%s198 + $0x38] sm:$0xff] %vm402, %v748
      $region44: #{cbam_forward.4} parent=31 // pred_fallthru
        _
      %p757 = scmp.lt.s32.totalorder %s18, 1
      %s758 = scalar_select %p757, %s18, 1
      %s759 = smul.addr %s758, 8
      %s760 = smul.addr %s759, 8
      %s761 = scalar_lea.vmem %s3, %s760
      // Predicated region
      $region45: #{cbam_forward.4} parent=31 // pred_check
        %p762 = pneg %p114
      $region46: #{cbam_forward.4} parent=31 // pred_check_branch
        %764 = sbr.rel (%p762) target = $region48
      $region47: #{cbam_forward.4} parent=31 // pred_region
        _
      $region48: #{cbam_forward.4} parent=31 // pred_fallthru
        _
    $region32: #{cbam_forward.4} parent=5 // pred_fallthru
      _
    %p765 = scmp.le.s32.totalorder 2, %s9
    // Predicated region
    $region49: #{cbam_forward.4} parent=5 // pred_check
      %p766 = pneg %p765
    $region50: #{cbam_forward.4} parent=5 // pred_check_branch
      %768 = sbr.rel (%p766) target = $region52
    $region51: #{cbam_forward.4} parent=5 // pred_region
      %s769 = ssub.s32 %s9, 2
      // Predicated region
      $region53: #{cbam_forward.4} parent=51 // pred_check
        %p770 = pneg %p120
      $region54: #{cbam_forward.4} parent=51 // pred_check_branch
        %772 = sbr.rel (%p770) target = $region56
      $region55: #{cbam_forward.4} parent=51 // pred_region
        %p773 = scmp.lt.s32.totalorder %s20, 1
        %s774 = scalar_select %p773, %s20, 1
        %s775 = smul.addr %s774, 8
        %s776 = smul.addr %s775, 8
        %s777 = scalar_lea.vmem %s3, %s776
      $region56: #{cbam_forward.4} parent=51 // pred_fallthru
        _
    $region52: #{cbam_forward.4} parent=5 // pred_fallthru
      _
  $region6: #{cbam_forward.4} parent=0 // loop_footer
    %s13 = sadd.s32 1, %s9
  $region7: #{cbam_forward.4} parent=0 // loop_footer_branch
    %8 = sbr.rel target = $region3
  $region8: #{cbam_forward.4} parent=0 // loop_exit
    _

// kernel: cbam_forward.6
$region0: #{cbam_forward.6}
  #allocation0 [shape = 'u32[]', space=smem, size = 0x4, offset = 0x4, fixed_abs, tag = 'smem constant byte address 0x4 - core index']
  #allocation1 [shape = 'u32[72,128]{1,0:T(1,128)}', space=vmem, size = 0x9000, scoped, tag = 'internal scratch']
  %s0 = inlined_call_operand.vmem [shape: f32[2,2,22,22], index: 0, kind: input, shape index: {}]
  %s1 = inlined_call_operand.vmem [shape: f32[98], index: 1, kind: input, shape index: {}]
  %s2 = inlined_call_operand.vmem [shape: f32[2,16,16], index: 2, kind: output, shape index: {}]
  %s3 = sld [smem:[#allocation0]]
  $region45: #{cbam_forward.6} parent=0
    _
  %s5 = ssub.s32 1, %s3
  %s6 = scalar_select 0, %s5, %s3
  $region1: #{cbam_forward.6} parent=0
    #allocation2 [shape = 'u8[512]{0}', space=smem, size = 0x200, scoped, tag = 'input window, operand 1, single buffered']
    #allocation3 [shape = 's32[2]{0}', space=sflag, size = 0x8, scoped, tag = 'scoped memory for cbam_forward.6']
    %7 = vsyncpa [#allocation3], 0
    loop: start=0, step=1, limit=4
    $region2: #{cbam_forward.6} parent=1 // loop_pre_header
      _
    $region3: #{cbam_forward.6} parent=1 // loop_header
      %s9 = sphi 0, %s13
      %p10 = scmp.ge.s32.totalorder %s9, 4
      %s19 = sphi 0, %s21
      %s22 = sphi 0, %s19
      %s23 = sphi 0, %s22
      %s39 = sphi 0, %s23
      %s43 = sphi 0, %s43
      %s45 = sphi 0, %s43
      %s46 = sphi 0, %s45
      %s60 = sphi 0, %s46
      %s66 = sphi 0, %s68
      %s69 = sphi 0, %s66
      %s70 = sphi 0, %s69
      %s86 = sphi 0, %s70
    $region4: #{cbam_forward.6} parent=1 // loop_header_branch
      %12 = sbr.rel (%p10) target = $region8
    $region5: #{cbam_forward.6} parent=1 // loop_body
      %s14 = ssub.s32 %s9, 1
      %s15 = ssub.s32 %s9, 2
      %s16 = sadd.s32 %s9, 1
      %s17 = ssub.s32 %s9, %s16
      %p18 = scmp.eq.s32.totalorder %s17, 0
      %s20 = sadd.s32 %s19, 1
      %s21 = scalar_select %p18, %s19, %s20
      %p24 = pneg %p18
      %p25 = scmp.eq.s32.totalorder %s9, 1
      %p26 = por %p24, %p25
      %p27 = scmp.ne.s32.totalorder %s19, %s22
      %p28 = scmp.eq.s32.totalorder %s9, 0
      %p29 = por %p27, %p28
      %p30 = scmp.ne.s32.totalorder %s19, %s22
      %p31 = scmp.eq.s32.totalorder %s14, 1
      %p32 = por %p30, %p31
      %p33 = scmp.ne.s32.totalorder %s22, %s23
      %p34 = scmp.eq.s32.totalorder %s14, 0
      %p35 = por %p33, %p34
      %p36 = scmp.ne.s32.totalorder %s22, %s23
      %p37 = scmp.eq.s32.totalorder %s15, 1
      %p38 = por %p36, %p37
      %p40 = scmp.ne.s32.totalorder %s23, %s39
      %p41 = scmp.eq.s32.totalorder %s15, 0
      %p42 = por %p40, %p41
      %s44 = sadd.s32 %s43, 1
      %p47 = scmp.eq.s32.totalorder %s9, 1
      %p48 = scmp.ne.s32.totalorder %s43, %s45
      %p49 = scmp.eq.s32.totalorder %s9, 0
      %p50 = por %p48, %p49
      %p51 = scmp.ne.s32.totalorder %s43, %s45
      %p52 = scmp.eq.s32.totalorder %s14, 1
      %p53 = por %p51, %p52
      %p54 = scmp.ne.s32.totalorder %s45, %s46
      %p55 = scmp.eq.s32.totalorder %s14, 0
      %p56 = por %p54, %p55
      %p57 = scmp.ne.s32.totalorder %s45, %s46
      %p58 = scmp.eq.s32.totalorder %s15, 1
      %p59 = por %p57, %p58
      %p61 = scmp.ne.s32.totalorder %s46, %s60
      %p62 = scmp.eq.s32.totalorder %s15, 0
      %p63 = por %p61, %p62
      %s64 = ssub.s32 %s9, %s16
      %p65 = scmp.eq.s32.totalorder %s64, 0
      %s67 = sadd.s32 %s66, 1
      %s68 = scalar_select %p65, %s66, %s67
      %p71 = pneg %p65
      %p72 = scmp.eq.s32.totalorder %s9, 1
      %p73 = por %p71, %p72
      %p74 = scmp.ne.s32.totalorder %s66, %s69
      %p75 = scmp.eq.s32.totalorder %s9, 0
      %p76 = por %p74, %p75
      %p77 = scmp.ne.s32.totalorder %s66, %s69
      %p78 = scmp.eq.s32.totalorder %s14, 1
      %p79 = por %p77, %p78
      %p80 = scmp.ne.s32.totalorder %s69, %s70
      %p81 = scmp.eq.s32.totalorder %s14, 0
      %p82 = por %p80, %p81
      %p83 = scmp.ne.s32.totalorder %s69, %s70
      %p84 = scmp.eq.s32.totalorder %s15, 1
      %p85 = por %p83, %p84
      %p87 = scmp.ne.s32.totalorder %s70, %s86
      %p88 = scmp.eq.s32.totalorder %s15, 0
      %p89 = por %p87, %p88
      %p90 = scmp.le.s32.totalorder 1, %s9
      %p91 = scmp.lt.s32.totalorder %s9, 3
      %p92 = pnand %p90, %p91
      %p93 = pneg %p92
      // Predicated region
      $region9: #{cbam_forward.6} parent=5 // pred_check
        _
      $region10: #{cbam_forward.6} parent=5 // pred_check_branch
        %95 = sbr.rel (%p92) target = $region12
      $region11: #{cbam_forward.6} parent=5 // pred_region
        %s96 = ssub.s32 %s9, 1
        // Predicated region
        $region13: #{cbam_forward.6} parent=11 // pred_check
          %p97 = pneg %p56
        $region14: #{cbam_forward.6} parent=11 // pred_check_branch
          %99 = sbr.rel (%p97) target = $region16
        $region15: #{cbam_forward.6} parent=11 // pred_region
          %101 = vsyncadd [#allocation3], 0
          %s103 = sshll.u32 %s1, 4
          %s104 = int_to_ptr.vmem [resolvable:$true] %s103
          %106 = dma.vmem_to_smem %s104, 16, [#allocation2], [#allocation3]
        $region16: #{cbam_forward.6} parent=11 // pred_fallthru
          _
      $region12: #{cbam_forward.6} parent=5 // pred_fallthru
        _
      %p107 = scmp.lt.s32.totalorder %s9, 2
      // Predicated region
      $region17: #{cbam_forward.6} parent=5 // pred_check
        %p108 = pneg %p107
      $region18: #{cbam_forward.6} parent=5 // pred_check_branch
        %110 = sbr.rel (%p108) target = $region20
      $region19: #{cbam_forward.6} parent=5 // pred_region
        // Predicated region
        $region21: #{cbam_forward.6} parent=19 // pred_check
          %p111 = pneg %p29
        $region22: #{cbam_forward.6} parent=19 // pred_check_branch
          %113 = sbr.rel (%p111) target = $region24
        $region23: #{cbam_forward.6} parent=19 // pred_region
          %p114 = scmp.lt.s32.totalorder %s9, 1
          %s115 = scalar_select %p114, %s9, 1
          %s116 = smul.addr %s115, 6
          %s117 = smul.addr %s116, 8
          %s118 = scalar_lea.vmem %s0, %s117
        $region24: #{cbam_forward.6} parent=19 // pred_fallthru
          _
      $region20: #{cbam_forward.6} parent=5 // pred_fallthru
        _
      %p119 = scmp.le.s32.totalorder 1, %s9
      %p120 = scmp.lt.s32.totalorder %s9, 3
      %p121 = pnand %p119, %p120
      %p122 = pneg %p121
      // Predicated region
      $region25: #{cbam_forward.6} parent=5 // pred_check
        _
      $region26: #{cbam_forward.6} parent=5 // pred_check_branch
        %124 = sbr.rel (%p121) target = $region28
      $region27: #{cbam_forward.6} parent=5 // pred_region
        %s125 = ssub.s32 %s9, 1
        // Predicated region
        $region29: #{cbam_forward.6} parent=27 // pred_check
          %p126 = pneg %p56
        $region30: #{cbam_forward.6} parent=27 // pred_check_branch
          %128 = sbr.rel (%p126) target = $region32
        $region31: #{cbam_forward.6} parent=27 // pred_region
          %130 = dma.done [#allocation3], 16
        $region32: #{cbam_forward.6} parent=27 // pred_fallthru
          _
        %131 = sfence
        %p132 = scmp.lt.s32.totalorder %s14, 1
        %s133 = scalar_select %p132, %s14, 1
        %s134 = smul.addr %s133, 6
        %s135 = smul.addr %s134, 8
        %s136 = scalar_lea.vmem %s0, %s135
        %p137 = pneg %p35
        %p138 = pneg %p32
        %p139 = pneg %p56
        %p140 = pneg %p53
        %p141 = pneg %p82
        %p142 = pneg %p79
        %p143 = scmp.lt.s32.totalorder %s14, 1
        %s144 = scalar_select %p143, %s14, 1
        %s145 = smul.addr %s144, 2
        %s146 = smul.addr %s145, 8
        %s147 = scalar_lea.vmem %s2, %s146
        %p148 = scmp.lt.s32.totalorder %s14, 1
        %s149 = scalar_select %p148, %s14, 1
        %s150 = smul.addr %s149, 6
        %s151 = smul.addr %s150, 8
        %s152 = scalar_lea.vmem %s0, %s151
        %p153 = scmp.lt.s32.totalorder %s14, 1
        %s154 = scalar_select %p153, %s14, 1
        %s155 = smul.addr %s154, 2
        %s156 = smul.addr %s155, 8
        %s157 = scalar_lea.vmem %s2, %s156
        %s158 = sld [smem:[#allocation2]]
        %v159 = vld [vmem:[%s152] sm:$0xff]
        %v160 = vld [vmem:[%s152 + $0x8] sm:$0xff]
        %v161 = vstv %s158
        %v162 = vmul.f32 %v161, %v159
        %v163 = vmul.f32 %v161, %v160
        %v164 = vadd.f32 %v162, 0.0
        %v165 = vadd.f32 %v163, 0.0
        %s166 = sld [smem:[#allocation2 + $0x1]]
        %v167 = vstv %s166
        %v168 = vmul.f32 %v167, %v159
        %v169 = vmul.f32 %v167, %v160
        %172 = vrot.lane.b32.xlu0 %v168, 127
        %v173 = vpop.permute.xlu0 %172
        %174 = vrot.lane.b32.xlu0 %v169, 127
        %v175 = vpop.permute.xlu0 %174
        %v178 = vadd.f32 %v164, %v173
        %v179 = vadd.f32 %v165, %v175
        %s180 = sld [smem:[#allocation2 + $0x2]]
        %v181 = vstv %s180
        %v182 = vmul.f32 %v181, %v159
        %v183 = vmul.f32 %v181, %v160
        %186 = vrot.lane.b32.xlu0 %v182, 126
        %v187 = vpop.permute.xlu0 %186
        %188 = vrot.lane.b32.xlu0 %v183, 126
        %v189 = vpop.permute.xlu0 %188
        %v192 = vadd.f32 %v178, %v187
        %v193 = vadd.f32 %v179, %v189
        %s194 = sld [smem:[#allocation2 + $0x3]]
        %v195 = vstv %s194
        %v196 = vmul.f32 %v195, %v159
        %v197 = vmul.f32 %v195, %v160
        %200 = vrot.lane.b32.xlu0 %v196, 125
        %v201 = vpop.permute.xlu0 %200
        %202 = vrot.lane.b32.xlu0 %v197, 125
        %v203 = vpop.permute.xlu0 %202
        %v206 = vadd.f32 %v192, %v201
        %v207 = vadd.f32 %v193, %v203
        %s208 = sld [smem:[#allocation2 + $0x4]]
        %v209 = vstv %s208
        %v210 = vmul.f32 %v209, %v159
        %v211 = vmul.f32 %v209, %v160
        %214 = vrot.lane.b32.xlu0 %v210, 124
        %v215 = vpop.permute.xlu0 %214
        %216 = vrot.lane.b32.xlu0 %v211, 124
        %v217 = vpop.permute.xlu0 %216
        %v220 = vadd.f32 %v206, %v215
        %v221 = vadd.f32 %v207, %v217
        %s222 = sld [smem:[#allocation2 + $0x5]]
        %v223 = vstv %s222
        %v224 = vmul.f32 %v223, %v159
        %v225 = vmul.f32 %v223, %v160
        %228 = vrot.lane.b32.xlu0 %v224, 123
        %v229 = vpop.permute.xlu0 %228
        %230 = vrot.lane.b32.xlu0 %v225, 123
        %v231 = vpop.permute.xlu0 %230
        %v234 = vadd.f32 %v220, %v229
        %v235 = vadd.f32 %v221, %v231
        %s236 = sld [smem:[#allocation2 + $0x6]]
        %v237 = vstv %s236
        %v238 = vmul.f32 %v237, %v159
        %v239 = vmul.f32 %v237, %v160
        %242 = vrot.lane.b32.xlu0 %v238, 122
        %v243 = vpop.permute.xlu0 %242
        %244 = vrot.lane.b32.xlu0 %v239, 122
        %v245 = vpop.permute.xlu0 %244
        %v248 = vadd.f32 %v234, %v243
        %v249 = vadd.f32 %v235, %v245
        %s250 = sld [smem:[#allocation2 + $0x7]]
        %v251 = vld [vmem:[%s152 + $0x1] sm:$0xff]
        %v252 = vld [vmem:[%s152 + $0x9] sm:$0xff]
        %v253 = vstv %s250
        %v254 = vmul.f32 %v253, %v251
        %v255 = vmul.f32 %v253, %v252
        %v256 = vadd.f32 %v248, %v254
        %v257 = vadd.f32 %v249, %v255
        %s258 = sld [smem:[#allocation2 + $0x8]]
        %v259 = vstv %s258
        %v260 = vmul.f32 %v259, %v251
        %v261 = vmul.f32 %v259, %v252
        %264 = vrot.lane.b32.xlu0 %v260, 127
        %v265 = vpop.permute.xlu0 %264
        %266 = vrot.lane.b32.xlu0 %v261, 127
        %v267 = vpop.permute.xlu0 %266
        %v270 = vadd.f32 %v256, %v265
        %v271 = vadd.f32 %v257, %v267
        %s272 = sld [smem:[#allocation2 + $0x9]]
        %v273 = vstv %s272
        %v274 = vmul.f32 %v273, %v251
        %v275 = vmul.f32 %v273, %v252
        %278 = vrot.lane.b32.xlu0 %v274, 126
        %v279 = vpop.permute.xlu0 %278
        %280 = vrot.lane.b32.xlu0 %v275, 126
        %v281 = vpop.permute.xlu0 %280
        %v284 = vadd.f32 %v270, %v279
        %v285 = vadd.f32 %v271, %v281
        %s286 = sld [smem:[#allocation2 + $0xa]]
        %v287 = vstv %s286
        %v288 = vmul.f32 %v287, %v251
        %v289 = vmul.f32 %v287, %v252
        %292 = vrot.lane.b32.xlu0 %v288, 125
        %v293 = vpop.permute.xlu0 %292
        %294 = vrot.lane.b32.xlu0 %v289, 125
        %v295 = vpop.permute.xlu0 %294
        %v298 = vadd.f32 %v284, %v293
        %v299 = vadd.f32 %v285, %v295
        %s300 = sld [smem:[#allocation2 + $0xb]]
        %v301 = vstv %s300
        %v302 = vmul.f32 %v301, %v251
        %v303 = vmul.f32 %v301, %v252
        %306 = vrot.lane.b32.xlu0 %v302, 124
        %v307 = vpop.permute.xlu0 %306
        %308 = vrot.lane.b32.xlu0 %v303, 124
        %v309 = vpop.permute.xlu0 %308
        %v312 = vadd.f32 %v298, %v307
        %v313 = vadd.f32 %v299, %v309
        %s314 = sld [smem:[#allocation2 + $0xc]]
        %v315 = vstv %s314
        %v316 = vmul.f32 %v315, %v251
        %v317 = vmul.f32 %v315, %v252
        %320 = vrot.lane.b32.xlu0 %v316, 123
        %v321 = vpop.permute.xlu0 %320
        %322 = vrot.lane.b32.xlu0 %v317, 123
        %v323 = vpop.permute.xlu0 %322
        %v326 = vadd.f32 %v312, %v321
        %v327 = vadd.f32 %v313, %v323
        %s328 = sld [smem:[#allocation2 + $0xd]]
        %v329 = vstv %s328
        %v330 = vmul.f32 %v329, %v251
        %v331 = vmul.f32 %v329, %v252
        %334 = vrot.lane.b32.xlu0 %v330, 122
        %v335 = vpop.permute.xlu0 %334
        %336 = vrot.lane.b32.xlu0 %v331, 122
        %v337 = vpop.permute.xlu0 %336
        %v340 = vadd.f32 %v326, %v335
        %v341 = vadd.f32 %v327, %v337
        %s342 = sld [smem:[#allocation2 + $0xe]]
        %v343 = vld [vmem:[%s152 + $0x2] sm:$0xff]
        %v344 = vld [vmem:[%s152 + $0xa] sm:$0xff]
        %v345 = vstv %s342
        %v346 = vmul.f32 %v345, %v343
        %v347 = vmul.f32 %v345, %v344
        %v348 = vadd.f32 %v340, %v346
        %v349 = vadd.f32 %v341, %v347
        %s350 = sld [smem:[#allocation2 + $0xf]]
        %v351 = vstv %s350
        %v352 = vmul.f32 %v351, %v343
        %v353 = vmul.f32 %v351, %v344
        %356 = vrot.lane.b32.xlu0 %v352, 127
        %v357 = vpop.permute.xlu0 %356
        %358 = vrot.lane.b32.xlu0 %v353, 127
        %v359 = vpop.permute.xlu0 %358
        %v362 = vadd.f32 %v348, %v357
        %v363 = vadd.f32 %v349, %v359
        %s364 = sld [smem:[#allocation2 + $0x10]]
        %v365 = vstv %s364
        %v366 = vmul.f32 %v365, %v343
        %v367 = vmul.f32 %v365, %v344
        %370 = vrot.lane.b32.xlu0 %v366, 126
        %v371 = vpop.permute.xlu0 %370
        %372 = vrot.lane.b32.xlu0 %v367, 126
        %v373 = vpop.permute.xlu0 %372
        %v376 = vadd.f32 %v362, %v371
        %v377 = vadd.f32 %v363, %v373
        %s378 = sld [smem:[#allocation2 + $0x11]]
        %v379 = vstv %s378
        %v380 = vmul.f32 %v379, %v343
        %v381 = vmul.f32 %v379, %v344
        %384 = vrot.lane.b32.xlu0 %v380, 125
        %v385 = vpop.permute.xlu0 %384
        %386 = vrot.lane.b32.xlu0 %v381, 125
        %v387 = vpop.permute.xlu0 %386
        %v390 = vadd.f32 %v376, %v385
        %v391 = vadd.f32 %v377, %v387
        %s392 = sld [smem:[#allocation2 + $0x12]]
        %v393 = vstv %s392
        %v394 = vmul.f32 %v393, %v343
        %v395 = vmul.f32 %v393, %v344
        %398 = vrot.lane.b32.xlu0 %v394, 124
        %v399 = vpop.permute.xlu0 %398
        %400 = vrot.lane.b32.xlu0 %v395, 124
        %v401 = vpop.permute.xlu0 %400
        %v404 = vadd.f32 %v390, %v399
        %v405 = vadd.f32 %v391, %v401
        %s406 = sld [smem:[#allocation2 + $0x13]]
        %v407 = vstv %s406
        %v408 = vmul.f32 %v407, %v343
        %v409 = vmul.f32 %v407, %v344
        %412 = vrot.lane.b32.xlu0 %v408, 123
        %v413 = vpop.permute.xlu0 %412
        %414 = vrot.lane.b32.xlu0 %v409, 123
        %v415 = vpop.permute.xlu0 %414
        %v418 = vadd.f32 %v404, %v413
        %v419 = vadd.f32 %v405, %v415
        %s420 = sld [smem:[#allocation2 + $0x14]]
        %v421 = vstv %s420
        %v422 = vmul.f32 %v421, %v343
        %v423 = vmul.f32 %v421, %v344
        %426 = vrot.lane.b32.xlu0 %v422, 122
        %v427 = vpop.permute.xlu0 %426
        %428 = vrot.lane.b32.xlu0 %v423, 122
        %v429 = vpop.permute.xlu0 %428
        %v432 = vadd.f32 %v418, %v427
        %v433 = vadd.f32 %v419, %v429
        %s434 = sld [smem:[#allocation2 + $0x15]]
        %v435 = vld [vmem:[%s152 + $0x3] sm:$0xff]
        %v436 = vld [vmem:[%s152 + $0xb] sm:$0xff]
        %v437 = vstv %s434
        %v438 = vmul.f32 %v437, %v435
        %v439 = vmul.f32 %v437, %v436
        %v440 = vadd.f32 %v432, %v438
        %v441 = vadd.f32 %v433, %v439
        %s442 = sld [smem:[#allocation2 + $0x16]]
        %v443 = vstv %s442
        %v444 = vmul.f32 %v443, %v435
        %v445 = vmul.f32 %v443, %v436
        %448 = vrot.lane.b32.xlu0 %v444, 127
        %v449 = vpop.permute.xlu0 %448
        %450 = vrot.lane.b32.xlu0 %v445, 127
        %v451 = vpop.permute.xlu0 %450
        %v454 = vadd.f32 %v440, %v449
        %v455 = vadd.f32 %v441, %v451
        %s456 = sld [smem:[#allocation2 + $0x17]]
        %v457 = vstv %s456
        %v458 = vmul.f32 %v457, %v435
        %v459 = vmul.f32 %v457, %v436
        %462 = vrot.lane.b32.xlu0 %v458, 126
        %v463 = vpop.permute.xlu0 %462
        %464 = vrot.lane.b32.xlu0 %v459, 126
        %v465 = vpop.permute.xlu0 %464
        %v468 = vadd.f32 %v454, %v463
        %v469 = vadd.f32 %v455, %v465
        %s470 = sld [smem:[#allocation2 + $0x18]]
        %v471 = vstv %s470
        %v472 = vmul.f32 %v471, %v435
        %v473 = vmul.f32 %v471, %v436
        %476 = vrot.lane.b32.xlu0 %v472, 125
        %v477 = vpop.permute.xlu0 %476
        %478 = vrot.lane.b32.xlu0 %v473, 125
        %v479 = vpop.permute.xlu0 %478
        %v482 = vadd.f32 %v468, %v477
        %v483 = vadd.f32 %v469, %v479
        %s484 = sld [smem:[#allocation2 + $0x19]]
        %v485 = vstv %s484
        %v486 = vmul.f32 %v485, %v435
        %v487 = vmul.f32 %v485, %v436
        %490 = vrot.lane.b32.xlu0 %v486, 124
        %v491 = vpop.permute.xlu0 %490
        %492 = vrot.lane.b32.xlu0 %v487, 124
        %v493 = vpop.permute.xlu0 %492
        %v496 = vadd.f32 %v482, %v491
        %v497 = vadd.f32 %v483, %v493
        %s498 = sld [smem:[#allocation2 + $0x1a]]
        %v499 = vstv %s498
        %v500 = vmul.f32 %v499, %v435
        %v501 = vmul.f32 %v499, %v436
        %504 = vrot.lane.b32.xlu0 %v500, 123
        %v505 = vpop.permute.xlu0 %504
        %506 = vrot.lane.b32.xlu0 %v501, 123
        %v507 = vpop.permute.xlu0 %506
        %v510 = vadd.f32 %v496, %v505
        %v511 = vadd.f32 %v497, %v507
        %s512 = sld [smem:[#allocation2 + $0x1b]]
        %v513 = vstv %s512
        %v514 = vmul.f32 %v513, %v435
        %v515 = vmul.f32 %v513, %v436
        %518 = vrot.lane.b32.xlu0 %v514, 122
        %v519 = vpop.permute.xlu0 %518
        %520 = vrot.lane.b32.xlu0 %v515, 122
        %v521 = vpop.permute.xlu0 %520
        %v524 = vadd.f32 %v510, %v519
        %v525 = vadd.f32 %v511, %v521
        %s526 = sld [smem:[#allocation2 + $0x1c]]
        %v527 = vld [vmem:[%s152 + $0x4] sm:$0xff]
        %v528 = vld [vmem:[%s152 + $0xc] sm:$0xff]
        %v529 = vstv %s526
        %v530 = vmul.f32 %v529, %v527
        %v531 = vmul.f32 %v529, %v528
        %v532 = vadd.f32 %v524, %v530
        %v533 = vadd.f32 %v525, %v531
        %s534 = sld [smem:[#allocation2 + $0x1d]]
        %v535 = vstv %s534
        %v536 = vmul.f32 %v535, %v527
        %v537 = vmul.f32 %v535, %v528
        %540 = vrot.lane.b32.xlu0 %v536, 127
        %v541 = vpop.permute.xlu0 %540
        %542 = vrot.lane.b32.xlu0 %v537, 127
        %v543 = vpop.permute.xlu0 %542
        %v546 = vadd.f32 %v532, %v541
        %v547 = vadd.f32 %v533, %v543
        %s548 = sld [smem:[#allocation2 + $0x1e]]
        %v549 = vstv %s548
        %v550 = vmul.f32 %v549, %v527
        %v551 = vmul.f32 %v549, %v528
        %554 = vrot.lane.b32.xlu0 %v550, 126
        %v555 = vpop.permute.xlu0 %554
        %556 = vrot.lane.b32.xlu0 %v551, 126
        %v557 = vpop.permute.xlu0 %556
        %v560 = vadd.f32 %v546, %v555
        %v561 = vadd.f32 %v547, %v557
        %s562 = sld [smem:[#allocation2 + $0x1f]]
        %v563 = vstv %s562
        %v564 = vmul.f32 %v563, %v527
        %v565 = vmul.f32 %v563, %v528
        %568 = vrot.lane.b32.xlu0 %v564, 125
        %v569 = vpop.permute.xlu0 %568
        %570 = vrot.lane.b32.xlu0 %v565, 125
        %v571 = vpop.permute.xlu0 %570
        %v574 = vadd.f32 %v560, %v569
        %v575 = vadd.f32 %v561, %v571
        %s576 = sld [smem:[#allocation2 + $0x20]]
        %v577 = vstv %s576
        %v578 = vmul.f32 %v577, %v527
        %v579 = vmul.f32 %v577, %v528
        %582 = vrot.lane.b32.xlu0 %v578, 124
        %v583 = vpop.permute.xlu0 %582
        %584 = vrot.lane.b32.xlu0 %v579, 124
        %v585 = vpop.permute.xlu0 %584
        %v588 = vadd.f32 %v574, %v583
        %v589 = vadd.f32 %v575, %v585
        %s590 = sld [smem:[#allocation2 + $0x21]]
        %v591 = vstv %s590
        %v592 = vmul.f32 %v591, %v527
        %v593 = vmul.f32 %v591, %v528
        %596 = vrot.lane.b32.xlu0 %v592, 123
        %v597 = vpop.permute.xlu0 %596
        %598 = vrot.lane.b32.xlu0 %v593, 123
        %v599 = vpop.permute.xlu0 %598
        %v602 = vadd.f32 %v588, %v597
        %v603 = vadd.f32 %v589, %v599
        %s604 = sld [smem:[#allocation2 + $0x22]]
        %v605 = vstv %s604
        %v606 = vmul.f32 %v605, %v527
        %v607 = vmul.f32 %v605, %v528
        %610 = vrot.lane.b32.xlu0 %v606, 122
        %v611 = vpop.permute.xlu0 %610
        %612 = vrot.lane.b32.xlu0 %v607, 122
        %v613 = vpop.permute.xlu0 %612
        %v616 = vadd.f32 %v602, %v611
        %v617 = vadd.f32 %v603, %v613
        %s618 = sld [smem:[#allocation2 + $0x23]]
        %v619 = vld [vmem:[%s152 + $0x5] sm:$0xff]
        %v620 = vld [vmem:[%s152 + $0xd] sm:$0xff]
        %v621 = vstv %s618
        %v622 = vmul.f32 %v621, %v619
        %v623 = vmul.f32 %v621, %v620
        %v624 = vadd.f32 %v616, %v622
        %v625 = vadd.f32 %v617, %v623
        %s626 = sld [smem:[#allocation2 + $0x24]]
        %v627 = vstv %s626
        %v628 = vmul.f32 %v627, %v619
        %v629 = vmul.f32 %v627, %v620
        %632 = vrot.lane.b32.xlu0 %v628, 127
        %v633 = vpop.permute.xlu0 %632
        %634 = vrot.lane.b32.xlu0 %v629, 127
        %v635 = vpop.permute.xlu0 %634
        %v638 = vadd.f32 %v624, %v633
        %v639 = vadd.f32 %v625, %v635
        %s640 = sld [smem:[#allocation2 + $0x25]]
        %v641 = vstv %s640
        %v642 = vmul.f32 %v641, %v619
        %v643 = vmul.f32 %v641, %v620
        %646 = vrot.lane.b32.xlu0 %v642, 126
        %v647 = vpop.permute.xlu0 %646
        %648 = vrot.lane.b32.xlu0 %v643, 126
        %v649 = vpop.permute.xlu0 %648
        %v652 = vadd.f32 %v638, %v647
        %v653 = vadd.f32 %v639, %v649
        %s654 = sld [smem:[#allocation2 + $0x26]]
        %v655 = vstv %s654
        %v656 = vmul.f32 %v655, %v619
        %v657 = vmul.f32 %v655, %v620
        %660 = vrot.lane.b32.xlu0 %v656, 125
        %v661 = vpop.permute.xlu0 %660
        %662 = vrot.lane.b32.xlu0 %v657, 125
        %v663 = vpop.permute.xlu0 %662
        %v666 = vadd.f32 %v652, %v661
        %v667 = vadd.f32 %v653, %v663
        %s668 = sld [smem:[#allocation2 + $0x27]]
        %v669 = vstv %s668
        %v670 = vmul.f32 %v669, %v619
        %v671 = vmul.f32 %v669, %v620
        %674 = vrot.lane.b32.xlu0 %v670, 124
        %v675 = vpop.permute.xlu0 %674
        %676 = vrot.lane.b32.xlu0 %v671, 124
        %v677 = vpop.permute.xlu0 %676
        %v680 = vadd.f32 %v666, %v675
        %v681 = vadd.f32 %v667, %v677
        %s682 = sld [smem:[#allocation2 + $0x28]]
        %v683 = vstv %s682
        %v684 = vmul.f32 %v683, %v619
        %v685 = vmul.f32 %v683, %v620
        %688 = vrot.lane.b32.xlu0 %v684, 123
        %v689 = vpop.permute.xlu0 %688
        %690 = vrot.lane.b32.xlu0 %v685, 123
        %v691 = vpop.permute.xlu0 %690
        %v694 = vadd.f32 %v680, %v689
        %v695 = vadd.f32 %v681, %v691
        %s696 = sld [smem:[#allocation2 + $0x29]]
        %v697 = vstv %s696
        %v698 = vmul.f32 %v697, %v619
        %v699 = vmul.f32 %v697, %v620
        %702 = vrot.lane.b32.xlu0 %v698, 122
        %v703 = vpop.permute.xlu0 %702
        %704 = vrot.lane.b32.xlu0 %v699, 122
        %v705 = vpop.permute.xlu0 %704
        %v708 = vadd.f32 %v694, %v703
        %v709 = vadd.f32 %v695, %v705
        %s710 = sld [smem:[#allocation2 + $0x2a]]
        %v711 = vld [vmem:[%s152 + $0x6] sm:$0xff]
        %v712 = vld [vmem:[%s152 + $0xe] sm:$0xff]
        %v713 = vstv %s710
        %v714 = vmul.f32 %v713, %v711
        %v715 = vmul.f32 %v713, %v712
        %v716 = vadd.f32 %v708, %v714
        %v717 = vadd.f32 %v709, %v715
        %s718 = sld [smem:[#allocation2 + $0x2b]]
        %v719 = vstv %s718
        %v720 = vmul.f32 %v719, %v711
        %v721 = vmul.f32 %v719, %v712
        %724 = vrot.lane.b32.xlu0 %v720, 127
        %v725 = vpop.permute.xlu0 %724
        %726 = vrot.lane.b32.xlu0 %v721, 127
        %v727 = vpop.permute.xlu0 %726
        %v730 = vadd.f32 %v716, %v725
        %v731 = vadd.f32 %v717, %v727
        %s732 = sld [smem:[#allocation2 + $0x2c]]
        %v733 = vstv %s732
        %v734 = vmul.f32 %v733, %v711
        %v735 = vmul.f32 %v733, %v712
        %738 = vrot.lane.b32.xlu0 %v734, 126
        %v739 = vpop.permute.xlu0 %738
        %740 = vrot.lane.b32.xlu0 %v735, 126
        %v741 = vpop.permute.xlu0 %740
        %v744 = vadd.f32 %v730, %v739
        %v745 = vadd.f32 %v731, %v741
        %s746 = sld [smem:[#allocation2 + $0x2d]]
        %v747 = vstv %s746
        %v748 = vmul.f32 %v747, %v711
        %v749 = vmul.f32 %v747, %v712
        %752 = vrot.lane.b32.xlu0 %v748, 125
        %v753 = vpop.permute.xlu0 %752
        %754 = vrot.lane.b32.xlu0 %v749, 125
        %v755 = vpop.permute.xlu0 %754
        %v758 = vadd.f32 %v744, %v753
        %v759 = vadd.f32 %v745, %v755
        %s760 = sld [smem:[#allocation2 + $0x2e]]
        %v761 = vstv %s760
        %v762 = vmul.f32 %v761, %v711
        %v763 = vmul.f32 %v761, %v712
        %766 = vrot.lane.b32.xlu0 %v762, 124
        %v767 = vpop.permute.xlu0 %766
        %768 = vrot.lane.b32.xlu0 %v763, 124
        %v769 = vpop.permute.xlu0 %768
        %v772 = vadd.f32 %v758, %v767
        %v773 = vadd.f32 %v759, %v769
        %s774 = sld [smem:[#allocation2 + $0x2f]]
        %v775 = vstv %s774
        %v776 = vmul.f32 %v775, %v711
        %v777 = vmul.f32 %v775, %v712
        %780 = vrot.lane.b32.xlu0 %v776, 123
        %v781 = vpop.permute.xlu0 %780
        %782 = vrot.lane.b32.xlu0 %v777, 123
        %v783 = vpop.permute.xlu0 %782
        %v786 = vadd.f32 %v772, %v781
        %v787 = vadd.f32 %v773, %v783
        %s788 = sld [smem:[#allocation2 + $0x30]]
        %v789 = vstv %s788
        %v790 = vmul.f32 %v789, %v711
        %v791 = vmul.f32 %v789, %v712
        %794 = vrot.lane.b32.xlu0 %v790, 122
        %v795 = vpop.permute.xlu0 %794
        %796 = vrot.lane.b32.xlu0 %v791, 122
        %v797 = vpop.permute.xlu0 %796
        %v800 = vadd.f32 %v786, %v795
        %v801 = vadd.f32 %v787, %v797
        %s802 = sld [smem:[#allocation2 + $0x31]]
        %s803 = scalar_lea.vmem %s152, 24
        %v804 = vld [vmem:[%s803] sm:$0xff]
        %v805 = vld [vmem:[%s803 + $0x8] sm:$0xff]
        %v806 = vstv %s802
        %v807 = vmul.f32 %v806, %v804
        %v808 = vmul.f32 %v806, %v805
        %v809 = vadd.f32 %v800, %v807
        %v810 = vadd.f32 %v801, %v808
        %s811 = sld [smem:[#allocation2 + $0x32]]
        %v812 = vstv %s811
        %v813 = vmul.f32 %v812, %v804
        %v814 = vmul.f32 %v812, %v805
        %817 = vrot.lane.b32.xlu0 %v813, 127
        %v818 = vpop.permute.xlu0 %817
        %819 = vrot.lane.b32.xlu0 %v814, 127
        %v820 = vpop.permute.xlu0 %819
        %v823 = vadd.f32 %v809, %v818
        %v824 = vadd.f32 %v810, %v820
        %s825 = sld [smem:[#allocation2 + $0x33]]
        %v826 = vstv %s825
        %v827 = vmul.f32 %v826, %v804
        %v828 = vmul.f32 %v826, %v805
        %831 = vrot.lane.b32.xlu0 %v827, 126
        %v832 = vpop.permute.xlu0 %831
        %833 = vrot.lane.b32.xlu0 %v828, 126
        %v834 = vpop.permute.xlu0 %833
        %v837 = vadd.f32 %v823, %v832
        %v838 = vadd.f32 %v824, %v834
        %s839 = sld [smem:[#allocation2 + $0x34]]
        %v840 = vstv %s839
        %v841 = vmul.f32 %v840, %v804
        %v842 = vmul.f32 %v840, %v805
        %845 = vrot.lane.b32.xlu0 %v841, 125
        %v846 = vpop.permute.xlu0 %845
        %847 = vrot.lane.b32.xlu0 %v842, 125
        %v848 = vpop.permute.xlu0 %847
        %v851 = vadd.f32 %v837, %v846
        %v852 = vadd.f32 %v838, %v848
        %s853 = sld [smem:[#allocation2 + $0x35]]
        %v854 = vstv %s853
        %v855 = vmul.f32 %v854, %v804
        %v856 = vmul.f32 %v854, %v805
        %859 = vrot.lane.b32.xlu0 %v855, 124
        %v860 = vpop.permute.xlu0 %859
        %861 = vrot.lane.b32.xlu0 %v856, 124
        %v862 = vpop.permute.xlu0 %861
        %v865 = vadd.f32 %v851, %v860
        %v866 = vadd.f32 %v852, %v862
        %s867 = sld [smem:[#allocation2 + $0x36]]
        %v868 = vstv %s867
        %v869 = vmul.f32 %v868, %v804
        %v870 = vmul.f32 %v868, %v805
        %873 = vrot.lane.b32.xlu0 %v869, 123
        %v874 = vpop.permute.xlu0 %873
        %875 = vrot.lane.b32.xlu0 %v870, 123
        %v876 = vpop.permute.xlu0 %875
        %v879 = vadd.f32 %v865, %v874
        %v880 = vadd.f32 %v866, %v876
        %s881 = sld [smem:[#allocation2 + $0x37]]
        %v882 = vstv %s881
        %v883 = vmul.f32 %v882, %v804
        %v884 = vmul.f32 %v882, %v805
        %887 = vrot.lane.b32.xlu0 %v883, 122
        %v888 = vpop.permute.xlu0 %887
        %889 = vrot.lane.b32.xlu0 %v884, 122
        %v890 = vpop.permute.xlu0 %889
        %v893 = vadd.f32 %v879, %v888
        %v894 = vadd.f32 %v880, %v890
        %s895 = sld [smem:[#allocation2 + $0x38]]
        %v896 = vld [vmem:[%s803 + $0x1] sm:$0xff]
        %v897 = vld [vmem:[%s803 + $0x9] sm:$0xff]
        %v898 = vstv %s895
        %v899 = vmul.f32 %v898, %v896
        %v900 = vmul.f32 %v898, %v897
        %v901 = vadd.f32 %v893, %v899
        %v902 = vadd.f32 %v894, %v900
        %s903 = sld [smem:[#allocation2 + $0x39]]
        %v904 = vstv %s903
        %v905 = vmul.f32 %v904, %v896
        %v906 = vmul.f32 %v904, %v897
        %909 = vrot.lane.b32.xlu0 %v905, 127
        %v910 = vpop.permute.xlu0 %909
        %911 = vrot.lane.b32.xlu0 %v906, 127
        %v912 = vpop.permute.xlu0 %911
        %v915 = vadd.f32 %v901, %v910
        %v916 = vadd.f32 %v902, %v912
        %s917 = sld [smem:[#allocation2 + $0x3a]]
        %v918 = vstv %s917
        %v919 = vmul.f32 %v918, %v896
        %v920 = vmul.f32 %v918, %v897
        %923 = vrot.lane.b32.xlu0 %v919, 126
        %v924 = vpop.permute.xlu0 %923
        %925 = vrot.lane.b32.xlu0 %v920, 126
        %v926 = vpop.permute.xlu0 %925
        %v929 = vadd.f32 %v915, %v924
        %v930 = vadd.f32 %v916, %v926
        %s931 = sld [smem:[#allocation2 + $0x3b]]
        %v932 = vstv %s931
        %v933 = vmul.f32 %v932, %v896
        %v934 = vmul.f32 %v932, %v897
        %937 = vrot.lane.b32.xlu0 %v933, 125
        %v938 = vpop.permute.xlu0 %937
        %939 = vrot.lane.b32.xlu0 %v934, 125
        %v940 = vpop.permute.xlu0 %939
        %v943 = vadd.f32 %v929, %v938
        %v944 = vadd.f32 %v930, %v940
        %s945 = sld [smem:[#allocation2 + $0x3c]]
        %v946 = vstv %s945
        %v947 = vmul.f32 %v946, %v896
        %v948 = vmul.f32 %v946, %v897
        %951 = vrot.lane.b32.xlu0 %v947, 124
        %v952 = vpop.permute.xlu0 %951
        %953 = vrot.lane.b32.xlu0 %v948, 124
        %v954 = vpop.permute.xlu0 %953
        %v957 = vadd.f32 %v943, %v952
        %v958 = vadd.f32 %v944, %v954
        %s959 = sld [smem:[#allocation2 + $0x3d]]
        %v960 = vstv %s959
        %v961 = vmul.f32 %v960, %v896
        %v962 = vmul.f32 %v960, %v897
        %965 = vrot.lane.b32.xlu0 %v961, 123
        %v966 = vpop.permute.xlu0 %965
        %967 = vrot.lane.b32.xlu0 %v962, 123
        %v968 = vpop.permute.xlu0 %967
        %v971 = vadd.f32 %v957, %v966
        %v972 = vadd.f32 %v958, %v968
        %s973 = sld [smem:[#allocation2 + $0x3e]]
        %v974 = vstv %s973
        %v975 = vmul.f32 %v974, %v896
        %v976 = vmul.f32 %v974, %v897
        %979 = vrot.lane.b32.xlu0 %v975, 122
        %v980 = vpop.permute.xlu0 %979
        %981 = vrot.lane.b32.xlu0 %v976, 122
        %v982 = vpop.permute.xlu0 %981
        %v985 = vadd.f32 %v971, %v980
        %v986 = vadd.f32 %v972, %v982
        %s987 = sld [smem:[#allocation2 + $0x3f]]
        %v988 = vld [vmem:[%s803 + $0x2] sm:$0xff]
        %v989 = vld [vmem:[%s803 + $0xa] sm:$0xff]
        %v990 = vstv %s987
        %v991 = vmul.f32 %v990, %v988
        %v992 = vmul.f32 %v990, %v989
        %v993 = vadd.f32 %v985, %v991
        %v994 = vadd.f32 %v986, %v992
        %s995 = sld [smem:[#allocation2 + $0x40]]
        %v996 = vstv %s995
        %v997 = vmul.f32 %v996, %v988
        %v998 = vmul.f32 %v996, %v989
        %1001 = vrot.lane.b32.xlu0 %v997, 127
        %v1002 = vpop.permute.xlu0 %1001
        %1003 = vrot.lane.b32.xlu0 %v998, 127
        %v1004 = vpop.permute.xlu0 %1003
        %v1007 = vadd.f32 %v993, %v1002
        %v1008 = vadd.f32 %v994, %v1004
        %s1009 = sld [smem:[#allocation2 + $0x41]]
        %v1010 = vstv %s1009
        %v1011 = vmul.f32 %v1010, %v988
        %v1012 = vmul.f32 %v1010, %v989
        %1015 = vrot.lane.b32.xlu0 %v1011, 126
        %v1016 = vpop.permute.xlu0 %1015
        %1017 = vrot.lane.b32.xlu0 %v1012, 126
        %v1018 = vpop.permute.xlu0 %1017
        %v1021 = vadd.f32 %v1007, %v1016
        %v1022 = vadd.f32 %v1008, %v1018
        %s1023 = sld [smem:[#allocation2 + $0x42]]
        %v1024 = vstv %s1023
        %v1025 = vmul.f32 %v1024, %v988
        %v1026 = vmul.f32 %v1024, %v989
        %1029 = vrot.lane.b32.xlu0 %v1025, 125
        %v1030 = vpop.permute.xlu0 %1029
        %1031 = vrot.lane.b32.xlu0 %v1026, 125
        %v1032 = vpop.permute.xlu0 %1031
        %v1035 = vadd.f32 %v1021, %v1030
        %v1036 = vadd.f32 %v1022, %v1032
        %s1037 = sld [smem:[#allocation2 + $0x43]]
        %v1038 = vstv %s1037
        %v1039 = vmul.f32 %v1038, %v988
        %v1040 = vmul.f32 %v1038, %v989
        %1043 = vrot.lane.b32.xlu0 %v1039, 124
        %v1044 = vpop.permute.xlu0 %1043
        %1045 = vrot.lane.b32.xlu0 %v1040, 124
        %v1046 = vpop.permute.xlu0 %1045
        %v1049 = vadd.f32 %v1035, %v1044
        %v1050 = vadd.f32 %v1036, %v1046
        %s1051 = sld [smem:[#allocation2 + $0x44]]
        %v1052 = vstv %s1051
        %v1053 = vmul.f32 %v1052, %v988
        %v1054 = vmul.f32 %v1052, %v989
        %1057 = vrot.lane.b32.xlu0 %v1053, 123
        %v1058 = vpop.permute.xlu0 %1057
        %1059 = vrot.lane.b32.xlu0 %v1054, 123
        %v1060 = vpop.permute.xlu0 %1059
        %v1063 = vadd.f32 %v1049, %v1058
        %v1064 = vadd.f32 %v1050, %v1060
        %s1065 = sld [smem:[#allocation2 + $0x45]]
        %v1066 = vstv %s1065
        %v1067 = vmul.f32 %v1066, %v988
        %v1068 = vmul.f32 %v1066, %v989
        %1071 = vrot.lane.b32.xlu0 %v1067, 122
        %v1072 = vpop.permute.xlu0 %1071
        %1073 = vrot.lane.b32.xlu0 %v1068, 122
        %v1074 = vpop.permute.xlu0 %1073
        %v1077 = vadd.f32 %v1063, %v1072
        %v1078 = vadd.f32 %v1064, %v1074
        %s1079 = sld [smem:[#allocation2 + $0x46]]
        %v1080 = vld [vmem:[%s803 + $0x3] sm:$0xff]
        %v1081 = vld [vmem:[%s803 + $0xb] sm:$0xff]
        %v1082 = vstv %s1079
        %v1083 = vmul.f32 %v1082, %v1080
        %v1084 = vmul.f32 %v1082, %v1081
        %v1085 = vadd.f32 %v1077, %v1083
        %v1086 = vadd.f32 %v1078, %v1084
        %s1087 = sld [smem:[#allocation2 + $0x47]]
        %v1088 = vstv %s1087
        %v1089 = vmul.f32 %v1088, %v1080
        %v1090 = vmul.f32 %v1088, %v1081
        %1093 = vrot.lane.b32.xlu0 %v1089, 127
        %v1094 = vpop.permute.xlu0 %1093
        %1095 = vrot.lane.b32.xlu0 %v1090, 127
        %v1096 = vpop.permute.xlu0 %1095
        %v1099 = vadd.f32 %v1085, %v1094
        %v1100 = vadd.f32 %v1086, %v1096
        %s1101 = sld [smem:[#allocation2 + $0x48]]
        %v1102 = vstv %s1101
        %v1103 = vmul.f32 %v1102, %v1080
        %v1104 = vmul.f32 %v1102, %v1081
        %1107 = vrot.lane.b32.xlu0 %v1103, 126
        %v1108 = vpop.permute.xlu0 %1107
        %1109 = vrot.lane.b32.xlu0 %v1104, 126
        %v1110 = vpop.permute.xlu0 %1109
        %v1113 = vadd.f32 %v1099, %v1108
        %v1114 = vadd.f32 %v1100, %v1110
        %s1115 = sld [smem:[#allocation2 + $0x49]]
        %v1116 = vstv %s1115
        %v1117 = vmul.f32 %v1116, %v1080
        %v1118 = vmul.f32 %v1116, %v1081
        %1121 = vrot.lane.b32.xlu0 %v1117, 125
        %v1122 = vpop.permute.xlu0 %1121
        %1123 = vrot.lane.b32.xlu0 %v1118, 125
        %v1124 = vpop.permute.xlu0 %1123
        %v1127 = vadd.f32 %v1113, %v1122
        %v1128 = vadd.f32 %v1114, %v1124
        %s1129 = sld [smem:[#allocation2 + $0x4a]]
        %v1130 = vstv %s1129
        %v1131 = vmul.f32 %v1130, %v1080
        %v1132 = vmul.f32 %v1130, %v1081
        %1135 = vrot.lane.b32.xlu0 %v1131, 124
        %v1136 = vpop.permute.xlu0 %1135
        %1137 = vrot.lane.b32.xlu0 %v1132, 124
        %v1138 = vpop.permute.xlu0 %1137
        %v1141 = vadd.f32 %v1127, %v1136
        %v1142 = vadd.f32 %v1128, %v1138
        %s1143 = sld [smem:[#allocation2 + $0x4b]]
        %v1144 = vstv %s1143
        %v1145 = vmul.f32 %v1144, %v1080
        %v1146 = vmul.f32 %v1144, %v1081
        %1149 = vrot.lane.b32.xlu0 %v1145, 123
        %v1150 = vpop.permute.xlu0 %1149
        %1151 = vrot.lane.b32.xlu0 %v1146, 123
        %v1152 = vpop.permute.xlu0 %1151
        %v1155 = vadd.f32 %v1141, %v1150
        %v1156 = vadd.f32 %v1142, %v1152
        %s1157 = sld [smem:[#allocation2 + $0x4c]]
        %v1158 = vstv %s1157
        %v1159 = vmul.f32 %v1158, %v1080
        %v1160 = vmul.f32 %v1158, %v1081
        %1163 = vrot.lane.b32.xlu0 %v1159, 122
        %v1164 = vpop.permute.xlu0 %1163
        %1165 = vrot.lane.b32.xlu0 %v1160, 122
        %v1166 = vpop.permute.xlu0 %1165
        %v1169 = vadd.f32 %v1155, %v1164
        %v1170 = vadd.f32 %v1156, %v1166
        %s1171 = sld [smem:[#allocation2 + $0x4d]]
        %v1172 = vld [vmem:[%s803 + $0x4] sm:$0xff]
        %v1173 = vld [vmem:[%s803 + $0xc] sm:$0xff]
        %v1174 = vstv %s1171
        %v1175 = vmul.f32 %v1174, %v1172
        %v1176 = vmul.f32 %v1174, %v1173
        %v1177 = vadd.f32 %v1169, %v1175
        %v1178 = vadd.f32 %v1170, %v1176
        %s1179 = sld [smem:[#allocation2 + $0x4e]]
        %v1180 = vstv %s1179
        %v1181 = vmul.f32 %v1180, %v1172
        %v1182 = vmul.f32 %v1180, %v1173
        %1185 = vrot.lane.b32.xlu0 %v1181, 127
        %v1186 = vpop.permute.xlu0 %1185
        %1187 = vrot.lane.b32.xlu0 %v1182, 127
        %v1188 = vpop.permute.xlu0 %1187
        %v1191 = vadd.f32 %v1177, %v1186
        %v1192 = vadd.f32 %v1178, %v1188
        %s1193 = sld [smem:[#allocation2 + $0x4f]]
        %v1194 = vstv %s1193
        %v1195 = vmul.f32 %v1194, %v1172
        %v1196 = vmul.f32 %v1194, %v1173
        %1199 = vrot.lane.b32.xlu0 %v1195, 126
        %v1200 = vpop.permute.xlu0 %1199
        %1201 = vrot.lane.b32.xlu0 %v1196, 126
        %v1202 = vpop.permute.xlu0 %1201
        %v1205 = vadd.f32 %v1191, %v1200
        %v1206 = vadd.f32 %v1192, %v1202
        %s1207 = sld [smem:[#allocation2 + $0x50]]
        %v1208 = vstv %s1207
        %v1209 = vmul.f32 %v1208, %v1172
        %v1210 = vmul.f32 %v1208, %v1173
        %1213 = vrot.lane.b32.xlu0 %v1209, 125
        %v1214 = vpop.permute.xlu0 %1213
        %1215 = vrot.lane.b32.xlu0 %v1210, 125
        %v1216 = vpop.permute.xlu0 %1215
        %v1219 = vadd.f32 %v1205, %v1214
        %v1220 = vadd.f32 %v1206, %v1216
        %s1221 = sld [smem:[#allocation2 + $0x51]]
        %v1222 = vstv %s1221
        %v1223 = vmul.f32 %v1222, %v1172
        %v1224 = vmul.f32 %v1222, %v1173
        %1227 = vrot.lane.b32.xlu0 %v1223, 124
        %v1228 = vpop.permute.xlu0 %1227
        %1229 = vrot.lane.b32.xlu0 %v1224, 124
        %v1230 = vpop.permute.xlu0 %1229
        %v1233 = vadd.f32 %v1219, %v1228
        %v1234 = vadd.f32 %v1220, %v1230
        %s1235 = sld [smem:[#allocation2 + $0x52]]
        %v1236 = vstv %s1235
        %v1237 = vmul.f32 %v1236, %v1172
        %v1238 = vmul.f32 %v1236, %v1173
        %1241 = vrot.lane.b32.xlu0 %v1237, 123
        %v1242 = vpop.permute.xlu0 %1241
        %1243 = vrot.lane.b32.xlu0 %v1238, 123
        %v1244 = vpop.permute.xlu0 %1243
        %v1247 = vadd.f32 %v1233, %v1242
        %v1248 = vadd.f32 %v1234, %v1244
        %s1249 = sld [smem:[#allocation2 + $0x53]]
        %v1250 = vstv %s1249
        %v1251 = vmul.f32 %v1250, %v1172
        %v1252 = vmul.f32 %v1250, %v1173
        %1255 = vrot.lane.b32.xlu0 %v1251, 122
        %v1256 = vpop.permute.xlu0 %1255
        %1257 = vrot.lane.b32.xlu0 %v1252, 122
        %v1258 = vpop.permute.xlu0 %1257
        %v1261 = vadd.f32 %v1247, %v1256
        %v1262 = vadd.f32 %v1248, %v1258
        %s1263 = sld [smem:[#allocation2 + $0x54]]
        %v1264 = vld [vmem:[%s803 + $0x5] sm:$0xff]
        %v1265 = vld [vmem:[%s803 + $0xd] sm:$0xff]
        %v1266 = vstv %s1263
        %v1267 = vmul.f32 %v1266, %v1264
        %v1268 = vmul.f32 %v1266, %v1265
        %v1269 = vadd.f32 %v1261, %v1267
        %v1270 = vadd.f32 %v1262, %v1268
        %s1271 = sld [smem:[#allocation2 + $0x55]]
        %v1272 = vstv %s1271
        %v1273 = vmul.f32 %v1272, %v1264
        %v1274 = vmul.f32 %v1272, %v1265
        %1277 = vrot.lane.b32.xlu0 %v1273, 127
        %v1278 = vpop.permute.xlu0 %1277
        %1279 = vrot.lane.b32.xlu0 %v1274, 127
        %v1280 = vpop.permute.xlu0 %1279
        %v1283 = vadd.f32 %v1269, %v1278
        %v1284 = vadd.f32 %v1270, %v1280
        %s1285 = sld [smem:[#allocation2 + $0x56]]
        %v1286 = vstv %s1285
        %v1287 = vmul.f32 %v1286, %v1264
        %v1288 = vmul.f32 %v1286, %v1265
        %1291 = vrot.lane.b32.xlu0 %v1287, 126
        %v1292 = vpop.permute.xlu0 %1291
        %1293 = vrot.lane.b32.xlu0 %v1288, 126
        %v1294 = vpop.permute.xlu0 %1293
        %v1297 = vadd.f32 %v1283, %v1292
        %v1298 = vadd.f32 %v1284, %v1294
        %s1299 = sld [smem:[#allocation2 + $0x57]]
        %v1300 = vstv %s1299
        %v1301 = vmul.f32 %v1300, %v1264
        %v1302 = vmul.f32 %v1300, %v1265
        %1305 = vrot.lane.b32.xlu0 %v1301, 125
        %v1306 = vpop.permute.xlu0 %1305
        %1307 = vrot.lane.b32.xlu0 %v1302, 125
        %v1308 = vpop.permute.xlu0 %1307
        %v1311 = vadd.f32 %v1297, %v1306
        %v1312 = vadd.f32 %v1298, %v1308
        %s1313 = sld [smem:[#allocation2 + $0x58]]
        %v1314 = vstv %s1313
        %v1315 = vmul.f32 %v1314, %v1264
        %v1316 = vmul.f32 %v1314, %v1265
        %1319 = vrot.lane.b32.xlu0 %v1315, 124
        %v1320 = vpop.permute.xlu0 %1319
        %1321 = vrot.lane.b32.xlu0 %v1316, 124
        %v1322 = vpop.permute.xlu0 %1321
        %v1325 = vadd.f32 %v1311, %v1320
        %v1326 = vadd.f32 %v1312, %v1322
        %s1327 = sld [smem:[#allocation2 + $0x59]]
        %v1328 = vstv %s1327
        %v1329 = vmul.f32 %v1328, %v1264
        %v1330 = vmul.f32 %v1328, %v1265
        %1333 = vrot.lane.b32.xlu0 %v1329, 123
        %v1334 = vpop.permute.xlu0 %1333
        %1335 = vrot.lane.b32.xlu0 %v1330, 123
        %v1336 = vpop.permute.xlu0 %1335
        %v1339 = vadd.f32 %v1325, %v1334
        %v1340 = vadd.f32 %v1326, %v1336
        %s1341 = sld [smem:[#allocation2 + $0x5a]]
        %v1342 = vstv %s1341
        %v1343 = vmul.f32 %v1342, %v1264
        %v1344 = vmul.f32 %v1342, %v1265
        %1347 = vrot.lane.b32.xlu0 %v1343, 122
        %v1348 = vpop.permute.xlu0 %1347
        %1349 = vrot.lane.b32.xlu0 %v1344, 122
        %v1350 = vpop.permute.xlu0 %1349
        %v1353 = vadd.f32 %v1339, %v1348
        %v1354 = vadd.f32 %v1340, %v1350
        %s1355 = sld [smem:[#allocation2 + $0x5b]]
        %v1356 = vld [vmem:[%s803 + $0x6] sm:$0xff]
        %v1357 = vld [vmem:[%s803 + $0xe] sm:$0xff]
        %v1358 = vstv %s1355
        %v1359 = vmul.f32 %v1358, %v1356
        %v1360 = vmul.f32 %v1358, %v1357
        %v1361 = vadd.f32 %v1353, %v1359
        %v1362 = vadd.f32 %v1354, %v1360
        %s1363 = sld [smem:[#allocation2 + $0x5c]]
        %v1364 = vstv %s1363
        %v1365 = vmul.f32 %v1364, %v1356
        %v1366 = vmul.f32 %v1364, %v1357
        %1369 = vrot.lane.b32.xlu0 %v1365, 127
        %v1370 = vpop.permute.xlu0 %1369
        %1371 = vrot.lane.b32.xlu0 %v1366, 127
        %v1372 = vpop.permute.xlu0 %1371
        %v1375 = vadd.f32 %v1361, %v1370
        %v1376 = vadd.f32 %v1362, %v1372
        %s1377 = sld [smem:[#allocation2 + $0x5d]]
        %v1378 = vstv %s1377
        %v1379 = vmul.f32 %v1378, %v1356
        %v1380 = vmul.f32 %v1378, %v1357
        %1383 = vrot.lane.b32.xlu0 %v1379, 126
        %v1384 = vpop.permute.xlu0 %1383
        %1385 = vrot.lane.b32.xlu0 %v1380, 126
        %v1386 = vpop.permute.xlu0 %1385
        %v1389 = vadd.f32 %v1375, %v1384
        %v1390 = vadd.f32 %v1376, %v1386
        %s1391 = sld [smem:[#allocation2 + $0x5e]]
        %v1392 = vstv %s1391
        %v1393 = vmul.f32 %v1392, %v1356
        %v1394 = vmul.f32 %v1392, %v1357
        %1397 = vrot.lane.b32.xlu0 %v1393, 125
        %v1398 = vpop.permute.xlu0 %1397
        %1399 = vrot.lane.b32.xlu0 %v1394, 125
        %v1400 = vpop.permute.xlu0 %1399
        %v1403 = vadd.f32 %v1389, %v1398
        %v1404 = vadd.f32 %v1390, %v1400
        %s1405 = sld [smem:[#allocation2 + $0x5f]]
        %v1406 = vstv %s1405
        %v1407 = vmul.f32 %v1406, %v1356
        %v1408 = vmul.f32 %v1406, %v1357
        %1411 = vrot.lane.b32.xlu0 %v1407, 124
        %v1412 = vpop.permute.xlu0 %1411
        %1413 = vrot.lane.b32.xlu0 %v1408, 124
        %v1414 = vpop.permute.xlu0 %1413
        %v1417 = vadd.f32 %v1403, %v1412
        %v1418 = vadd.f32 %v1404, %v1414
        %s1419 = sld [smem:[#allocation2 + $0x60]]
        %v1420 = vstv %s1419
        %v1421 = vmul.f32 %v1420, %v1356
        %v1422 = vmul.f32 %v1420, %v1357
        %1425 = vrot.lane.b32.xlu0 %v1421, 123
        %v1426 = vpop.permute.xlu0 %1425
        %1427 = vrot.lane.b32.xlu0 %v1422, 123
        %v1428 = vpop.permute.xlu0 %1427
        %v1431 = vadd.f32 %v1417, %v1426
        %v1432 = vadd.f32 %v1418, %v1428
        %s1433 = sld [smem:[#allocation2 + $0x61]]
        %v1434 = vstv %s1433
        %v1435 = vmul.f32 %v1434, %v1356
        %v1436 = vmul.f32 %v1434, %v1357
        %1439 = vrot.lane.b32.xlu0 %v1435, 122
        %v1440 = vpop.permute.xlu0 %1439
        %1441 = vrot.lane.b32.xlu0 %v1436, 122
        %v1442 = vpop.permute.xlu0 %1441
        %v1445 = vadd.f32 %v1431, %v1440
        %v1446 = vadd.f32 %v1432, %v1442
        %v1447 = vxor.u32 %v1445, 2147483648
        %v1448 = vxor.u32 %v1446, 2147483648
        %v1449 = vmul.f32 %v1447, 1.442695
        %v1450 = vpow.pop %v1449
        %v1451 = vmul.f32 %v1448, 1.442695
        %v1452 = vpow.pop %v1451
        %v1453 = vadd.f32 %v1450, 1.0
        %v1454 = vadd.f32 %v1452, 1.0
        %v1455 = vrcp.pop %v1453
        %v1456 = vmul.f32 %v1453, %v1455
        %v1457 = vsub.f32 1.0, %v1456
        %v1458 = vmul.f32 %v1455, %v1457
        %v1459 = vadd.f32 %v1455, %v1458
        %vm1460 = vweird.f32 %v1453
        %vm1461 = vweird.f32 %v1455
        %vm1462 = vmor %vm1460, %vm1461
        %v1463 = vsel %vm1462, %v1455, %v1459
        %v1464 = vand.u32 2147483647, %v1453
        %vm1465 = vcmp.eq.f32.partialorder %v1464, 8.507059e+37
        %v1466 = vand.u32 %v1453, 2147483648
        %v1467 = vor.u32 1.1754944e-38, %v1466
        %v1468 = vsel %vm1465, %v1467, %v1463
        %v1469 = vmul.f32 1.0, %v1468
        %v1470 = vrcp.pop %v1454
        %v1471 = vmul.f32 %v1454, %v1470
        %v1472 = vsub.f32 1.0, %v1471
        %v1473 = vmul.f32 %v1470, %v1472
        %v1474 = vadd.f32 %v1470, %v1473
        %vm1475 = vweird.f32 %v1454
        %vm1476 = vweird.f32 %v1470
        %vm1477 = vmor %vm1475, %vm1476
        %v1478 = vsel %vm1477, %v1470, %v1474
        %v1479 = vand.u32 2147483647, %v1454
        %vm1480 = vcmp.eq.f32.partialorder %v1479, 8.507059e+37
        %v1481 = vand.u32 %v1454, 2147483648
        %v1482 = vor.u32 1.1754944e-38, %v1481
        %v1483 = vsel %vm1480, %v1482, %v1478
        %v1484 = vmul.f32 1.0, %v1483
        %vm1485 = vcmask 130048
        %1486 = vst.msk [vmem:[%s157] sm:$0xff] %vm1485, %v1469
        %1487 = vst.msk [vmem:[%s157 + $0x8] sm:$0xff] %vm1485, %v1484
        %p1488 = scmp.lt.s32.totalorder %s14, 1
        %s1489 = scalar_select %p1488, %s14, 1
        %s1490 = smul.addr %s1489, 2
        %s1491 = smul.addr %s1490, 8
        %s1492 = scalar_lea.vmem %s2, %s1491
        // Predicated region
        $region33: #{cbam_forward.6} parent=27 // pred_check
          %p1493 = pneg %p79
        $region34: #{cbam_forward.6} parent=27 // pred_check_branch
          %1495 = sbr.rel (%p1493) target = $region36
        $region35: #{cbam_forward.6} parent=27 // pred_region
          _
        $region36: #{cbam_forward.6} parent=27 // pred_fallthru
          _
      $region28: #{cbam_forward.6} parent=5 // pred_fallthru
        _
      %p1496 = scmp.le.s32.totalorder 2, %s9
      // Predicated region
      $region37: #{cbam_forward.6} parent=5 // pred_check
        %p1497 = pneg %p1496
      $region38: #{cbam_forward.6} parent=5 // pred_check_branch
        %1499 = sbr.rel (%p1497) target = $region40
      $region39: #{cbam_forward.6} parent=5 // pred_region
        %s1500 = ssub.s32 %s9, 2
        // Predicated region
        $region41: #{cbam_forward.6} parent=39 // pred_check
          %p1501 = pneg %p85
        $region42: #{cbam_forward.6} parent=39 // pred_check_branch
          %1503 = sbr.rel (%p1501) target = $region44
        $region43: #{cbam_forward.6} parent=39 // pred_region
          %p1504 = scmp.lt.s32.totalorder %s15, 1
          %s1505 = scalar_select %p1504, %s15, 1
          %s1506 = smul.addr %s1505, 2
          %s1507 = smul.addr %s1506, 8
          %s1508 = scalar_lea.vmem %s2, %s1507
        $region44: #{cbam_forward.6} parent=39 // pred_fallthru
          _
      $region40: #{cbam_forward.6} parent=5 // pred_fallthru
        _
    $region6: #{cbam_forward.6} parent=1 // loop_footer
      %s13 = sadd.s32 1, %s9
    $region7: #{cbam_forward.6} parent=1 // loop_footer_branch
      %8 = sbr.rel target = $region3
    $region8: #{cbam_forward.6} parent=1 // loop_exit
      _
    %1509 = vsyncpa [#allocation3], 1
    %s1510 = scalar_lea.sflag [#allocation3], 1
    %1511 = vsyncpa %s1510, 1

</llo_original>
